<compile_context>
chip_gen: v7x
topology: tpu7x:2x2x1
jax: 0.10.0
libtpu: 0.0.40
codegen_flags: <defaults>
</compile_context>

<pallas_src>
import numpy as np
import jax
import jax.numpy as jnp
from jax import lax
from jax.experimental import pallas as pl
from jax.experimental.pallas import tpu as pltpu

HIGH = jax.lax.Precision.HIGHEST   # only attention energy + pure-JAX reference


# ----------------------------------------------------------------------------
# Fused Group kernel (both branches, all n blocks, one grid step per batch)
# ----------------------------------------------------------------------------
def _make_group_kernel(h_img, w_img, n_blocks):
    n_pix = h_img * w_img
    # Tap (kh, kw) reads input at (h + kh - 1, w + kw - 1)  ->  flat offset
    # d = (kh-1)*W + (kw-1);  roll shift = (-d) mod N (np.roll convention).
    shifts = tuple(((-((kh - 1) * w_img + (kw - 1))) % n_pix)
                   for kh in range(3) for kw in range(3))

    def kernel(x_ref, mask_ref, w1_ref, b1_ref, w2_ref, b2_ref,
               ws1_ref, bs1_ref, ws2_ref, bs2_ref, gamma_ref, o_ref):
        x0 = x_ref[0]                       # (C, N) input slab for this batch
        masks = mask_ref[...]               # (9, 1, N) boundary masks

        def conv3x3(inp, w_ref, b_ref, blk):
            """3x3 SAME conv on a (C, N) slab: sum_k W[blk,k] @ shifted(inp)."""
            acc = None
            for k in range(9):
                if shifts[k] == 0:          # center tap: no shift, no mask
                    xs = inp
                else:
                    xs = pltpu.roll(inp, shift=shifts[k], axis=1) * masks[k]
                t = jnp.dot(w_ref[blk, k], xs, preferred_element_type=jnp.float32)
                acc = t if acc is None else acc + t
            return acc + b_ref[blk]         # (C, 1) bias broadcast

        # ---------------- branch 1: chain of n SeResBlocks ------------------
        x = x0
        for blk in range(n_blocks):
            y1 = jnp.maximum(conv3x3(x, w1_ref, b1_ref, blk), 0.0)
            y2 = conv3x3(y1, w2_ref, b2_ref, blk)
            # Squeeze-excite (tiny matmuls).
            s = jnp.mean(y2, axis=1, keepdims=True)                   # (C, 1)
            z = jnp.maximum(
                jnp.dot(ws1_ref[blk], s, preferred_element_type=jnp.float32)
                + bs1_ref[blk], 0.0)                                  # (hid, 1)
            g = jax.nn.sigmoid(
                jnp.dot(ws2_ref[blk], z, preferred_element_type=jnp.float32)
                + bs2_ref[blk])                                       # (C, 1)
            x = jnp.maximum(x + y2 * g, 0.0)                          # res+ReLU
        o_ref[0, 0] = x                    # first C output channels

        # ---------------- branch 2: chain of n Channel_Attn -----------------
        x = x0
        for blk in range(n_blocks):
            # HIGHEST precision only here: energy feeds exp(), so bf16
            # truncation of an O(N)-magnitude dot would distort the softmax.
            energy = lax.dot_general(x, x, (((1,), (1,)), ((), ())),
                                     preferred_element_type=jnp.float32,
                                     precision=HIGH)                  # (C, C)
            # softmax(rowmax - energy) == softmax(-energy); stable shift:
            e = jnp.min(energy, axis=-1, keepdims=True) - energy      # <= 0
            p = jnp.exp(e)
            attn = p * pl.reciprocal(jnp.sum(p, axis=-1, keepdims=True),
                                     approx=True)
            out = jnp.dot(attn, x, preferred_element_type=jnp.float32)
            x = gamma_ref[blk, 0] * out + x
        o_ref[0, 1] = x                    # second C output channels

    return kernel


# ----------------------------------------------------------------------------
# pallas_call wrapper
# ----------------------------------------------------------------------------
def _full_spec(arr):
    nd = arr.ndim
    return pl.BlockSpec(tuple(arr.shape), lambda b, _nd=nd: (0,) * _nd)


def _tap_masks(H, W):
    """mask[k, 0, h*W+w] = 1 iff tap (kh, kw) reads an in-bounds pixel."""
    N = H * W
    m = np.zeros((9, 1, N), np.float32)
    for kh in range(3):
        for kw in range(3):
            k = kh * 3 + kw
            dh, dw = kh - 1, kw - 1
            for h in range(H):
                if not 0 <= h + dh < H:
                    continue
                for w in range(W):
                    if 0 <= w + dw < W:
                        m[k, 0, h * W + w] = 1.0
    return jnp.asarray(m)


def _pack_se_params(se_blocks):
    C = se_blocks[0]["w1"].shape[0]

    def taps(w):                       # (C, C, 3, 3) -> (9, C_out, C_in)
        return jnp.transpose(w, (2, 3, 0, 1)).reshape(9, C, C)

    W1 = jnp.stack([taps(b["w1"]) for b in se_blocks])            # (n, 9, C, C)
    B1 = jnp.stack([b["b1"].reshape(C, 1) for b in se_blocks])    # (n, C, 1)
    W2 = jnp.stack([taps(b["w2"]) for b in se_blocks])
    B2 = jnp.stack([b["b2"].reshape(C, 1) for b in se_blocks])
    WS1 = jnp.stack([b["ws1"] for b in se_blocks])                # (n, hid, C)
    BS1 = jnp.stack([b["bs1"].reshape(-1, 1) for b in se_blocks])
    WS2 = jnp.stack([b["ws2"] for b in se_blocks])                # (n, C, hid)
    BS2 = jnp.stack([b["bs2"].reshape(-1, 1) for b in se_blocks])
    return W1, B1, W2, B2, WS1, BS1, WS2, BS2


def group_forward(x_nchw, params):
    """Group.forward: cat(branch1(x), branch2(x), dim=1)."""
    B, C, H, W = x_nchw.shape
    N = H * W
    n = len(params["se_blocks"])

    x = x_nchw.reshape(B, C, N).astype(jnp.float32)
    masks = _tap_masks(H, W)
    W1, B1, W2, B2, WS1, BS1, WS2, BS2 = _pack_se_params(params["se_blocks"])
    gammas = jnp.concatenate(
        [b["gamma"].reshape(1, 1) for b in params["attn_blocks"]], axis=0)

    kernel = _make_group_kernel(H, W, n)
    out = pl.pallas_call(
        kernel,
        out_shape=jax.ShapeDtypeStruct((B, 2, C, N), jnp.float32),
        grid_spec=pltpu.PrefetchScalarGridSpec(
            num_scalar_prefetch=0, grid=(B,),
            in_specs=[pl.BlockSpec((1, C, N), lambda b: (b, 0, 0)),
                      _full_spec(masks),
                      _full_spec(W1), _full_spec(B1),
                      _full_spec(W2), _full_spec(B2),
                      _full_spec(WS1), _full_spec(BS1),
                      _full_spec(WS2), _full_spec(BS2),
                      pl.BlockSpec((n, 1), lambda b: (0, 0),
                                   memory_space=pltpu.MemorySpace.SMEM)],
            out_specs=pl.BlockSpec((1, 2, C, N), lambda b: (b, 0, 0, 0))),
        compiler_params=pltpu.CompilerParams(dimension_semantics=("parallel",)),
    )(x, masks, W1, B1, W2, B2, WS1, BS1, WS2, BS2, gammas)

    # (B, 2, C, N) -> (B, 2C, H, W): contiguous reshape, matches torch.cat dim=1.
    return out.reshape(B, 2 * C, H, W)


def init_params(key, n, C):
    hid = max(C // 2, 1)
    se_blocks, attn_blocks = [], []
    for _ in range(n):
        key, *ks = jax.random.split(key, 9)
        se_blocks.append(dict(
            w1=0.1 * jax.random.normal(ks[0], (C, C, 3, 3), jnp.float32),
            b1=0.01 * jax.random.normal(ks[1], (C,), jnp.float32),
            w2=0.1 * jax.random.normal(ks[2], (C, C, 3, 3), jnp.float32),
            b2=0.01 * jax.random.normal(ks[3], (C,), jnp.float32),
            ws1=0.1 * jax.random.normal(ks[4], (hid, C), jnp.float32),
            bs1=0.01 * jax.random.normal(ks[5], (hid,), jnp.float32),
            ws2=0.1 * jax.random.normal(ks[6], (C, hid), jnp.float32),
            bs2=0.01 * jax.random.normal(ks[7], (C,), jnp.float32),
        ))
    for _ in range(n):
        key, k = jax.random.split(key)
        attn_blocks.append(dict(
            gamma=(0.1 + 0.05 * jax.random.normal(k, (1, 1), jnp.float32))))
    return dict(se_blocks=se_blocks, attn_blocks=attn_blocks)


# ----------------------------------------------------------------------------
# Pure-JAX reference (f32, HIGHEST precision) for a correctness check
# ----------------------------------------------------------------------------
def _ref_conv3x3(x_img, w, b):
    y = lax.conv_general_dilated(x_img, w, (1, 1), "SAME",
                                 dimension_numbers=("NCHW", "OIHW", "NCHW"),
                                 precision=HIGH)
    return y + b[None, :, None, None]


def _ref_se_res_block(x_img, blk):
    y1 = jax.nn.relu(_ref_conv3x3(x_img, blk["w1"], blk["b1"]))
    y2 = _ref_conv3x3(y1, blk["w2"], blk["b2"])
    s = jnp.mean(y2, axis=(2, 3))                                    # (B, C)
    z = jax.nn.relu(s @ blk["ws1"].T + blk["bs1"])                   # (B, hid)
    g = jax.nn.sigmoid(z @ blk["ws2"].T + blk["bs2"])                # (B, C)
    return jax.nn.relu(x_img + y2 * g[:, :, None, None])


def _ref_channel_attn(x_bcn, gamma):
    energy = jnp.einsum("bcn,bdn->bcd", x_bcn, x_bcn, precision=HIGH)
    e = jnp.max(energy, axis=-1, keepdims=True) - energy
    a = jax.nn.softmax(e, axis=-1)
    out = jnp.einsum("bcd,bdn->bcn", a, x_bcn, precision=HIGH)
    return gamma * out + x_bcn


def ref_group_forward(x_nchw, params):
    B, C, H, W = x_nchw.shape
    y = x_nchw.astype(jnp.float32)
    for blk in params["se_blocks"]:
        y = _ref_se_res_block(y, blk)
    z = x_nchw.reshape(B, C, H * W).astype(jnp.float32)
    for blk in params["attn_blocks"]:
        z = _ref_channel_attn(z, blk["gamma"])
    return jnp.concatenate([y, z.reshape(B, C, H, W)], axis=1)


# ----------------------------------------------------------------------------
if __name__ == "__main__":
    B, C, H, W = 2, 4, 16, 16          # Group(n=2, in_channels=4, in_width=16)
    n = 2
    key = jax.random.PRNGKey(0)
    kx, kp = jax.random.split(key)
    x = jax.random.normal(kx, (B, C, H, W), jnp.float32)
    params = init_params(kp, n, C)

    fwd = jax.jit(group_forward)
    out = jax.block_until_ready(fwd(x, params))
    assert out.shape == (B, 2 * C, H, W), out.shape

    ref = jax.block_until_ready(ref_group_forward(x, params))
    np.testing.assert_allclose(np.asarray(out), np.asarray(ref),
                               atol=3e-2, rtol=3e-2)
    print("KERNEL_OK")
</pallas_src>

<mosaic_0001>
module attributes {stable_mosaic.version = 11 : i64} {
  func.func @kernel(%arg0: i32, %arg1: memref<1x4x256xf32, #tpu.memory_space<vmem>>, %arg2: memref<9x1x256xf32, #tpu.memory_space<vmem>>, %arg3: memref<2x9x4x4xf32, #tpu.memory_space<vmem>>, %arg4: memref<2x4x1xf32, #tpu.memory_space<vmem>>, %arg5: memref<2x9x4x4xf32, #tpu.memory_space<vmem>>, %arg6: memref<2x4x1xf32, #tpu.memory_space<vmem>>, %arg7: memref<2x2x4xf32, #tpu.memory_space<vmem>>, %arg8: memref<2x2x1xf32, #tpu.memory_space<vmem>>, %arg9: memref<2x4x2xf32, #tpu.memory_space<vmem>>, %arg10: memref<2x4x1xf32, #tpu.memory_space<vmem>>, %arg11: memref<2x1xf32, #tpu.memory_space<smem>>, %arg12: memref<1x2x4x256xf32, #tpu.memory_space<vmem>>) attributes {dimension_semantics = [#tpu.dimension_semantics<parallel>], iteration_bounds = array<i64: 2>, scalar_prefetch = 0 : i64, scratch_operands = 0 : i64, tpu.core_type = #tpu.core_type<tc>, window_params = [{transform_indices = @transform_0, window_bounds = array<i64: 1, 4, 256>}, {pipeline_mode = #tpu.pipeline_mode<synchronous>, transform_indices = @transform_1, window_bounds = array<i64: 9, 1, 256>}, {pipeline_mode = #tpu.pipeline_mode<synchronous>, transform_indices = @transform_2, window_bounds = array<i64: 2, 9, 4, 4>}, {pipeline_mode = #tpu.pipeline_mode<synchronous>, transform_indices = @transform_3, window_bounds = array<i64: 2, 4, 1>}, {pipeline_mode = #tpu.pipeline_mode<synchronous>, transform_indices = @transform_4, window_bounds = array<i64: 2, 9, 4, 4>}, {pipeline_mode = #tpu.pipeline_mode<synchronous>, transform_indices = @transform_5, window_bounds = array<i64: 2, 4, 1>}, {pipeline_mode = #tpu.pipeline_mode<synchronous>, transform_indices = @transform_6, window_bounds = array<i64: 2, 2, 4>}, {pipeline_mode = #tpu.pipeline_mode<synchronous>, transform_indices = @transform_7, window_bounds = array<i64: 2, 2, 1>}, {pipeline_mode = #tpu.pipeline_mode<synchronous>, transform_indices = @transform_8, window_bounds = array<i64: 2, 4, 2>}, {pipeline_mode = #tpu.pipeline_mode<synchronous>, transform_indices = @transform_9, window_bounds = array<i64: 2, 4, 1>}, {transform_indices = @transform_10, window_bounds = array<i64: 2, 1>}, {transform_indices = @transform_11, window_bounds = array<i64: 1, 2, 4, 256>}]} {
    %c0 = arith.constant 0 : index
    %c0_0 = arith.constant 0 : index
    %c0_1 = arith.constant 0 : index
    %0 = vector.load %arg1[%c0, %c0_0, %c0_1] : memref<1x4x256xf32, #tpu.memory_space<vmem>>, vector<1x4x256xf32>
    %1 = vector.shape_cast %0 : vector<1x4x256xf32> to vector<4x256xf32>
    %c0_2 = arith.constant 0 : index
    %c0_3 = arith.constant 0 : index
    %c0_4 = arith.constant 0 : index
    %2 = vector.load %arg2[%c0_2, %c0_3, %c0_4] : memref<9x1x256xf32, #tpu.memory_space<vmem>>, vector<9x1x256xf32>
    %c17_i32 = arith.constant 17 : i32
    %3 = tpu.dynamic_rotate %1 by %c17_i32 dim 1 : vector<4x256xf32>, i32 -> vector<4x256xf32>
    %4 = vector.extract_strided_slice %2 {offsets = [0, 0, 0], sizes = [1, 1, 256], strides = [1, 1, 1]} : vector<9x1x256xf32> to vector<1x1x256xf32>
    %5 = vector.shape_cast %4 : vector<1x1x256xf32> to vector<1x256xf32>
    %6 = vector.broadcast %5 : vector<1x256xf32> to vector<4x256xf32>
    %7 = arith.mulf %3, %6 : vector<4x256xf32>
    %c0_5 = arith.constant 0 : index
    %c0_6 = arith.constant 0 : index
    %c0_7 = arith.constant 0 : index
    %c0_8 = arith.constant 0 : index
    %8 = vector.load %arg3[%c0_5, %c0_6, %c0_7, %c0_8] : memref<2x9x4x4xf32, #tpu.memory_space<vmem>>, vector<1x1x4x4xf32>
    %9 = vector.shape_cast %8 : vector<1x1x4x4xf32> to vector<4x4xf32>
    %cst = arith.constant dense<0.000000e+00> : vector<4x256xf32>
    %10 = tpu.matmul %9, %7, %cst {dimension_numbers = #tpu.dot_dimension_numbers<[1], [0], [0], [1], [0, 0, 1, 1], [], []>} : vector<4x4xf32>, vector<4x256xf32>, vector<4x256xf32> -> vector<4x256xf32>
    %c16_i32 = arith.constant 16 : i32
    %11 = tpu.dynamic_rotate %1 by %c16_i32 dim 1 : vector<4x256xf32>, i32 -> vector<4x256xf32>
    %12 = vector.extract_strided_slice %2 {offsets = [1, 0, 0], sizes = [1, 1, 256], strides = [1, 1, 1]} : vector<9x1x256xf32> to vector<1x1x256xf32>
    %13 = vector.shape_cast %12 : vector<1x1x256xf32> to vector<1x256xf32>
    %14 = vector.broadcast %13 : vector<1x256xf32> to vector<4x256xf32>
    %15 = arith.mulf %11, %14 : vector<4x256xf32>
    %c0_9 = arith.constant 0 : index
    %c1 = arith.constant 1 : index
    %c0_10 = arith.constant 0 : index
    %c0_11 = arith.constant 0 : index
    %16 = vector.load %arg3[%c0_9, %c1, %c0_10, %c0_11] : memref<2x9x4x4xf32, #tpu.memory_space<vmem>>, vector<1x1x4x4xf32>
    %17 = vector.shape_cast %16 : vector<1x1x4x4xf32> to vector<4x4xf32>
    %cst_12 = arith.constant dense<0.000000e+00> : vector<4x256xf32>
    %18 = tpu.matmul %17, %15, %cst_12 {dimension_numbers = #tpu.dot_dimension_numbers<[1], [0], [0], [1], [0, 0, 1, 1], [], []>} : vector<4x4xf32>, vector<4x256xf32>, vector<4x256xf32> -> vector<4x256xf32>
    %19 = arith.addf %10, %18 : vector<4x256xf32>
    %c15_i32 = arith.constant 15 : i32
    %20 = tpu.dynamic_rotate %1 by %c15_i32 dim 1 : vector<4x256xf32>, i32 -> vector<4x256xf32>
    %21 = vector.extract_strided_slice %2 {offsets = [2, 0, 0], sizes = [1, 1, 256], strides = [1, 1, 1]} : vector<9x1x256xf32> to vector<1x1x256xf32>
    %22 = vector.shape_cast %21 : vector<1x1x256xf32> to vector<1x256xf32>
    %23 = vector.broadcast %22 : vector<1x256xf32> to vector<4x256xf32>
    %24 = arith.mulf %20, %23 : vector<4x256xf32>
    %c0_13 = arith.constant 0 : index
    %c2 = arith.constant 2 : index
    %c0_14 = arith.constant 0 : index
    %c0_15 = arith.constant 0 : index
    %25 = vector.load %arg3[%c0_13, %c2, %c0_14, %c0_15] : memref<2x9x4x4xf32, #tpu.memory_space<vmem>>, vector<1x1x4x4xf32>
    %26 = vector.shape_cast %25 : vector<1x1x4x4xf32> to vector<4x4xf32>
    %cst_16 = arith.constant dense<0.000000e+00> : vector<4x256xf32>
    %27 = tpu.matmul %26, %24, %cst_16 {dimension_numbers = #tpu.dot_dimension_numbers<[1], [0], [0], [1], [0, 0, 1, 1], [], []>} : vector<4x4xf32>, vector<4x256xf32>, vector<4x256xf32> -> vector<4x256xf32>
    %28 = arith.addf %19, %27 : vector<4x256xf32>
    %c1_i32 = arith.constant 1 : i32
    %29 = tpu.dynamic_rotate %1 by %c1_i32 dim 1 : vector<4x256xf32>, i32 -> vector<4x256xf32>
    %30 = vector.extract_strided_slice %2 {offsets = [3, 0, 0], sizes = [1, 1, 256], strides = [1, 1, 1]} : vector<9x1x256xf32> to vector<1x1x256xf32>
    %31 = vector.shape_cast %30 : vector<1x1x256xf32> to vector<1x256xf32>
    %32 = vector.broadcast %31 : vector<1x256xf32> to vector<4x256xf32>
    %33 = arith.mulf %29, %32 : vector<4x256xf32>
    %c0_17 = arith.constant 0 : index
    %c3 = arith.constant 3 : index
    %c0_18 = arith.constant 0 : index
    %c0_19 = arith.constant 0 : index
    %34 = vector.load %arg3[%c0_17, %c3, %c0_18, %c0_19] : memref<2x9x4x4xf32, #tpu.memory_space<vmem>>, vector<1x1x4x4xf32>
    %35 = vector.shape_cast %34 : vector<1x1x4x4xf32> to vector<4x4xf32>
    %cst_20 = arith.constant dense<0.000000e+00> : vector<4x256xf32>
    %36 = tpu.matmul %35, %33, %cst_20 {dimension_numbers = #tpu.dot_dimension_numbers<[1], [0], [0], [1], [0, 0, 1, 1], [], []>} : vector<4x4xf32>, vector<4x256xf32>, vector<4x256xf32> -> vector<4x256xf32>
    %37 = arith.addf %28, %36 : vector<4x256xf32>
    %c0_21 = arith.constant 0 : index
    %c4 = arith.constant 4 : index
    %c0_22 = arith.constant 0 : index
    %c0_23 = arith.constant 0 : index
    %38 = vector.load %arg3[%c0_21, %c4, %c0_22, %c0_23] : memref<2x9x4x4xf32, #tpu.memory_space<vmem>>, vector<1x1x4x4xf32>
    %39 = vector.shape_cast %38 : vector<1x1x4x4xf32> to vector<4x4xf32>
    %cst_24 = arith.constant dense<0.000000e+00> : vector<4x256xf32>
    %40 = tpu.matmul %39, %1, %cst_24 {dimension_numbers = #tpu.dot_dimension_numbers<[1], [0], [0], [1], [0, 0, 1, 1], [], []>} : vector<4x4xf32>, vector<4x256xf32>, vector<4x256xf32> -> vector<4x256xf32>
    %41 = arith.addf %37, %40 : vector<4x256xf32>
    %c255_i32 = arith.constant 255 : i32
    %42 = tpu.dynamic_rotate %1 by %c255_i32 dim 1 : vector<4x256xf32>, i32 -> vector<4x256xf32>
    %43 = vector.extract_strided_slice %2 {offsets = [5, 0, 0], sizes = [1, 1, 256], strides = [1, 1, 1]} : vector<9x1x256xf32> to vector<1x1x256xf32>
    %44 = vector.shape_cast %43 : vector<1x1x256xf32> to vector<1x256xf32>
    %45 = vector.broadcast %44 : vector<1x256xf32> to vector<4x256xf32>
    %46 = arith.mulf %42, %45 : vector<4x256xf32>
    %c0_25 = arith.constant 0 : index
    %c5 = arith.constant 5 : index
    %c0_26 = arith.constant 0 : index
    %c0_27 = arith.constant 0 : index
    %47 = vector.load %arg3[%c0_25, %c5, %c0_26, %c0_27] : memref<2x9x4x4xf32, #tpu.memory_space<vmem>>, vector<1x1x4x4xf32>
    %48 = vector.shape_cast %47 : vector<1x1x4x4xf32> to vector<4x4xf32>
    %cst_28 = arith.constant dense<0.000000e+00> : vector<4x256xf32>
    %49 = tpu.matmul %48, %46, %cst_28 {dimension_numbers = #tpu.dot_dimension_numbers<[1], [0], [0], [1], [0, 0, 1, 1], [], []>} : vector<4x4xf32>, vector<4x256xf32>, vector<4x256xf32> -> vector<4x256xf32>
    %50 = arith.addf %41, %49 : vector<4x256xf32>
    %c241_i32 = arith.constant 241 : i32
    %51 = tpu.dynamic_rotate %1 by %c241_i32 dim 1 : vector<4x256xf32>, i32 -> vector<4x256xf32>
    %52 = vector.extract_strided_slice %2 {offsets = [6, 0, 0], sizes = [1, 1, 256], strides = [1, 1, 1]} : vector<9x1x256xf32> to vector<1x1x256xf32>
    %53 = vector.shape_cast %52 : vector<1x1x256xf32> to vector<1x256xf32>
    %54 = vector.broadcast %53 : vector<1x256xf32> to vector<4x256xf32>
    %55 = arith.mulf %51, %54 : vector<4x256xf32>
    %c0_29 = arith.constant 0 : index
    %c6 = arith.constant 6 : index
    %c0_30 = arith.constant 0 : index
    %c0_31 = arith.constant 0 : index
    %56 = vector.load %arg3[%c0_29, %c6, %c0_30, %c0_31] : memref<2x9x4x4xf32, #tpu.memory_space<vmem>>, vector<1x1x4x4xf32>
    %57 = vector.shape_cast %56 : vector<1x1x4x4xf32> to vector<4x4xf32>
    %cst_32 = arith.constant dense<0.000000e+00> : vector<4x256xf32>
    %58 = tpu.matmul %57, %55, %cst_32 {dimension_numbers = #tpu.dot_dimension_numbers<[1], [0], [0], [1], [0, 0, 1, 1], [], []>} : vector<4x4xf32>, vector<4x256xf32>, vector<4x256xf32> -> vector<4x256xf32>
    %59 = arith.addf %50, %58 : vector<4x256xf32>
    %c240_i32 = arith.constant 240 : i32
    %60 = tpu.dynamic_rotate %1 by %c240_i32 dim 1 : vector<4x256xf32>, i32 -> vector<4x256xf32>
    %61 = vector.extract_strided_slice %2 {offsets = [7, 0, 0], sizes = [1, 1, 256], strides = [1, 1, 1]} : vector<9x1x256xf32> to vector<1x1x256xf32>
    %62 = vector.shape_cast %61 : vector<1x1x256xf32> to vector<1x256xf32>
    %63 = vector.broadcast %62 : vector<1x256xf32> to vector<4x256xf32>
    %64 = arith.mulf %60, %63 : vector<4x256xf32>
    %c0_33 = arith.constant 0 : index
    %c7 = arith.constant 7 : index
    %c0_34 = arith.constant 0 : index
    %c0_35 = arith.constant 0 : index
    %65 = vector.load %arg3[%c0_33, %c7, %c0_34, %c0_35] : memref<2x9x4x4xf32, #tpu.memory_space<vmem>>, vector<1x1x4x4xf32>
    %66 = vector.shape_cast %65 : vector<1x1x4x4xf32> to vector<4x4xf32>
    %cst_36 = arith.constant dense<0.000000e+00> : vector<4x256xf32>
    %67 = tpu.matmul %66, %64, %cst_36 {dimension_numbers = #tpu.dot_dimension_numbers<[1], [0], [0], [1], [0, 0, 1, 1], [], []>} : vector<4x4xf32>, vector<4x256xf32>, vector<4x256xf32> -> vector<4x256xf32>
    %68 = arith.addf %59, %67 : vector<4x256xf32>
    %c239_i32 = arith.constant 239 : i32
    %69 = tpu.dynamic_rotate %1 by %c239_i32 dim 1 : vector<4x256xf32>, i32 -> vector<4x256xf32>
    %70 = vector.extract_strided_slice %2 {offsets = [8, 0, 0], sizes = [1, 1, 256], strides = [1, 1, 1]} : vector<9x1x256xf32> to vector<1x1x256xf32>
    %71 = vector.shape_cast %70 : vector<1x1x256xf32> to vector<1x256xf32>
    %72 = vector.broadcast %71 : vector<1x256xf32> to vector<4x256xf32>
    %73 = arith.mulf %69, %72 : vector<4x256xf32>
    %c0_37 = arith.constant 0 : index
    %c8 = arith.constant 8 : index
    %c0_38 = arith.constant 0 : index
    %c0_39 = arith.constant 0 : index
    %74 = vector.load %arg3[%c0_37, %c8, %c0_38, %c0_39] : memref<2x9x4x4xf32, #tpu.memory_space<vmem>>, vector<1x1x4x4xf32>
    %75 = vector.shape_cast %74 : vector<1x1x4x4xf32> to vector<4x4xf32>
    %cst_40 = arith.constant dense<0.000000e+00> : vector<4x256xf32>
    %76 = tpu.matmul %75, %73, %cst_40 {dimension_numbers = #tpu.dot_dimension_numbers<[1], [0], [0], [1], [0, 0, 1, 1], [], []>} : vector<4x4xf32>, vector<4x256xf32>, vector<4x256xf32> -> vector<4x256xf32>
    %77 = arith.addf %68, %76 : vector<4x256xf32>
    %c0_41 = arith.constant 0 : index
    %c0_42 = arith.constant 0 : index
    %c0_43 = arith.constant 0 : index
    %78 = vector.load %arg4[%c0_41, %c0_42, %c0_43] : memref<2x4x1xf32, #tpu.memory_space<vmem>>, vector<1x4x1xf32>
    %79 = vector.shape_cast %78 : vector<1x4x1xf32> to vector<4x1xf32>
    %80 = vector.broadcast %79 : vector<4x1xf32> to vector<4x256xf32>
    %81 = arith.addf %77, %80 : vector<4x256xf32>
    %cst_44 = arith.constant 0.000000e+00 : f32
    %82 = vector.broadcast %cst_44 : f32 to vector<4x256xf32>
    %83 = arith.maximumf %81, %82 : vector<4x256xf32>
    %c17_i32_45 = arith.constant 17 : i32
    %84 = tpu.dynamic_rotate %83 by %c17_i32_45 dim 1 : vector<4x256xf32>, i32 -> vector<4x256xf32>
    %85 = vector.extract_strided_slice %2 {offsets = [0, 0, 0], sizes = [1, 1, 256], strides = [1, 1, 1]} : vector<9x1x256xf32> to vector<1x1x256xf32>
    %86 = vector.shape_cast %85 : vector<1x1x256xf32> to vector<1x256xf32>
    %87 = vector.broadcast %86 : vector<1x256xf32> to vector<4x256xf32>
    %88 = arith.mulf %84, %87 : vector<4x256xf32>
    %c0_46 = arith.constant 0 : index
    %c0_47 = arith.constant 0 : index
    %c0_48 = arith.constant 0 : index
    %c0_49 = arith.constant 0 : index
    %89 = vector.load %arg5[%c0_46, %c0_47, %c0_48, %c0_49] : memref<2x9x4x4xf32, #tpu.memory_space<vmem>>, vector<1x1x4x4xf32>
    %90 = vector.shape_cast %89 : vector<1x1x4x4xf32> to vector<4x4xf32>
    %cst_50 = arith.constant dense<0.000000e+00> : vector<4x256xf32>
    %91 = tpu.matmul %90, %88, %cst_50 {dimension_numbers = #tpu.dot_dimension_numbers<[1], [0], [0], [1], [0, 0, 1, 1], [], []>} : vector<4x4xf32>, vector<4x256xf32>, vector<4x256xf32> -> vector<4x256xf32>
    %c16_i32_51 = arith.constant 16 : i32
    %92 = tpu.dynamic_rotate %83 by %c16_i32_51 dim 1 : vector<4x256xf32>, i32 -> vector<4x256xf32>
    %93 = vector.extract_strided_slice %2 {offsets = [1, 0, 0], sizes = [1, 1, 256], strides = [1, 1, 1]} : vector<9x1x256xf32> to vector<1x1x256xf32>
    %94 = vector.shape_cast %93 : vector<1x1x256xf32> to vector<1x256xf32>
    %95 = vector.broadcast %94 : vector<1x256xf32> to vector<4x256xf32>
    %96 = arith.mulf %92, %95 : vector<4x256xf32>
    %c0_52 = arith.constant 0 : index
    %c1_53 = arith.constant 1 : index
    %c0_54 = arith.constant 0 : index
    %c0_55 = arith.constant 0 : index
    %97 = vector.load %arg5[%c0_52, %c1_53, %c0_54, %c0_55] : memref<2x9x4x4xf32, #tpu.memory_space<vmem>>, vector<1x1x4x4xf32>
    %98 = vector.shape_cast %97 : vector<1x1x4x4xf32> to vector<4x4xf32>
    %cst_56 = arith.constant dense<0.000000e+00> : vector<4x256xf32>
    %99 = tpu.matmul %98, %96, %cst_56 {dimension_numbers = #tpu.dot_dimension_numbers<[1], [0], [0], [1], [0, 0, 1, 1], [], []>} : vector<4x4xf32>, vector<4x256xf32>, vector<4x256xf32> -> vector<4x256xf32>
    %100 = arith.addf %91, %99 : vector<4x256xf32>
    %c15_i32_57 = arith.constant 15 : i32
    %101 = tpu.dynamic_rotate %83 by %c15_i32_57 dim 1 : vector<4x256xf32>, i32 -> vector<4x256xf32>
    %102 = vector.extract_strided_slice %2 {offsets = [2, 0, 0], sizes = [1, 1, 256], strides = [1, 1, 1]} : vector<9x1x256xf32> to vector<1x1x256xf32>
    %103 = vector.shape_cast %102 : vector<1x1x256xf32> to vector<1x256xf32>
    %104 = vector.broadcast %103 : vector<1x256xf32> to vector<4x256xf32>
    %105 = arith.mulf %101, %104 : vector<4x256xf32>
    %c0_58 = arith.constant 0 : index
    %c2_59 = arith.constant 2 : index
    %c0_60 = arith.constant 0 : index
    %c0_61 = arith.constant 0 : index
    %106 = vector.load %arg5[%c0_58, %c2_59, %c0_60, %c0_61] : memref<2x9x4x4xf32, #tpu.memory_space<vmem>>, vector<1x1x4x4xf32>
    %107 = vector.shape_cast %106 : vector<1x1x4x4xf32> to vector<4x4xf32>
    %cst_62 = arith.constant dense<0.000000e+00> : vector<4x256xf32>
    %108 = tpu.matmul %107, %105, %cst_62 {dimension_numbers = #tpu.dot_dimension_numbers<[1], [0], [0], [1], [0, 0, 1, 1], [], []>} : vector<4x4xf32>, vector<4x256xf32>, vector<4x256xf32> -> vector<4x256xf32>
    %109 = arith.addf %100, %108 : vector<4x256xf32>
    %c1_i32_63 = arith.constant 1 : i32
    %110 = tpu.dynamic_rotate %83 by %c1_i32_63 dim 1 : vector<4x256xf32>, i32 -> vector<4x256xf32>
    %111 = vector.extract_strided_slice %2 {offsets = [3, 0, 0], sizes = [1, 1, 256], strides = [1, 1, 1]} : vector<9x1x256xf32> to vector<1x1x256xf32>
    %112 = vector.shape_cast %111 : vector<1x1x256xf32> to vector<1x256xf32>
    %113 = vector.broadcast %112 : vector<1x256xf32> to vector<4x256xf32>
    %114 = arith.mulf %110, %113 : vector<4x256xf32>
    %c0_64 = arith.constant 0 : index
    %c3_65 = arith.constant 3 : index
    %c0_66 = arith.constant 0 : index
    %c0_67 = arith.constant 0 : index
    %115 = vector.load %arg5[%c0_64, %c3_65, %c0_66, %c0_67] : memref<2x9x4x4xf32, #tpu.memory_space<vmem>>, vector<1x1x4x4xf32>
    %116 = vector.shape_cast %115 : vector<1x1x4x4xf32> to vector<4x4xf32>
    %cst_68 = arith.constant dense<0.000000e+00> : vector<4x256xf32>
    %117 = tpu.matmul %116, %114, %cst_68 {dimension_numbers = #tpu.dot_dimension_numbers<[1], [0], [0], [1], [0, 0, 1, 1], [], []>} : vector<4x4xf32>, vector<4x256xf32>, vector<4x256xf32> -> vector<4x256xf32>
    %118 = arith.addf %109, %117 : vector<4x256xf32>
    %c0_69 = arith.constant 0 : index
    %c4_70 = arith.constant 4 : index
    %c0_71 = arith.constant 0 : index
    %c0_72 = arith.constant 0 : index
    %119 = vector.load %arg5[%c0_69, %c4_70, %c0_71, %c0_72] : memref<2x9x4x4xf32, #tpu.memory_space<vmem>>, vector<1x1x4x4xf32>
    %120 = vector.shape_cast %119 : vector<1x1x4x4xf32> to vector<4x4xf32>
    %cst_73 = arith.constant dense<0.000000e+00> : vector<4x256xf32>
    %121 = tpu.matmul %120, %83, %cst_73 {dimension_numbers = #tpu.dot_dimension_numbers<[1], [0], [0], [1], [0, 0, 1, 1], [], []>} : vector<4x4xf32>, vector<4x256xf32>, vector<4x256xf32> -> vector<4x256xf32>
    %122 = arith.addf %118, %121 : vector<4x256xf32>
    %c255_i32_74 = arith.constant 255 : i32
    %123 = tpu.dynamic_rotate %83 by %c255_i32_74 dim 1 : vector<4x256xf32>, i32 -> vector<4x256xf32>
    %124 = vector.extract_strided_slice %2 {offsets = [5, 0, 0], sizes = [1, 1, 256], strides = [1, 1, 1]} : vector<9x1x256xf32> to vector<1x1x256xf32>
    %125 = vector.shape_cast %124 : vector<1x1x256xf32> to vector<1x256xf32>
    %126 = vector.broadcast %125 : vector<1x256xf32> to vector<4x256xf32>
    %127 = arith.mulf %123, %126 : vector<4x256xf32>
    %c0_75 = arith.constant 0 : index
    %c5_76 = arith.constant 5 : index
    %c0_77 = arith.constant 0 : index
    %c0_78 = arith.constant 0 : index
    %128 = vector.load %arg5[%c0_75, %c5_76, %c0_77, %c0_78] : memref<2x9x4x4xf32, #tpu.memory_space<vmem>>, vector<1x1x4x4xf32>
    %129 = vector.shape_cast %128 : vector<1x1x4x4xf32> to vector<4x4xf32>
    %cst_79 = arith.constant dense<0.000000e+00> : vector<4x256xf32>
    %130 = tpu.matmul %129, %127, %cst_79 {dimension_numbers = #tpu.dot_dimension_numbers<[1], [0], [0], [1], [0, 0, 1, 1], [], []>} : vector<4x4xf32>, vector<4x256xf32>, vector<4x256xf32> -> vector<4x256xf32>
    %131 = arith.addf %122, %130 : vector<4x256xf32>
    %c241_i32_80 = arith.constant 241 : i32
    %132 = tpu.dynamic_rotate %83 by %c241_i32_80 dim 1 : vector<4x256xf32>, i32 -> vector<4x256xf32>
    %133 = vector.extract_strided_slice %2 {offsets = [6, 0, 0], sizes = [1, 1, 256], strides = [1, 1, 1]} : vector<9x1x256xf32> to vector<1x1x256xf32>
    %134 = vector.shape_cast %133 : vector<1x1x256xf32> to vector<1x256xf32>
    %135 = vector.broadcast %134 : vector<1x256xf32> to vector<4x256xf32>
    %136 = arith.mulf %132, %135 : vector<4x256xf32>
    %c0_81 = arith.constant 0 : index
    %c6_82 = arith.constant 6 : index
    %c0_83 = arith.constant 0 : index
    %c0_84 = arith.constant 0 : index
    %137 = vector.load %arg5[%c0_81, %c6_82, %c0_83, %c0_84] : memref<2x9x4x4xf32, #tpu.memory_space<vmem>>, vector<1x1x4x4xf32>
    %138 = vector.shape_cast %137 : vector<1x1x4x4xf32> to vector<4x4xf32>
    %cst_85 = arith.constant dense<0.000000e+00> : vector<4x256xf32>
    %139 = tpu.matmul %138, %136, %cst_85 {dimension_numbers = #tpu.dot_dimension_numbers<[1], [0], [0], [1], [0, 0, 1, 1], [], []>} : vector<4x4xf32>, vector<4x256xf32>, vector<4x256xf32> -> vector<4x256xf32>
    %140 = arith.addf %131, %139 : vector<4x256xf32>
    %c240_i32_86 = arith.constant 240 : i32
    %141 = tpu.dynamic_rotate %83 by %c240_i32_86 dim 1 : vector<4x256xf32>, i32 -> vector<4x256xf32>
    %142 = vector.extract_strided_slice %2 {offsets = [7, 0, 0], sizes = [1, 1, 256], strides = [1, 1, 1]} : vector<9x1x256xf32> to vector<1x1x256xf32>
    %143 = vector.shape_cast %142 : vector<1x1x256xf32> to vector<1x256xf32>
    %144 = vector.broadcast %143 : vector<1x256xf32> to vector<4x256xf32>
    %145 = arith.mulf %141, %144 : vector<4x256xf32>
    %c0_87 = arith.constant 0 : index
    %c7_88 = arith.constant 7 : index
    %c0_89 = arith.constant 0 : index
    %c0_90 = arith.constant 0 : index
    %146 = vector.load %arg5[%c0_87, %c7_88, %c0_89, %c0_90] : memref<2x9x4x4xf32, #tpu.memory_space<vmem>>, vector<1x1x4x4xf32>
    %147 = vector.shape_cast %146 : vector<1x1x4x4xf32> to vector<4x4xf32>
    %cst_91 = arith.constant dense<0.000000e+00> : vector<4x256xf32>
    %148 = tpu.matmul %147, %145, %cst_91 {dimension_numbers = #tpu.dot_dimension_numbers<[1], [0], [0], [1], [0, 0, 1, 1], [], []>} : vector<4x4xf32>, vector<4x256xf32>, vector<4x256xf32> -> vector<4x256xf32>
    %149 = arith.addf %140, %148 : vector<4x256xf32>
    %c239_i32_92 = arith.constant 239 : i32
    %150 = tpu.dynamic_rotate %83 by %c239_i32_92 dim 1 : vector<4x256xf32>, i32 -> vector<4x256xf32>
    %151 = vector.extract_strided_slice %2 {offsets = [8, 0, 0], sizes = [1, 1, 256], strides = [1, 1, 1]} : vector<9x1x256xf32> to vector<1x1x256xf32>
    %152 = vector.shape_cast %151 : vector<1x1x256xf32> to vector<1x256xf32>
    %153 = vector.broadcast %152 : vector<1x256xf32> to vector<4x256xf32>
    %154 = arith.mulf %150, %153 : vector<4x256xf32>
    %c0_93 = arith.constant 0 : index
    %c8_94 = arith.constant 8 : index
    %c0_95 = arith.constant 0 : index
    %c0_96 = arith.constant 0 : index
    %155 = vector.load %arg5[%c0_93, %c8_94, %c0_95, %c0_96] : memref<2x9x4x4xf32, #tpu.memory_space<vmem>>, vector<1x1x4x4xf32>
    %156 = vector.shape_cast %155 : vector<1x1x4x4xf32> to vector<4x4xf32>
    %cst_97 = arith.constant dense<0.000000e+00> : vector<4x256xf32>
    %157 = tpu.matmul %156, %154, %cst_97 {dimension_numbers = #tpu.dot_dimension_numbers<[1], [0], [0], [1], [0, 0, 1, 1], [], []>} : vector<4x4xf32>, vector<4x256xf32>, vector<4x256xf32> -> vector<4x256xf32>
    %158 = arith.addf %149, %157 : vector<4x256xf32>
    %c0_98 = arith.constant 0 : index
    %c0_99 = arith.constant 0 : index
    %c0_100 = arith.constant 0 : index
    %159 = vector.load %arg6[%c0_98, %c0_99, %c0_100] : memref<2x4x1xf32, #tpu.memory_space<vmem>>, vector<1x4x1xf32>
    %160 = vector.shape_cast %159 : vector<1x4x1xf32> to vector<4x1xf32>
    %161 = vector.broadcast %160 : vector<4x1xf32> to vector<4x256xf32>
    %162 = arith.addf %158, %161 : vector<4x256xf32>
    %cst_101 = arith.constant dense<0.000000e+00> : vector<4xf32>
    %163 = vector.multi_reduction <add>, %162, %cst_101 [1] : vector<4x256xf32> to vector<4xf32>
    %164 = vector.shape_cast %163 : vector<4xf32> to vector<4x1xf32>
    %cst_102 = arith.constant 2.560000e+02 : f32
    %165 = vector.broadcast %cst_102 : f32 to vector<4x1xf32>
    %166 = arith.divf %164, %165 : vector<4x1xf32>
    %c0_103 = arith.constant 0 : index
    %c0_104 = arith.constant 0 : index
    %c0_105 = arith.constant 0 : index
    %167 = vector.load %arg7[%c0_103, %c0_104, %c0_105] : memref<2x2x4xf32, #tpu.memory_space<vmem>>, vector<1x2x4xf32>
    %168 = vector.shape_cast %167 : vector<1x2x4xf32> to vector<2x4xf32>
    %cst_106 = arith.constant dense<0.000000e+00> : vector<2x1xf32>
    %169 = tpu.matmul %168, %166, %cst_106 {dimension_numbers = #tpu.dot_dimension_numbers<[1], [0], [0], [1], [0, 0, 1, 1], [], []>} : vector<2x4xf32>, vector<4x1xf32>, vector<2x1xf32> -> vector<2x1xf32>
    %c0_107 = arith.constant 0 : index
    %c0_108 = arith.constant 0 : index
    %c0_109 = arith.constant 0 : index
    %170 = vector.load %arg8[%c0_107, %c0_108, %c0_109] : memref<2x2x1xf32, #tpu.memory_space<vmem>>, vector<1x2x1xf32>
    %171 = vector.shape_cast %170 : vector<1x2x1xf32> to vector<2x1xf32>
    %172 = arith.addf %169, %171 : vector<2x1xf32>
    %cst_110 = arith.constant 0.000000e+00 : f32
    %173 = vector.broadcast %cst_110 : f32 to vector<2x1xf32>
    %174 = arith.maximumf %172, %173 : vector<2x1xf32>
    %c0_111 = arith.constant 0 : index
    %c0_112 = arith.constant 0 : index
    %c0_113 = arith.constant 0 : index
    %175 = vector.load %arg9[%c0_111, %c0_112, %c0_113] : memref<2x4x2xf32, #tpu.memory_space<vmem>>, vector<1x4x2xf32>
    %176 = vector.shape_cast %175 : vector<1x4x2xf32> to vector<4x2xf32>
    %cst_114 = arith.constant dense<0.000000e+00> : vector<4x1xf32>
    %177 = tpu.matmul %176, %174, %cst_114 {dimension_numbers = #tpu.dot_dimension_numbers<[1], [0], [0], [1], [0, 0, 1, 1], [], []>} : vector<4x2xf32>, vector<2x1xf32>, vector<4x1xf32> -> vector<4x1xf32>
    %c0_115 = arith.constant 0 : index
    %c0_116 = arith.constant 0 : index
    %c0_117 = arith.constant 0 : index
    %178 = vector.load %arg10[%c0_115, %c0_116, %c0_117] : memref<2x4x1xf32, #tpu.memory_space<vmem>>, vector<1x4x1xf32>
    %179 = vector.shape_cast %178 : vector<1x4x1xf32> to vector<4x1xf32>
    %180 = arith.addf %177, %179 : vector<4x1xf32>
    %181 = arith.negf %180 : vector<4x1xf32>
    %182 = math.exp %181 : vector<4x1xf32>
    %cst_118 = arith.constant 1.000000e+00 : f32
    %183 = vector.broadcast %cst_118 : f32 to vector<4x1xf32>
    %184 = arith.addf %183, %182 : vector<4x1xf32>
    %185 = arith.divf %183, %184 : vector<4x1xf32>
    %186 = vector.broadcast %185 : vector<4x1xf32> to vector<4x256xf32>
    %187 = arith.mulf %162, %186 : vector<4x256xf32>
    %188 = arith.addf %1, %187 : vector<4x256xf32>
    %cst_119 = arith.constant 0.000000e+00 : f32
    %189 = vector.broadcast %cst_119 : f32 to vector<4x256xf32>
    %190 = arith.maximumf %188, %189 : vector<4x256xf32>
    %c17_i32_120 = arith.constant 17 : i32
    %191 = tpu.dynamic_rotate %190 by %c17_i32_120 dim 1 : vector<4x256xf32>, i32 -> vector<4x256xf32>
    %192 = vector.extract_strided_slice %2 {offsets = [0, 0, 0], sizes = [1, 1, 256], strides = [1, 1, 1]} : vector<9x1x256xf32> to vector<1x1x256xf32>
    %193 = vector.shape_cast %192 : vector<1x1x256xf32> to vector<1x256xf32>
    %194 = vector.broadcast %193 : vector<1x256xf32> to vector<4x256xf32>
    %195 = arith.mulf %191, %194 : vector<4x256xf32>
    %c1_121 = arith.constant 1 : index
    %c0_122 = arith.constant 0 : index
    %c0_123 = arith.constant 0 : index
    %c0_124 = arith.constant 0 : index
    %196 = vector.load %arg3[%c1_121, %c0_122, %c0_123, %c0_124] : memref<2x9x4x4xf32, #tpu.memory_space<vmem>>, vector<1x1x4x4xf32>
    %197 = vector.shape_cast %196 : vector<1x1x4x4xf32> to vector<4x4xf32>
    %cst_125 = arith.constant dense<0.000000e+00> : vector<4x256xf32>
    %198 = tpu.matmul %197, %195, %cst_125 {dimension_numbers = #tpu.dot_dimension_numbers<[1], [0], [0], [1], [0, 0, 1, 1], [], []>} : vector<4x4xf32>, vector<4x256xf32>, vector<4x256xf32> -> vector<4x256xf32>
    %c16_i32_126 = arith.constant 16 : i32
    %199 = tpu.dynamic_rotate %190 by %c16_i32_126 dim 1 : vector<4x256xf32>, i32 -> vector<4x256xf32>
    %200 = vector.extract_strided_slice %2 {offsets = [1, 0, 0], sizes = [1, 1, 256], strides = [1, 1, 1]} : vector<9x1x256xf32> to vector<1x1x256xf32>
    %201 = vector.shape_cast %200 : vector<1x1x256xf32> to vector<1x256xf32>
    %202 = vector.broadcast %201 : vector<1x256xf32> to vector<4x256xf32>
    %203 = arith.mulf %199, %202 : vector<4x256xf32>
    %c1_127 = arith.constant 1 : index
    %c1_128 = arith.constant 1 : index
    %c0_129 = arith.constant 0 : index
    %c0_130 = arith.constant 0 : index
    %204 = vector.load %arg3[%c1_127, %c1_128, %c0_129, %c0_130] : memref<2x9x4x4xf32, #tpu.memory_space<vmem>>, vector<1x1x4x4xf32>
    %205 = vector.shape_cast %204 : vector<1x1x4x4xf32> to vector<4x4xf32>
    %cst_131 = arith.constant dense<0.000000e+00> : vector<4x256xf32>
    %206 = tpu.matmul %205, %203, %cst_131 {dimension_numbers = #tpu.dot_dimension_numbers<[1], [0], [0], [1], [0, 0, 1, 1], [], []>} : vector<4x4xf32>, vector<4x256xf32>, vector<4x256xf32> -> vector<4x256xf32>
    %207 = arith.addf %198, %206 : vector<4x256xf32>
    %c15_i32_132 = arith.constant 15 : i32
    %208 = tpu.dynamic_rotate %190 by %c15_i32_132 dim 1 : vector<4x256xf32>, i32 -> vector<4x256xf32>
    %209 = vector.extract_strided_slice %2 {offsets = [2, 0, 0], sizes = [1, 1, 256], strides = [1, 1, 1]} : vector<9x1x256xf32> to vector<1x1x256xf32>
    %210 = vector.shape_cast %209 : vector<1x1x256xf32> to vector<1x256xf32>
    %211 = vector.broadcast %210 : vector<1x256xf32> to vector<4x256xf32>
    %212 = arith.mulf %208, %211 : vector<4x256xf32>
    %c1_133 = arith.constant 1 : index
    %c2_134 = arith.constant 2 : index
    %c0_135 = arith.constant 0 : index
    %c0_136 = arith.constant 0 : index
    %213 = vector.load %arg3[%c1_133, %c2_134, %c0_135, %c0_136] : memref<2x9x4x4xf32, #tpu.memory_space<vmem>>, vector<1x1x4x4xf32>
    %214 = vector.shape_cast %213 : vector<1x1x4x4xf32> to vector<4x4xf32>
    %cst_137 = arith.constant dense<0.000000e+00> : vector<4x256xf32>
    %215 = tpu.matmul %214, %212, %cst_137 {dimension_numbers = #tpu.dot_dimension_numbers<[1], [0], [0], [1], [0, 0, 1, 1], [], []>} : vector<4x4xf32>, vector<4x256xf32>, vector<4x256xf32> -> vector<4x256xf32>
    %216 = arith.addf %207, %215 : vector<4x256xf32>
    %c1_i32_138 = arith.constant 1 : i32
    %217 = tpu.dynamic_rotate %190 by %c1_i32_138 dim 1 : vector<4x256xf32>, i32 -> vector<4x256xf32>
    %218 = vector.extract_strided_slice %2 {offsets = [3, 0, 0], sizes = [1, 1, 256], strides = [1, 1, 1]} : vector<9x1x256xf32> to vector<1x1x256xf32>
    %219 = vector.shape_cast %218 : vector<1x1x256xf32> to vector<1x256xf32>
    %220 = vector.broadcast %219 : vector<1x256xf32> to vector<4x256xf32>
    %221 = arith.mulf %217, %220 : vector<4x256xf32>
    %c1_139 = arith.constant 1 : index
    %c3_140 = arith.constant 3 : index
    %c0_141 = arith.constant 0 : index
    %c0_142 = arith.constant 0 : index
    %222 = vector.load %arg3[%c1_139, %c3_140, %c0_141, %c0_142] : memref<2x9x4x4xf32, #tpu.memory_space<vmem>>, vector<1x1x4x4xf32>
    %223 = vector.shape_cast %222 : vector<1x1x4x4xf32> to vector<4x4xf32>
    %cst_143 = arith.constant dense<0.000000e+00> : vector<4x256xf32>
    %224 = tpu.matmul %223, %221, %cst_143 {dimension_numbers = #tpu.dot_dimension_numbers<[1], [0], [0], [1], [0, 0, 1, 1], [], []>} : vector<4x4xf32>, vector<4x256xf32>, vector<4x256xf32> -> vector<4x256xf32>
    %225 = arith.addf %216, %224 : vector<4x256xf32>
    %c1_144 = arith.constant 1 : index
    %c4_145 = arith.constant 4 : index
    %c0_146 = arith.constant 0 : index
    %c0_147 = arith.constant 0 : index
    %226 = vector.load %arg3[%c1_144, %c4_145, %c0_146, %c0_147] : memref<2x9x4x4xf32, #tpu.memory_space<vmem>>, vector<1x1x4x4xf32>
    %227 = vector.shape_cast %226 : vector<1x1x4x4xf32> to vector<4x4xf32>
    %cst_148 = arith.constant dense<0.000000e+00> : vector<4x256xf32>
    %228 = tpu.matmul %227, %190, %cst_148 {dimension_numbers = #tpu.dot_dimension_numbers<[1], [0], [0], [1], [0, 0, 1, 1], [], []>} : vector<4x4xf32>, vector<4x256xf32>, vector<4x256xf32> -> vector<4x256xf32>
    %229 = arith.addf %225, %228 : vector<4x256xf32>
    %c255_i32_149 = arith.constant 255 : i32
    %230 = tpu.dynamic_rotate %190 by %c255_i32_149 dim 1 : vector<4x256xf32>, i32 -> vector<4x256xf32>
    %231 = vector.extract_strided_slice %2 {offsets = [5, 0, 0], sizes = [1, 1, 256], strides = [1, 1, 1]} : vector<9x1x256xf32> to vector<1x1x256xf32>
    %232 = vector.shape_cast %231 : vector<1x1x256xf32> to vector<1x256xf32>
    %233 = vector.broadcast %232 : vector<1x256xf32> to vector<4x256xf32>
    %234 = arith.mulf %230, %233 : vector<4x256xf32>
    %c1_150 = arith.constant 1 : index
    %c5_151 = arith.constant 5 : index
    %c0_152 = arith.constant 0 : index
    %c0_153 = arith.constant 0 : index
    %235 = vector.load %arg3[%c1_150, %c5_151, %c0_152, %c0_153] : memref<2x9x4x4xf32, #tpu.memory_space<vmem>>, vector<1x1x4x4xf32>
    %236 = vector.shape_cast %235 : vector<1x1x4x4xf32> to vector<4x4xf32>
    %cst_154 = arith.constant dense<0.000000e+00> : vector<4x256xf32>
    %237 = tpu.matmul %236, %234, %cst_154 {dimension_numbers = #tpu.dot_dimension_numbers<[1], [0], [0], [1], [0, 0, 1, 1], [], []>} : vector<4x4xf32>, vector<4x256xf32>, vector<4x256xf32> -> vector<4x256xf32>
    %238 = arith.addf %229, %237 : vector<4x256xf32>
    %c241_i32_155 = arith.constant 241 : i32
    %239 = tpu.dynamic_rotate %190 by %c241_i32_155 dim 1 : vector<4x256xf32>, i32 -> vector<4x256xf32>
    %240 = vector.extract_strided_slice %2 {offsets = [6, 0, 0], sizes = [1, 1, 256], strides = [1, 1, 1]} : vector<9x1x256xf32> to vector<1x1x256xf32>
    %241 = vector.shape_cast %240 : vector<1x1x256xf32> to vector<1x256xf32>
    %242 = vector.broadcast %241 : vector<1x256xf32> to vector<4x256xf32>
    %243 = arith.mulf %239, %242 : vector<4x256xf32>
    %c1_156 = arith.constant 1 : index
    %c6_157 = arith.constant 6 : index
    %c0_158 = arith.constant 0 : index
    %c0_159 = arith.constant 0 : index
    %244 = vector.load %arg3[%c1_156, %c6_157, %c0_158, %c0_159] : memref<2x9x4x4xf32, #tpu.memory_space<vmem>>, vector<1x1x4x4xf32>
    %245 = vector.shape_cast %244 : vector<1x1x4x4xf32> to vector<4x4xf32>
    %cst_160 = arith.constant dense<0.000000e+00> : vector<4x256xf32>
    %246 = tpu.matmul %245, %243, %cst_160 {dimension_numbers = #tpu.dot_dimension_numbers<[1], [0], [0], [1], [0, 0, 1, 1], [], []>} : vector<4x4xf32>, vector<4x256xf32>, vector<4x256xf32> -> vector<4x256xf32>
    %247 = arith.addf %238, %246 : vector<4x256xf32>
    %c240_i32_161 = arith.constant 240 : i32
    %248 = tpu.dynamic_rotate %190 by %c240_i32_161 dim 1 : vector<4x256xf32>, i32 -> vector<4x256xf32>
    %249 = vector.extract_strided_slice %2 {offsets = [7, 0, 0], sizes = [1, 1, 256], strides = [1, 1, 1]} : vector<9x1x256xf32> to vector<1x1x256xf32>
    %250 = vector.shape_cast %249 : vector<1x1x256xf32> to vector<1x256xf32>
    %251 = vector.broadcast %250 : vector<1x256xf32> to vector<4x256xf32>
    %252 = arith.mulf %248, %251 : vector<4x256xf32>
    %c1_162 = arith.constant 1 : index
    %c7_163 = arith.constant 7 : index
    %c0_164 = arith.constant 0 : index
    %c0_165 = arith.constant 0 : index
    %253 = vector.load %arg3[%c1_162, %c7_163, %c0_164, %c0_165] : memref<2x9x4x4xf32, #tpu.memory_space<vmem>>, vector<1x1x4x4xf32>
    %254 = vector.shape_cast %253 : vector<1x1x4x4xf32> to vector<4x4xf32>
    %cst_166 = arith.constant dense<0.000000e+00> : vector<4x256xf32>
    %255 = tpu.matmul %254, %252, %cst_166 {dimension_numbers = #tpu.dot_dimension_numbers<[1], [0], [0], [1], [0, 0, 1, 1], [], []>} : vector<4x4xf32>, vector<4x256xf32>, vector<4x256xf32> -> vector<4x256xf32>
    %256 = arith.addf %247, %255 : vector<4x256xf32>
    %c239_i32_167 = arith.constant 239 : i32
    %257 = tpu.dynamic_rotate %190 by %c239_i32_167 dim 1 : vector<4x256xf32>, i32 -> vector<4x256xf32>
    %258 = vector.extract_strided_slice %2 {offsets = [8, 0, 0], sizes = [1, 1, 256], strides = [1, 1, 1]} : vector<9x1x256xf32> to vector<1x1x256xf32>
    %259 = vector.shape_cast %258 : vector<1x1x256xf32> to vector<1x256xf32>
    %260 = vector.broadcast %259 : vector<1x256xf32> to vector<4x256xf32>
    %261 = arith.mulf %257, %260 : vector<4x256xf32>
    %c1_168 = arith.constant 1 : index
    %c8_169 = arith.constant 8 : index
    %c0_170 = arith.constant 0 : index
    %c0_171 = arith.constant 0 : index
    %262 = vector.load %arg3[%c1_168, %c8_169, %c0_170, %c0_171] : memref<2x9x4x4xf32, #tpu.memory_space<vmem>>, vector<1x1x4x4xf32>
    %263 = vector.shape_cast %262 : vector<1x1x4x4xf32> to vector<4x4xf32>
    %cst_172 = arith.constant dense<0.000000e+00> : vector<4x256xf32>
    %264 = tpu.matmul %263, %261, %cst_172 {dimension_numbers = #tpu.dot_dimension_numbers<[1], [0], [0], [1], [0, 0, 1, 1], [], []>} : vector<4x4xf32>, vector<4x256xf32>, vector<4x256xf32> -> vector<4x256xf32>
    %265 = arith.addf %256, %264 : vector<4x256xf32>
    %c1_173 = arith.constant 1 : index
    %c0_174 = arith.constant 0 : index
    %c0_175 = arith.constant 0 : index
    %266 = vector.load %arg4[%c1_173, %c0_174, %c0_175] : memref<2x4x1xf32, #tpu.memory_space<vmem>>, vector<1x4x1xf32>
    %267 = vector.shape_cast %266 : vector<1x4x1xf32> to vector<4x1xf32>
    %268 = vector.broadcast %267 : vector<4x1xf32> to vector<4x256xf32>
    %269 = arith.addf %265, %268 : vector<4x256xf32>
    %cst_176 = arith.constant 0.000000e+00 : f32
    %270 = vector.broadcast %cst_176 : f32 to vector<4x256xf32>
    %271 = arith.maximumf %269, %270 : vector<4x256xf32>
    %c17_i32_177 = arith.constant 17 : i32
    %272 = tpu.dynamic_rotate %271 by %c17_i32_177 dim 1 : vector<4x256xf32>, i32 -> vector<4x256xf32>
    %273 = vector.extract_strided_slice %2 {offsets = [0, 0, 0], sizes = [1, 1, 256], strides = [1, 1, 1]} : vector<9x1x256xf32> to vector<1x1x256xf32>
    %274 = vector.shape_cast %273 : vector<1x1x256xf32> to vector<1x256xf32>
    %275 = vector.broadcast %274 : vector<1x256xf32> to vector<4x256xf32>
    %276 = arith.mulf %272, %275 : vector<4x256xf32>
    %c1_178 = arith.constant 1 : index
    %c0_179 = arith.constant 0 : index
    %c0_180 = arith.constant 0 : index
    %c0_181 = arith.constant 0 : index
    %277 = vector.load %arg5[%c1_178, %c0_179, %c0_180, %c0_181] : memref<2x9x4x4xf32, #tpu.memory_space<vmem>>, vector<1x1x4x4xf32>
    %278 = vector.shape_cast %277 : vector<1x1x4x4xf32> to vector<4x4xf32>
    %cst_182 = arith.constant dense<0.000000e+00> : vector<4x256xf32>
    %279 = tpu.matmul %278, %276, %cst_182 {dimension_numbers = #tpu.dot_dimension_numbers<[1], [0], [0], [1], [0, 0, 1, 1], [], []>} : vector<4x4xf32>, vector<4x256xf32>, vector<4x256xf32> -> vector<4x256xf32>
    %c16_i32_183 = arith.constant 16 : i32
    %280 = tpu.dynamic_rotate %271 by %c16_i32_183 dim 1 : vector<4x256xf32>, i32 -> vector<4x256xf32>
    %281 = vector.extract_strided_slice %2 {offsets = [1, 0, 0], sizes = [1, 1, 256], strides = [1, 1, 1]} : vector<9x1x256xf32> to vector<1x1x256xf32>
    %282 = vector.shape_cast %281 : vector<1x1x256xf32> to vector<1x256xf32>
    %283 = vector.broadcast %282 : vector<1x256xf32> to vector<4x256xf32>
    %284 = arith.mulf %280, %283 : vector<4x256xf32>
    %c1_184 = arith.constant 1 : index
    %c1_185 = arith.constant 1 : index
    %c0_186 = arith.constant 0 : index
    %c0_187 = arith.constant 0 : index
    %285 = vector.load %arg5[%c1_184, %c1_185, %c0_186, %c0_187] : memref<2x9x4x4xf32, #tpu.memory_space<vmem>>, vector<1x1x4x4xf32>
    %286 = vector.shape_cast %285 : vector<1x1x4x4xf32> to vector<4x4xf32>
    %cst_188 = arith.constant dense<0.000000e+00> : vector<4x256xf32>
    %287 = tpu.matmul %286, %284, %cst_188 {dimension_numbers = #tpu.dot_dimension_numbers<[1], [0], [0], [1], [0, 0, 1, 1], [], []>} : vector<4x4xf32>, vector<4x256xf32>, vector<4x256xf32> -> vector<4x256xf32>
    %288 = arith.addf %279, %287 : vector<4x256xf32>
    %c15_i32_189 = arith.constant 15 : i32
    %289 = tpu.dynamic_rotate %271 by %c15_i32_189 dim 1 : vector<4x256xf32>, i32 -> vector<4x256xf32>
    %290 = vector.extract_strided_slice %2 {offsets = [2, 0, 0], sizes = [1, 1, 256], strides = [1, 1, 1]} : vector<9x1x256xf32> to vector<1x1x256xf32>
    %291 = vector.shape_cast %290 : vector<1x1x256xf32> to vector<1x256xf32>
    %292 = vector.broadcast %291 : vector<1x256xf32> to vector<4x256xf32>
    %293 = arith.mulf %289, %292 : vector<4x256xf32>
    %c1_190 = arith.constant 1 : index
    %c2_191 = arith.constant 2 : index
    %c0_192 = arith.constant 0 : index
    %c0_193 = arith.constant 0 : index
    %294 = vector.load %arg5[%c1_190, %c2_191, %c0_192, %c0_193] : memref<2x9x4x4xf32, #tpu.memory_space<vmem>>, vector<1x1x4x4xf32>
    %295 = vector.shape_cast %294 : vector<1x1x4x4xf32> to vector<4x4xf32>
    %cst_194 = arith.constant dense<0.000000e+00> : vector<4x256xf32>
    %296 = tpu.matmul %295, %293, %cst_194 {dimension_numbers = #tpu.dot_dimension_numbers<[1], [0], [0], [1], [0, 0, 1, 1], [], []>} : vector<4x4xf32>, vector<4x256xf32>, vector<4x256xf32> -> vector<4x256xf32>
    %297 = arith.addf %288, %296 : vector<4x256xf32>
    %c1_i32_195 = arith.constant 1 : i32
    %298 = tpu.dynamic_rotate %271 by %c1_i32_195 dim 1 : vector<4x256xf32>, i32 -> vector<4x256xf32>
    %299 = vector.extract_strided_slice %2 {offsets = [3, 0, 0], sizes = [1, 1, 256], strides = [1, 1, 1]} : vector<9x1x256xf32> to vector<1x1x256xf32>
    %300 = vector.shape_cast %299 : vector<1x1x256xf32> to vector<1x256xf32>
    %301 = vector.broadcast %300 : vector<1x256xf32> to vector<4x256xf32>
    %302 = arith.mulf %298, %301 : vector<4x256xf32>
    %c1_196 = arith.constant 1 : index
    %c3_197 = arith.constant 3 : index
    %c0_198 = arith.constant 0 : index
    %c0_199 = arith.constant 0 : index
    %303 = vector.load %arg5[%c1_196, %c3_197, %c0_198, %c0_199] : memref<2x9x4x4xf32, #tpu.memory_space<vmem>>, vector<1x1x4x4xf32>
    %304 = vector.shape_cast %303 : vector<1x1x4x4xf32> to vector<4x4xf32>
    %cst_200 = arith.constant dense<0.000000e+00> : vector<4x256xf32>
    %305 = tpu.matmul %304, %302, %cst_200 {dimension_numbers = #tpu.dot_dimension_numbers<[1], [0], [0], [1], [0, 0, 1, 1], [], []>} : vector<4x4xf32>, vector<4x256xf32>, vector<4x256xf32> -> vector<4x256xf32>
    %306 = arith.addf %297, %305 : vector<4x256xf32>
    %c1_201 = arith.constant 1 : index
    %c4_202 = arith.constant 4 : index
    %c0_203 = arith.constant 0 : index
    %c0_204 = arith.constant 0 : index
    %307 = vector.load %arg5[%c1_201, %c4_202, %c0_203, %c0_204] : memref<2x9x4x4xf32, #tpu.memory_space<vmem>>, vector<1x1x4x4xf32>
    %308 = vector.shape_cast %307 : vector<1x1x4x4xf32> to vector<4x4xf32>
    %cst_205 = arith.constant dense<0.000000e+00> : vector<4x256xf32>
    %309 = tpu.matmul %308, %271, %cst_205 {dimension_numbers = #tpu.dot_dimension_numbers<[1], [0], [0], [1], [0, 0, 1, 1], [], []>} : vector<4x4xf32>, vector<4x256xf32>, vector<4x256xf32> -> vector<4x256xf32>
    %310 = arith.addf %306, %309 : vector<4x256xf32>
    %c255_i32_206 = arith.constant 255 : i32
    %311 = tpu.dynamic_rotate %271 by %c255_i32_206 dim 1 : vector<4x256xf32>, i32 -> vector<4x256xf32>
    %312 = vector.extract_strided_slice %2 {offsets = [5, 0, 0], sizes = [1, 1, 256], strides = [1, 1, 1]} : vector<9x1x256xf32> to vector<1x1x256xf32>
    %313 = vector.shape_cast %312 : vector<1x1x256xf32> to vector<1x256xf32>
    %314 = vector.broadcast %313 : vector<1x256xf32> to vector<4x256xf32>
    %315 = arith.mulf %311, %314 : vector<4x256xf32>
    %c1_207 = arith.constant 1 : index
    %c5_208 = arith.constant 5 : index
    %c0_209 = arith.constant 0 : index
    %c0_210 = arith.constant 0 : index
    %316 = vector.load %arg5[%c1_207, %c5_208, %c0_209, %c0_210] : memref<2x9x4x4xf32, #tpu.memory_space<vmem>>, vector<1x1x4x4xf32>
    %317 = vector.shape_cast %316 : vector<1x1x4x4xf32> to vector<4x4xf32>
    %cst_211 = arith.constant dense<0.000000e+00> : vector<4x256xf32>
    %318 = tpu.matmul %317, %315, %cst_211 {dimension_numbers = #tpu.dot_dimension_numbers<[1], [0], [0], [1], [0, 0, 1, 1], [], []>} : vector<4x4xf32>, vector<4x256xf32>, vector<4x256xf32> -> vector<4x256xf32>
    %319 = arith.addf %310, %318 : vector<4x256xf32>
    %c241_i32_212 = arith.constant 241 : i32
    %320 = tpu.dynamic_rotate %271 by %c241_i32_212 dim 1 : vector<4x256xf32>, i32 -> vector<4x256xf32>
    %321 = vector.extract_strided_slice %2 {offsets = [6, 0, 0], sizes = [1, 1, 256], strides = [1, 1, 1]} : vector<9x1x256xf32> to vector<1x1x256xf32>
    %322 = vector.shape_cast %321 : vector<1x1x256xf32> to vector<1x256xf32>
    %323 = vector.broadcast %322 : vector<1x256xf32> to vector<4x256xf32>
    %324 = arith.mulf %320, %323 : vector<4x256xf32>
    %c1_213 = arith.constant 1 : index
    %c6_214 = arith.constant 6 : index
    %c0_215 = arith.constant 0 : index
    %c0_216 = arith.constant 0 : index
    %325 = vector.load %arg5[%c1_213, %c6_214, %c0_215, %c0_216] : memref<2x9x4x4xf32, #tpu.memory_space<vmem>>, vector<1x1x4x4xf32>
    %326 = vector.shape_cast %325 : vector<1x1x4x4xf32> to vector<4x4xf32>
    %cst_217 = arith.constant dense<0.000000e+00> : vector<4x256xf32>
    %327 = tpu.matmul %326, %324, %cst_217 {dimension_numbers = #tpu.dot_dimension_numbers<[1], [0], [0], [1], [0, 0, 1, 1], [], []>} : vector<4x4xf32>, vector<4x256xf32>, vector<4x256xf32> -> vector<4x256xf32>
    %328 = arith.addf %319, %327 : vector<4x256xf32>
    %c240_i32_218 = arith.constant 240 : i32
    %329 = tpu.dynamic_rotate %271 by %c240_i32_218 dim 1 : vector<4x256xf32>, i32 -> vector<4x256xf32>
    %330 = vector.extract_strided_slice %2 {offsets = [7, 0, 0], sizes = [1, 1, 256], strides = [1, 1, 1]} : vector<9x1x256xf32> to vector<1x1x256xf32>
    %331 = vector.shape_cast %330 : vector<1x1x256xf32> to vector<1x256xf32>
    %332 = vector.broadcast %331 : vector<1x256xf32> to vector<4x256xf32>
    %333 = arith.mulf %329, %332 : vector<4x256xf32>
    %c1_219 = arith.constant 1 : index
    %c7_220 = arith.constant 7 : index
    %c0_221 = arith.constant 0 : index
    %c0_222 = arith.constant 0 : index
    %334 = vector.load %arg5[%c1_219, %c7_220, %c0_221, %c0_222] : memref<2x9x4x4xf32, #tpu.memory_space<vmem>>, vector<1x1x4x4xf32>
    %335 = vector.shape_cast %334 : vector<1x1x4x4xf32> to vector<4x4xf32>
    %cst_223 = arith.constant dense<0.000000e+00> : vector<4x256xf32>
    %336 = tpu.matmul %335, %333, %cst_223 {dimension_numbers = #tpu.dot_dimension_numbers<[1], [0], [0], [1], [0, 0, 1, 1], [], []>} : vector<4x4xf32>, vector<4x256xf32>, vector<4x256xf32> -> vector<4x256xf32>
    %337 = arith.addf %328, %336 : vector<4x256xf32>
    %c239_i32_224 = arith.constant 239 : i32
    %338 = tpu.dynamic_rotate %271 by %c239_i32_224 dim 1 : vector<4x256xf32>, i32 -> vector<4x256xf32>
    %339 = vector.extract_strided_slice %2 {offsets = [8, 0, 0], sizes = [1, 1, 256], strides = [1, 1, 1]} : vector<9x1x256xf32> to vector<1x1x256xf32>
    %340 = vector.shape_cast %339 : vector<1x1x256xf32> to vector<1x256xf32>
    %341 = vector.broadcast %340 : vector<1x256xf32> to vector<4x256xf32>
    %342 = arith.mulf %338, %341 : vector<4x256xf32>
    %c1_225 = arith.constant 1 : index
    %c8_226 = arith.constant 8 : index
    %c0_227 = arith.constant 0 : index
    %c0_228 = arith.constant 0 : index
    %343 = vector.load %arg5[%c1_225, %c8_226, %c0_227, %c0_228] : memref<2x9x4x4xf32, #tpu.memory_space<vmem>>, vector<1x1x4x4xf32>
    %344 = vector.shape_cast %343 : vector<1x1x4x4xf32> to vector<4x4xf32>
    %cst_229 = arith.constant dense<0.000000e+00> : vector<4x256xf32>
    %345 = tpu.matmul %344, %342, %cst_229 {dimension_numbers = #tpu.dot_dimension_numbers<[1], [0], [0], [1], [0, 0, 1, 1], [], []>} : vector<4x4xf32>, vector<4x256xf32>, vector<4x256xf32> -> vector<4x256xf32>
    %346 = arith.addf %337, %345 : vector<4x256xf32>
    %c1_230 = arith.constant 1 : index
    %c0_231 = arith.constant 0 : index
    %c0_232 = arith.constant 0 : index
    %347 = vector.load %arg6[%c1_230, %c0_231, %c0_232] : memref<2x4x1xf32, #tpu.memory_space<vmem>>, vector<1x4x1xf32>
    %348 = vector.shape_cast %347 : vector<1x4x1xf32> to vector<4x1xf32>
    %349 = vector.broadcast %348 : vector<4x1xf32> to vector<4x256xf32>
    %350 = arith.addf %346, %349 : vector<4x256xf32>
    %cst_233 = arith.constant dense<0.000000e+00> : vector<4xf32>
    %351 = vector.multi_reduction <add>, %350, %cst_233 [1] : vector<4x256xf32> to vector<4xf32>
    %352 = vector.shape_cast %351 : vector<4xf32> to vector<4x1xf32>
    %cst_234 = arith.constant 2.560000e+02 : f32
    %353 = vector.broadcast %cst_234 : f32 to vector<4x1xf32>
    %354 = arith.divf %352, %353 : vector<4x1xf32>
    %c1_235 = arith.constant 1 : index
    %c0_236 = arith.constant 0 : index
    %c0_237 = arith.constant 0 : index
    %355 = vector.load %arg7[%c1_235, %c0_236, %c0_237] : memref<2x2x4xf32, #tpu.memory_space<vmem>>, vector<1x2x4xf32>
    %356 = vector.shape_cast %355 : vector<1x2x4xf32> to vector<2x4xf32>
    %cst_238 = arith.constant dense<0.000000e+00> : vector<2x1xf32>
    %357 = tpu.matmul %356, %354, %cst_238 {dimension_numbers = #tpu.dot_dimension_numbers<[1], [0], [0], [1], [0, 0, 1, 1], [], []>} : vector<2x4xf32>, vector<4x1xf32>, vector<2x1xf32> -> vector<2x1xf32>
    %c1_239 = arith.constant 1 : index
    %c0_240 = arith.constant 0 : index
    %c0_241 = arith.constant 0 : index
    %358 = vector.load %arg8[%c1_239, %c0_240, %c0_241] : memref<2x2x1xf32, #tpu.memory_space<vmem>>, vector<1x2x1xf32>
    %359 = vector.shape_cast %358 : vector<1x2x1xf32> to vector<2x1xf32>
    %360 = arith.addf %357, %359 : vector<2x1xf32>
    %cst_242 = arith.constant 0.000000e+00 : f32
    %361 = vector.broadcast %cst_242 : f32 to vector<2x1xf32>
    %362 = arith.maximumf %360, %361 : vector<2x1xf32>
    %c1_243 = arith.constant 1 : index
    %c0_244 = arith.constant 0 : index
    %c0_245 = arith.constant 0 : index
    %363 = vector.load %arg9[%c1_243, %c0_244, %c0_245] : memref<2x4x2xf32, #tpu.memory_space<vmem>>, vector<1x4x2xf32>
    %364 = vector.shape_cast %363 : vector<1x4x2xf32> to vector<4x2xf32>
    %cst_246 = arith.constant dense<0.000000e+00> : vector<4x1xf32>
    %365 = tpu.matmul %364, %362, %cst_246 {dimension_numbers = #tpu.dot_dimension_numbers<[1], [0], [0], [1], [0, 0, 1, 1], [], []>} : vector<4x2xf32>, vector<2x1xf32>, vector<4x1xf32> -> vector<4x1xf32>
    %c1_247 = arith.constant 1 : index
    %c0_248 = arith.constant 0 : index
    %c0_249 = arith.constant 0 : index
    %366 = vector.load %arg10[%c1_247, %c0_248, %c0_249] : memref<2x4x1xf32, #tpu.memory_space<vmem>>, vector<1x4x1xf32>
    %367 = vector.shape_cast %366 : vector<1x4x1xf32> to vector<4x1xf32>
    %368 = arith.addf %365, %367 : vector<4x1xf32>
    %369 = arith.negf %368 : vector<4x1xf32>
    %370 = math.exp %369 : vector<4x1xf32>
    %cst_250 = arith.constant 1.000000e+00 : f32
    %371 = vector.broadcast %cst_250 : f32 to vector<4x1xf32>
    %372 = arith.addf %371, %370 : vector<4x1xf32>
    %373 = arith.divf %371, %372 : vector<4x1xf32>
    %374 = vector.broadcast %373 : vector<4x1xf32> to vector<4x256xf32>
    %375 = arith.mulf %350, %374 : vector<4x256xf32>
    %376 = arith.addf %190, %375 : vector<4x256xf32>
    %cst_251 = arith.constant 0.000000e+00 : f32
    %377 = vector.broadcast %cst_251 : f32 to vector<4x256xf32>
    %378 = arith.maximumf %376, %377 : vector<4x256xf32>
    %c0_252 = arith.constant 0 : index
    %c0_253 = arith.constant 0 : index
    %c0_254 = arith.constant 0 : index
    %c0_255 = arith.constant 0 : index
    %379 = vector.load %arg12[%c0_252, %c0_253, %c0_254, %c0_255] : memref<1x2x4x256xf32, #tpu.memory_space<vmem>>, vector<1x1x4x256xf32>
    %380 = vector.shape_cast %379 : vector<1x1x4x256xf32> to vector<4x256xf32>
    %381 = vector.shape_cast %378 : vector<4x256xf32> to vector<1x1x4x256xf32>
    tpu.vector_store %arg12[%c0_252, %c0_253, %c0_254, %c0_255], %381 {strides = array<i32>} : memref<1x2x4x256xf32, #tpu.memory_space<vmem>>, vector<1x1x4x256xf32>,
    %cst_256 = arith.constant dense<0.000000e+00> : vector<4x4xf32>
    %382 = tpu.matmul %1, %1, %cst_256 {dimension_numbers = #tpu.dot_dimension_numbers<[1], [1], [0], [0], [0, 0, 1, 0], [], []>, precision = #tpu.contract_precision<fp32>} : vector<4x256xf32>, vector<4x256xf32>, vector<4x4xf32> -> vector<4x4xf32>
    %cst_257 = arith.constant dense<0x7F800000> : vector<4xf32>
    %383 = vector.multi_reduction <minimumf>, %382, %cst_257 [1] : vector<4x4xf32> to vector<4xf32>
    %384 = vector.shape_cast %383 : vector<4xf32> to vector<4x1xf32>
    %385 = vector.broadcast %384 : vector<4x1xf32> to vector<4x4xf32>
    %386 = arith.subf %385, %382 : vector<4x4xf32>
    %387 = math.exp %386 : vector<4x4xf32>
    %cst_258 = arith.constant dense<0.000000e+00> : vector<4xf32>
    %388 = vector.multi_reduction <add>, %387, %cst_258 [1] : vector<4x4xf32> to vector<4xf32>
    %389 = vector.shape_cast %388 : vector<4xf32> to vector<4x1xf32>
    %390 = tpu.reciprocal %389 {approx = true} : vector<4x1xf32> -> vector<4x1xf32>
    %391 = vector.broadcast %390 : vector<4x1xf32> to vector<4x4xf32>
    %392 = arith.mulf %387, %391 : vector<4x4xf32>
    %cst_259 = arith.constant dense<0.000000e+00> : vector<4x256xf32>
    %393 = tpu.matmul %392, %1, %cst_259 {dimension_numbers = #tpu.dot_dimension_numbers<[1], [0], [0], [1], [0, 0, 1, 1], [], []>} : vector<4x4xf32>, vector<4x256xf32>, vector<4x256xf32> -> vector<4x256xf32>
    %c0_260 = arith.constant 0 : index
    %c0_261 = arith.constant 0 : index
    %394 = memref.load %arg11[%c0_260, %c0_261] : memref<2x1xf32, #tpu.memory_space<smem>>
    %395 = vector.broadcast %394 : f32 to vector<4x256xf32>
    %396 = arith.mulf %395, %393 : vector<4x256xf32>
    %397 = arith.addf %396, %1 : vector<4x256xf32>
    %cst_262 = arith.constant dense<0.000000e+00> : vector<4x4xf32>
    %398 = tpu.matmul %397, %397, %cst_262 {dimension_numbers = #tpu.dot_dimension_numbers<[1], [1], [0], [0], [0, 0, 1, 0], [], []>, precision = #tpu.contract_precision<fp32>} : vector<4x256xf32>, vector<4x256xf32>, vector<4x4xf32> -> vector<4x4xf32>
    %cst_263 = arith.constant dense<0x7F800000> : vector<4xf32>
    %399 = vector.multi_reduction <minimumf>, %398, %cst_263 [1] : vector<4x4xf32> to vector<4xf32>
    %400 = vector.shape_cast %399 : vector<4xf32> to vector<4x1xf32>
    %401 = vector.broadcast %400 : vector<4x1xf32> to vector<4x4xf32>
    %402 = arith.subf %401, %398 : vector<4x4xf32>
    %403 = math.exp %402 : vector<4x4xf32>
    %cst_264 = arith.constant dense<0.000000e+00> : vector<4xf32>
    %404 = vector.multi_reduction <add>, %403, %cst_264 [1] : vector<4x4xf32> to vector<4xf32>
    %405 = vector.shape_cast %404 : vector<4xf32> to vector<4x1xf32>
    %406 = tpu.reciprocal %405 {approx = true} : vector<4x1xf32> -> vector<4x1xf32>
    %407 = vector.broadcast %406 : vector<4x1xf32> to vector<4x4xf32>
    %408 = arith.mulf %403, %407 : vector<4x4xf32>
    %cst_265 = arith.constant dense<0.000000e+00> : vector<4x256xf32>
    %409 = tpu.matmul %408, %397, %cst_265 {dimension_numbers = #tpu.dot_dimension_numbers<[1], [0], [0], [1], [0, 0, 1, 1], [], []>} : vector<4x4xf32>, vector<4x256xf32>, vector<4x256xf32> -> vector<4x256xf32>
    %c1_266 = arith.constant 1 : index
    %c0_267 = arith.constant 0 : index
    %410 = memref.load %arg11[%c1_266, %c0_267] : memref<2x1xf32, #tpu.memory_space<smem>>
    %411 = vector.broadcast %410 : f32 to vector<4x256xf32>
    %412 = arith.mulf %411, %409 : vector<4x256xf32>
    %413 = arith.addf %412, %397 : vector<4x256xf32>
    %c0_268 = arith.constant 0 : index
    %c1_269 = arith.constant 1 : index
    %c0_270 = arith.constant 0 : index
    %c0_271 = arith.constant 0 : index
    %414 = vector.load %arg12[%c0_268, %c1_269, %c0_270, %c0_271] : memref<1x2x4x256xf32, #tpu.memory_space<vmem>>, vector<1x1x4x256xf32>
    %415 = vector.shape_cast %414 : vector<1x1x4x256xf32> to vector<4x256xf32>
    %416 = vector.shape_cast %413 : vector<4x256xf32> to vector<1x1x4x256xf32>
    tpu.vector_store %arg12[%c0_268, %c1_269, %c0_270, %c0_271], %416 {strides = array<i32>} : memref<1x2x4x256xf32, #tpu.memory_space<vmem>>, vector<1x1x4x256xf32>,
    return
  }
  func.func @transform_0(%arg0: i32) -> (i32, i32, i32) {
    %c0_i32 = arith.constant 0 : i32
    %c0_i32_0 = arith.constant 0 : i32
    %c0_i32_1 = arith.constant 0 : i32
    return %arg0, %c0_i32, %c0_i32_0 : i32, i32, i32
  }
  func.func @transform_1(%arg0: i32) -> (i32, i32, i32) {
    %c0_i32 = arith.constant 0 : i32
    %c0_i32_0 = arith.constant 0 : i32
    %c0_i32_1 = arith.constant 0 : i32
    %c0_i32_2 = arith.constant 0 : i32
    return %c0_i32, %c0_i32_0, %c0_i32_1 : i32, i32, i32
  }
  func.func @transform_2(%arg0: i32) -> (i32, i32, i32, i32) {
    %c0_i32 = arith.constant 0 : i32
    %c0_i32_0 = arith.constant 0 : i32
    %c0_i32_1 = arith.constant 0 : i32
    %c0_i32_2 = arith.constant 0 : i32
    %c0_i32_3 = arith.constant 0 : i32
    return %c0_i32, %c0_i32_0, %c0_i32_1, %c0_i32_2 : i32, i32, i32, i32
  }
  func.func @transform_3(%arg0: i32) -> (i32, i32, i32) {
    %c0_i32 = arith.constant 0 : i32
    %c0_i32_0 = arith.constant 0 : i32
    %c0_i32_1 = arith.constant 0 : i32
    %c0_i32_2 = arith.constant 0 : i32
    return %c0_i32, %c0_i32_0, %c0_i32_1 : i32, i32, i32
  }
  func.func @transform_4(%arg0: i32) -> (i32, i32, i32, i32) {
    %c0_i32 = arith.constant 0 : i32
    %c0_i32_0 = arith.constant 0 : i32
    %c0_i32_1 = arith.constant 0 : i32
    %c0_i32_2 = arith.constant 0 : i32
    %c0_i32_3 = arith.constant 0 : i32
    return %c0_i32, %c0_i32_0, %c0_i32_1, %c0_i32_2 : i32, i32, i32, i32
  }
  func.func @transform_5(%arg0: i32) -> (i32, i32, i32) {
    %c0_i32 = arith.constant 0 : i32
    %c0_i32_0 = arith.constant 0 : i32
    %c0_i32_1 = arith.constant 0 : i32
    %c0_i32_2 = arith.constant 0 : i32
    return %c0_i32, %c0_i32_0, %c0_i32_1 : i32, i32, i32
  }
  func.func @transform_6(%arg0: i32) -> (i32, i32, i32) {
    %c0_i32 = arith.constant 0 : i32
    %c0_i32_0 = arith.constant 0 : i32
    %c0_i32_1 = arith.constant 0 : i32
    %c0_i32_2 = arith.constant 0 : i32
    return %c0_i32, %c0_i32_0, %c0_i32_1 : i32, i32, i32
  }
  func.func @transform_7(%arg0: i32) -> (i32, i32, i32) {
    %c0_i32 = arith.constant 0 : i32
    %c0_i32_0 = arith.constant 0 : i32
    %c0_i32_1 = arith.constant 0 : i32
    %c0_i32_2 = arith.constant 0 : i32
    return %c0_i32, %c0_i32_0, %c0_i32_1 : i32, i32, i32
  }
  func.func @transform_8(%arg0: i32) -> (i32, i32, i32) {
    %c0_i32 = arith.constant 0 : i32
    %c0_i32_0 = arith.constant 0 : i32
    %c0_i32_1 = arith.constant 0 : i32
    %c0_i32_2 = arith.constant 0 : i32
    return %c0_i32, %c0_i32_0, %c0_i32_1 : i32, i32, i32
  }
  func.func @transform_9(%arg0: i32) -> (i32, i32, i32) {
    %c0_i32 = arith.constant 0 : i32
    %c0_i32_0 = arith.constant 0 : i32
    %c0_i32_1 = arith.constant 0 : i32
    %c0_i32_2 = arith.constant 0 : i32
    return %c0_i32, %c0_i32_0, %c0_i32_1 : i32, i32, i32
  }
  func.func @transform_10(%arg0: i32) -> (i32, i32) {
    %c0_i32 = arith.constant 0 : i32
    %c0_i32_0 = arith.constant 0 : i32
    %c0_i32_1 = arith.constant 0 : i32
    return %c0_i32, %c0_i32_0 : i32, i32
  }
  func.func @transform_11(%arg0: i32) -> (i32, i32, i32, i32) {
    %c0_i32 = arith.constant 0 : i32
    %c0_i32_0 = arith.constant 0 : i32
    %c0_i32_1 = arith.constant 0 : i32
    %c0_i32_2 = arith.constant 0 : i32
    return %arg0, %c0_i32, %c0_i32_0, %c0_i32_1 : i32, i32, i32, i32
  }
}

</mosaic_0001>

<llo_original>
// kernel: group_forward.1
$region0: #{group_forward.1}
  #allocation0 [shape = 'u32[]', space=smem, size = 0x4, offset = 0x4, fixed_abs, tag = 'smem constant byte address 0x4 - core index']
  #allocation1 [shape = 'u32[144,128]{1,0:T(1,128)}', space=vmem, size = 0x12000, scoped, tag = 'internal scratch']
  %s0 = inlined_call_operand.vmem [shape: f32[2,4,256], index: 0, kind: input, shape index: {}]
  %s1 = inlined_call_operand.vmem [shape: f32[9,1,256], index: 1, kind: input, shape index: {}]
  %s2 = inlined_call_operand.vmem [shape: f32[2,9,4,4], index: 2, kind: input, shape index: {}]
  %s3 = inlined_call_operand.vmem [shape: f32[2,4,1], index: 3, kind: input, shape index: {}]
  %s4 = inlined_call_operand.vmem [shape: f32[2,9,4,4], index: 4, kind: input, shape index: {}]
  %s5 = inlined_call_operand.vmem [shape: f32[2,4,1], index: 5, kind: input, shape index: {}]
  %s6 = inlined_call_operand.vmem [shape: f32[2,2,4], index: 6, kind: input, shape index: {}]
  %s7 = inlined_call_operand.vmem [shape: f32[2,2,1], index: 7, kind: input, shape index: {}]
  %s8 = inlined_call_operand.vmem [shape: f32[2,4,2], index: 8, kind: input, shape index: {}]
  %s9 = inlined_call_operand.vmem [shape: f32[2,4,1], index: 9, kind: input, shape index: {}]
  %s10 = inlined_call_operand.vmem [shape: f32[2,1], index: 10, kind: input, shape index: {}]
  %s11 = inlined_call_operand.vmem [shape: f32[2,2,4,256], index: 11, kind: output, shape index: {}]
  %s12 = sld [smem:[#allocation0]]
  $region81: #{group_forward.1} parent=0
    _
  %s14 = ssub.s32 1, %s12
  %s15 = scalar_select 0, %s14, %s12
  $region1: #{group_forward.1} parent=0
    #allocation2 [shape = 'u8[1024]{0}', space=smem, size = 0x400, scoped, tag = 'input window, operand 10, single buffered']
    #allocation3 [shape = 's32[2]{0}', space=sflag, size = 0x8, scoped, tag = 'scoped memory for group_forward.1']
    %16 = vsyncpa [#allocation3], 0
    loop: start=0, step=1, limit=4
    $region2: #{group_forward.1} parent=1 // loop_pre_header
      _
    $region3: #{group_forward.1} parent=1 // loop_header
      %s18 = sphi 0, %s22
      %p19 = scmp.ge.s32.totalorder %s18, 4
      %s28 = sphi 0, %s30
      %s31 = sphi 0, %s28
      %s32 = sphi 0, %s31
      %s48 = sphi 0, %s32
      %s52 = sphi 0, %s52
      %s54 = sphi 0, %s52
      %s55 = sphi 0, %s54
      %s69 = sphi 0, %s55
      %s73 = sphi 0, %s73
      %s75 = sphi 0, %s73
      %s76 = sphi 0, %s75
      %s90 = sphi 0, %s76
      %s94 = sphi 0, %s94
      %s96 = sphi 0, %s94
      %s97 = sphi 0, %s96
      %s111 = sphi 0, %s97
      %s115 = sphi 0, %s115
      %s117 = sphi 0, %s115
      %s118 = sphi 0, %s117
      %s132 = sphi 0, %s118
      %s136 = sphi 0, %s136
      %s138 = sphi 0, %s136
      %s139 = sphi 0, %s138
      %s153 = sphi 0, %s139
      %s157 = sphi 0, %s157
      %s159 = sphi 0, %s157
      %s160 = sphi 0, %s159
      %s174 = sphi 0, %s160
      %s178 = sphi 0, %s178
      %s180 = sphi 0, %s178
      %s181 = sphi 0, %s180
      %s195 = sphi 0, %s181
      %s199 = sphi 0, %s199
      %s201 = sphi 0, %s199
      %s202 = sphi 0, %s201
      %s216 = sphi 0, %s202
      %s220 = sphi 0, %s220
      %s222 = sphi 0, %s220
      %s223 = sphi 0, %s222
      %s237 = sphi 0, %s223
      %s241 = sphi 0, %s241
      %s243 = sphi 0, %s241
      %s244 = sphi 0, %s243
      %s258 = sphi 0, %s244
      %s264 = sphi 0, %s266
      %s267 = sphi 0, %s264
      %s268 = sphi 0, %s267
      %s284 = sphi 0, %s268
    $region4: #{group_forward.1} parent=1 // loop_header_branch
      %21 = sbr.rel (%p19) target = $region8
    $region5: #{group_forward.1} parent=1 // loop_body
      %s23 = ssub.s32 %s18, 1
      %s24 = ssub.s32 %s18, 2
      %s25 = sadd.s32 %s18, 1
      %s26 = ssub.s32 %s18, %s25
      %p27 = scmp.eq.s32.totalorder %s26, 0
      %s29 = sadd.s32 %s28, 1
      %s30 = scalar_select %p27, %s28, %s29
      %p33 = pneg %p27
      %p34 = scmp.eq.s32.totalorder %s18, 1
      %p35 = por %p33, %p34
      %p36 = scmp.ne.s32.totalorder %s28, %s31
      %p37 = scmp.eq.s32.totalorder %s18, 0
      %p38 = por %p36, %p37
      %p39 = scmp.ne.s32.totalorder %s28, %s31
      %p40 = scmp.eq.s32.totalorder %s23, 1
      %p41 = por %p39, %p40
      %p42 = scmp.ne.s32.totalorder %s31, %s32
      %p43 = scmp.eq.s32.totalorder %s23, 0
      %p44 = por %p42, %p43
      %p45 = scmp.ne.s32.totalorder %s31, %s32
      %p46 = scmp.eq.s32.totalorder %s24, 1
      %p47 = por %p45, %p46
      %p49 = scmp.ne.s32.totalorder %s32, %s48
      %p50 = scmp.eq.s32.totalorder %s24, 0
      %p51 = por %p49, %p50
      %s53 = sadd.s32 %s52, 1
      %p56 = scmp.eq.s32.totalorder %s18, 1
      %p57 = scmp.ne.s32.totalorder %s52, %s54
      %p58 = scmp.eq.s32.totalorder %s18, 0
      %p59 = por %p57, %p58
      %p60 = scmp.ne.s32.totalorder %s52, %s54
      %p61 = scmp.eq.s32.totalorder %s23, 1
      %p62 = por %p60, %p61
      %p63 = scmp.ne.s32.totalorder %s54, %s55
      %p64 = scmp.eq.s32.totalorder %s23, 0
      %p65 = por %p63, %p64
      %p66 = scmp.ne.s32.totalorder %s54, %s55
      %p67 = scmp.eq.s32.totalorder %s24, 1
      %p68 = por %p66, %p67
      %p70 = scmp.ne.s32.totalorder %s55, %s69
      %p71 = scmp.eq.s32.totalorder %s24, 0
      %p72 = por %p70, %p71
      %s74 = sadd.s32 %s73, 1
      %p77 = scmp.eq.s32.totalorder %s18, 1
      %p78 = scmp.ne.s32.totalorder %s73, %s75
      %p79 = scmp.eq.s32.totalorder %s18, 0
      %p80 = por %p78, %p79
      %p81 = scmp.ne.s32.totalorder %s73, %s75
      %p82 = scmp.eq.s32.totalorder %s23, 1
      %p83 = por %p81, %p82
      %p84 = scmp.ne.s32.totalorder %s75, %s76
      %p85 = scmp.eq.s32.totalorder %s23, 0
      %p86 = por %p84, %p85
      %p87 = scmp.ne.s32.totalorder %s75, %s76
      %p88 = scmp.eq.s32.totalorder %s24, 1
      %p89 = por %p87, %p88
      %p91 = scmp.ne.s32.totalorder %s76, %s90
      %p92 = scmp.eq.s32.totalorder %s24, 0
      %p93 = por %p91, %p92
      %s95 = sadd.s32 %s94, 1
      %p98 = scmp.eq.s32.totalorder %s18, 1
      %p99 = scmp.ne.s32.totalorder %s94, %s96
      %p100 = scmp.eq.s32.totalorder %s18, 0
      %p101 = por %p99, %p100
      %p102 = scmp.ne.s32.totalorder %s94, %s96
      %p103 = scmp.eq.s32.totalorder %s23, 1
      %p104 = por %p102, %p103
      %p105 = scmp.ne.s32.totalorder %s96, %s97
      %p106 = scmp.eq.s32.totalorder %s23, 0
      %p107 = por %p105, %p106
      %p108 = scmp.ne.s32.totalorder %s96, %s97
      %p109 = scmp.eq.s32.totalorder %s24, 1
      %p110 = por %p108, %p109
      %p112 = scmp.ne.s32.totalorder %s97, %s111
      %p113 = scmp.eq.s32.totalorder %s24, 0
      %p114 = por %p112, %p113
      %s116 = sadd.s32 %s115, 1
      %p119 = scmp.eq.s32.totalorder %s18, 1
      %p120 = scmp.ne.s32.totalorder %s115, %s117
      %p121 = scmp.eq.s32.totalorder %s18, 0
      %p122 = por %p120, %p121
      %p123 = scmp.ne.s32.totalorder %s115, %s117
      %p124 = scmp.eq.s32.totalorder %s23, 1
      %p125 = por %p123, %p124
      %p126 = scmp.ne.s32.totalorder %s117, %s118
      %p127 = scmp.eq.s32.totalorder %s23, 0
      %p128 = por %p126, %p127
      %p129 = scmp.ne.s32.totalorder %s117, %s118
      %p130 = scmp.eq.s32.totalorder %s24, 1
      %p131 = por %p129, %p130
      %p133 = scmp.ne.s32.totalorder %s118, %s132
      %p134 = scmp.eq.s32.totalorder %s24, 0
      %p135 = por %p133, %p134
      %s137 = sadd.s32 %s136, 1
      %p140 = scmp.eq.s32.totalorder %s18, 1
      %p141 = scmp.ne.s32.totalorder %s136, %s138
      %p142 = scmp.eq.s32.totalorder %s18, 0
      %p143 = por %p141, %p142
      %p144 = scmp.ne.s32.totalorder %s136, %s138
      %p145 = scmp.eq.s32.totalorder %s23, 1
      %p146 = por %p144, %p145
      %p147 = scmp.ne.s32.totalorder %s138, %s139
      %p148 = scmp.eq.s32.totalorder %s23, 0
      %p149 = por %p147, %p148
      %p150 = scmp.ne.s32.totalorder %s138, %s139
      %p151 = scmp.eq.s32.totalorder %s24, 1
      %p152 = por %p150, %p151
      %p154 = scmp.ne.s32.totalorder %s139, %s153
      %p155 = scmp.eq.s32.totalorder %s24, 0
      %p156 = por %p154, %p155
      %s158 = sadd.s32 %s157, 1
      %p161 = scmp.eq.s32.totalorder %s18, 1
      %p162 = scmp.ne.s32.totalorder %s157, %s159
      %p163 = scmp.eq.s32.totalorder %s18, 0
      %p164 = por %p162, %p163
      %p165 = scmp.ne.s32.totalorder %s157, %s159
      %p166 = scmp.eq.s32.totalorder %s23, 1
      %p167 = por %p165, %p166
      %p168 = scmp.ne.s32.totalorder %s159, %s160
      %p169 = scmp.eq.s32.totalorder %s23, 0
      %p170 = por %p168, %p169
      %p171 = scmp.ne.s32.totalorder %s159, %s160
      %p172 = scmp.eq.s32.totalorder %s24, 1
      %p173 = por %p171, %p172
      %p175 = scmp.ne.s32.totalorder %s160, %s174
      %p176 = scmp.eq.s32.totalorder %s24, 0
      %p177 = por %p175, %p176
      %s179 = sadd.s32 %s178, 1
      %p182 = scmp.eq.s32.totalorder %s18, 1
      %p183 = scmp.ne.s32.totalorder %s178, %s180
      %p184 = scmp.eq.s32.totalorder %s18, 0
      %p185 = por %p183, %p184
      %p186 = scmp.ne.s32.totalorder %s178, %s180
      %p187 = scmp.eq.s32.totalorder %s23, 1
      %p188 = por %p186, %p187
      %p189 = scmp.ne.s32.totalorder %s180, %s181
      %p190 = scmp.eq.s32.totalorder %s23, 0
      %p191 = por %p189, %p190
      %p192 = scmp.ne.s32.totalorder %s180, %s181
      %p193 = scmp.eq.s32.totalorder %s24, 1
      %p194 = por %p192, %p193
      %p196 = scmp.ne.s32.totalorder %s181, %s195
      %p197 = scmp.eq.s32.totalorder %s24, 0
      %p198 = por %p196, %p197
      %s200 = sadd.s32 %s199, 1
      %p203 = scmp.eq.s32.totalorder %s18, 1
      %p204 = scmp.ne.s32.totalorder %s199, %s201
      %p205 = scmp.eq.s32.totalorder %s18, 0
      %p206 = por %p204, %p205
      %p207 = scmp.ne.s32.totalorder %s199, %s201
      %p208 = scmp.eq.s32.totalorder %s23, 1
      %p209 = por %p207, %p208
      %p210 = scmp.ne.s32.totalorder %s201, %s202
      %p211 = scmp.eq.s32.totalorder %s23, 0
      %p212 = por %p210, %p211
      %p213 = scmp.ne.s32.totalorder %s201, %s202
      %p214 = scmp.eq.s32.totalorder %s24, 1
      %p215 = por %p213, %p214
      %p217 = scmp.ne.s32.totalorder %s202, %s216
      %p218 = scmp.eq.s32.totalorder %s24, 0
      %p219 = por %p217, %p218
      %s221 = sadd.s32 %s220, 1
      %p224 = scmp.eq.s32.totalorder %s18, 1
      %p225 = scmp.ne.s32.totalorder %s220, %s222
      %p226 = scmp.eq.s32.totalorder %s18, 0
      %p227 = por %p225, %p226
      %p228 = scmp.ne.s32.totalorder %s220, %s222
      %p229 = scmp.eq.s32.totalorder %s23, 1
      %p230 = por %p228, %p229
      %p231 = scmp.ne.s32.totalorder %s222, %s223
      %p232 = scmp.eq.s32.totalorder %s23, 0
      %p233 = por %p231, %p232
      %p234 = scmp.ne.s32.totalorder %s222, %s223
      %p235 = scmp.eq.s32.totalorder %s24, 1
      %p236 = por %p234, %p235
      %p238 = scmp.ne.s32.totalorder %s223, %s237
      %p239 = scmp.eq.s32.totalorder %s24, 0
      %p240 = por %p238, %p239
      %s242 = sadd.s32 %s241, 1
      %p245 = scmp.eq.s32.totalorder %s18, 1
      %p246 = scmp.ne.s32.totalorder %s241, %s243
      %p247 = scmp.eq.s32.totalorder %s18, 0
      %p248 = por %p246, %p247
      %p249 = scmp.ne.s32.totalorder %s241, %s243
      %p250 = scmp.eq.s32.totalorder %s23, 1
      %p251 = por %p249, %p250
      %p252 = scmp.ne.s32.totalorder %s243, %s244
      %p253 = scmp.eq.s32.totalorder %s23, 0
      %p254 = por %p252, %p253
      %p255 = scmp.ne.s32.totalorder %s243, %s244
      %p256 = scmp.eq.s32.totalorder %s24, 1
      %p257 = por %p255, %p256
      %p259 = scmp.ne.s32.totalorder %s244, %s258
      %p260 = scmp.eq.s32.totalorder %s24, 0
      %p261 = por %p259, %p260
      %s262 = ssub.s32 %s18, %s25
      %p263 = scmp.eq.s32.totalorder %s262, 0
      %s265 = sadd.s32 %s264, 1
      %s266 = scalar_select %p263, %s264, %s265
      %p269 = pneg %p263
      %p270 = scmp.eq.s32.totalorder %s18, 1
      %p271 = por %p269, %p270
      %p272 = scmp.ne.s32.totalorder %s264, %s267
      %p273 = scmp.eq.s32.totalorder %s18, 0
      %p274 = por %p272, %p273
      %p275 = scmp.ne.s32.totalorder %s264, %s267
      %p276 = scmp.eq.s32.totalorder %s23, 1
      %p277 = por %p275, %p276
      %p278 = scmp.ne.s32.totalorder %s267, %s268
      %p279 = scmp.eq.s32.totalorder %s23, 0
      %p280 = por %p278, %p279
      %p281 = scmp.ne.s32.totalorder %s267, %s268
      %p282 = scmp.eq.s32.totalorder %s24, 1
      %p283 = por %p281, %p282
      %p285 = scmp.ne.s32.totalorder %s268, %s284
      %p286 = scmp.eq.s32.totalorder %s24, 0
      %p287 = por %p285, %p286
      %p288 = scmp.le.s32.totalorder 1, %s18
      %p289 = scmp.lt.s32.totalorder %s18, 3
      %p290 = pnand %p288, %p289
      %p291 = pneg %p290
      // Predicated region
      $region9: #{group_forward.1} parent=5 // pred_check
        _
      $region10: #{group_forward.1} parent=5 // pred_check_branch
        %293 = sbr.rel (%p290) target = $region12
      $region11: #{group_forward.1} parent=5 // pred_region
        %s294 = ssub.s32 %s18, 1
        // Predicated region
        $region13: #{group_forward.1} parent=11 // pred_check
          %p295 = pneg %p65
        $region14: #{group_forward.1} parent=11 // pred_check_branch
          %297 = sbr.rel (%p295) target = $region16
        $region15: #{group_forward.1} parent=11 // pred_region
          _
        $region16: #{group_forward.1} parent=11 // pred_fallthru
          _
        // Predicated region
        $region17: #{group_forward.1} parent=11 // pred_check
          %p298 = pneg %p86
        $region18: #{group_forward.1} parent=11 // pred_check_branch
          %300 = sbr.rel (%p298) target = $region20
        $region19: #{group_forward.1} parent=11 // pred_region
          _
        $region20: #{group_forward.1} parent=11 // pred_fallthru
          _
        // Predicated region
        $region21: #{group_forward.1} parent=11 // pred_check
          %p301 = pneg %p107
        $region22: #{group_forward.1} parent=11 // pred_check_branch
          %303 = sbr.rel (%p301) target = $region24
        $region23: #{group_forward.1} parent=11 // pred_region
          _
        $region24: #{group_forward.1} parent=11 // pred_fallthru
          _
        // Predicated region
        $region25: #{group_forward.1} parent=11 // pred_check
          %p304 = pneg %p128
        $region26: #{group_forward.1} parent=11 // pred_check_branch
          %306 = sbr.rel (%p304) target = $region28
        $region27: #{group_forward.1} parent=11 // pred_region
          _
        $region28: #{group_forward.1} parent=11 // pred_fallthru
          _
        // Predicated region
        $region29: #{group_forward.1} parent=11 // pred_check
          %p307 = pneg %p149
        $region30: #{group_forward.1} parent=11 // pred_check_branch
          %309 = sbr.rel (%p307) target = $region32
        $region31: #{group_forward.1} parent=11 // pred_region
          _
        $region32: #{group_forward.1} parent=11 // pred_fallthru
          _
        // Predicated region
        $region33: #{group_forward.1} parent=11 // pred_check
          %p310 = pneg %p170
        $region34: #{group_forward.1} parent=11 // pred_check_branch
          %312 = sbr.rel (%p310) target = $region36
        $region35: #{group_forward.1} parent=11 // pred_region
          _
        $region36: #{group_forward.1} parent=11 // pred_fallthru
          _
        // Predicated region
        $region37: #{group_forward.1} parent=11 // pred_check
          %p313 = pneg %p191
        $region38: #{group_forward.1} parent=11 // pred_check_branch
          %315 = sbr.rel (%p313) target = $region40
        $region39: #{group_forward.1} parent=11 // pred_region
          _
        $region40: #{group_forward.1} parent=11 // pred_fallthru
          _
        // Predicated region
        $region41: #{group_forward.1} parent=11 // pred_check
          %p316 = pneg %p212
        $region42: #{group_forward.1} parent=11 // pred_check_branch
          %318 = sbr.rel (%p316) target = $region44
        $region43: #{group_forward.1} parent=11 // pred_region
          _
        $region44: #{group_forward.1} parent=11 // pred_fallthru
          _
        // Predicated region
        $region45: #{group_forward.1} parent=11 // pred_check
          %p319 = pneg %p233
        $region46: #{group_forward.1} parent=11 // pred_check_branch
          %321 = sbr.rel (%p319) target = $region48
        $region47: #{group_forward.1} parent=11 // pred_region
          _
        $region48: #{group_forward.1} parent=11 // pred_fallthru
          _
        // Predicated region
        $region49: #{group_forward.1} parent=11 // pred_check
          %p322 = pneg %p254
        $region50: #{group_forward.1} parent=11 // pred_check_branch
          %324 = sbr.rel (%p322) target = $region52
        $region51: #{group_forward.1} parent=11 // pred_region
          %s326 = ssub.s32 32, 32
          %327 = vsyncadd [#allocation3], %s326
          %s329 = sshll.u32 %s10, 4
          %s330 = int_to_ptr.vmem [resolvable:$true] %s329
          %332 = dma.vmem_to_smem %s330, 32, [#allocation2], [#allocation3]
        $region52: #{group_forward.1} parent=11 // pred_fallthru
          _
      $region12: #{group_forward.1} parent=5 // pred_fallthru
        _
      %p333 = scmp.lt.s32.totalorder %s18, 2
      // Predicated region
      $region53: #{group_forward.1} parent=5 // pred_check
        %p334 = pneg %p333
      $region54: #{group_forward.1} parent=5 // pred_check_branch
        %336 = sbr.rel (%p334) target = $region56
      $region55: #{group_forward.1} parent=5 // pred_region
        // Predicated region
        $region57: #{group_forward.1} parent=55 // pred_check
          %p337 = pneg %p38
        $region58: #{group_forward.1} parent=55 // pred_check_branch
          %339 = sbr.rel (%p337) target = $region60
        $region59: #{group_forward.1} parent=55 // pred_region
          %p340 = scmp.lt.s32.totalorder %s18, 1
          %s341 = scalar_select %p340, %s18, 1
          %s342 = smul.addr %s341, 2
          %s343 = smul.addr %s342, 4
          %s344 = scalar_lea.vmem %s0, %s343
        $region60: #{group_forward.1} parent=55 // pred_fallthru
          _
      $region56: #{group_forward.1} parent=5 // pred_fallthru
        _
      %p345 = scmp.le.s32.totalorder 1, %s18
      %p346 = scmp.lt.s32.totalorder %s18, 3
      %p347 = pnand %p345, %p346
      %p348 = pneg %p347
      // Predicated region
      $region61: #{group_forward.1} parent=5 // pred_check
        _
      $region62: #{group_forward.1} parent=5 // pred_check_branch
        %350 = sbr.rel (%p347) target = $region64
      $region63: #{group_forward.1} parent=5 // pred_region
        %s351 = ssub.s32 %s18, 1
        // Predicated region
        $region65: #{group_forward.1} parent=63 // pred_check
          %p352 = pneg %p254
        $region66: #{group_forward.1} parent=63 // pred_check_branch
          %354 = sbr.rel (%p352) target = $region68
        $region67: #{group_forward.1} parent=63 // pred_region
          %355 = dma.done [#allocation3], 32
        $region68: #{group_forward.1} parent=63 // pred_fallthru
          _
        %356 = sfence
        %p357 = scmp.lt.s32.totalorder %s23, 1
        %s358 = scalar_select %p357, %s23, 1
        %s359 = smul.addr %s358, 2
        %s360 = smul.addr %s359, 4
        %s361 = scalar_lea.vmem %s0, %s360
        %p362 = pneg %p44
        %p363 = pneg %p41
        %p364 = pneg %p65
        %p365 = pneg %p62
        %p366 = pneg %p86
        %p367 = pneg %p83
        %p368 = pneg %p107
        %p369 = pneg %p104
        %p370 = pneg %p128
        %p371 = pneg %p125
        %p372 = pneg %p149
        %p373 = pneg %p146
        %p374 = pneg %p170
        %p375 = pneg %p167
        %p376 = pneg %p191
        %p377 = pneg %p188
        %p378 = pneg %p212
        %p379 = pneg %p209
        %p380 = pneg %p233
        %p381 = pneg %p230
        %p382 = pneg %p254
        %p383 = pneg %p251
        %p384 = pneg %p280
        %p385 = pneg %p277
        %p386 = scmp.lt.s32.totalorder %s23, 1
        %s387 = scalar_select %p386, %s23, 1
        %s388 = smul.addr %s387, 4
        %s389 = smul.addr %s388, 4
        %s390 = scalar_lea.vmem %s11, %s389
        %p391 = scmp.lt.s32.totalorder %s23, 1
        %s392 = scalar_select %p391, %s23, 1
        %s393 = smul.addr %s392, 2
        %s394 = smul.addr %s393, 4
        %s395 = scalar_lea.vmem %s0, %s394
        %p396 = scmp.lt.s32.totalorder %s23, 1
        %s397 = scalar_select %p396, %s23, 1
        %s398 = smul.addr %s397, 4
        %s399 = smul.addr %s398, 4
        %s400 = scalar_lea.vmem %s11, %s399
        %v401 = vld [vmem:[%s395] sm:$0xff]
        %v402 = vld [vmem:[%s1] sm:$0x3]
        %v403 = vld [vmem:[%s1 + $0x2] sm:$0x3]
        %v404 = vld [vmem:[%s1 + $0x4] sm:$0x3]
        %v405 = vld [vmem:[%s1 + $0x6] sm:$0x3]
        %v406 = vld [vmem:[%s1 + $0xa] sm:$0x3]
        %v407 = vld [vmem:[%s1 + $0xc] sm:$0x3]
        %v408 = vld [vmem:[%s1 + $0xe] sm:$0x3]
        %v409 = vld [vmem:[%s1 + $0x10] sm:$0x3]
        %v411 = vcombine.high %v401, %v401
        %413 = vrot.lane.b32.xlu0 %v401, 17
        %v414 = vpop.permute.xlu0 %413
        %415 = vrot.lane.b32.xlu0 %v411, 17
        %v416 = vpop.permute.xlu0 %415
        %v417 = vlaneseq
        %v418 = vand.u32 %v417, 127
        %vm419 = vcmp.lt.s32.totalorder %v418, 17
        %v420 = vsel %vm419, %v414, %v416
        %v421 = vsel %vm419, %v416, %v414
        %v423 = vlaneseq
        %v424 = vshrl.u32 %v423, 7
        %v425 = vsub.s32 0, %v424
        %v426 = vrot.slane %v402, %v425
        %v427 = vlaneseq
        %v428 = vshrl.u32 %v427, 7
        %v429 = vsub.s32 1, %v428
        %v430 = vrot.slane %v402, %v429
        %v433 = vmul.f32 %v421, %v426
        %v434 = vmul.f32 %v420, %v430
        %v435 = vld [vmem:[%s2] sm:$0xf]
        %436 = vrot.lane.b32.xlu0 %v401, 16
        %v437 = vpop.permute.xlu0 %436
        %438 = vrot.lane.b32.xlu0 %v411, 16
        %v439 = vpop.permute.xlu0 %438
        %vm440 = vcmp.lt.s32.totalorder %v418, 16
        %v441 = vsel %vm440, %v437, %v439
        %v442 = vsel %vm440, %v439, %v437
        %v444 = vlaneseq
        %v445 = vshrl.u32 %v444, 7
        %v446 = vsub.s32 0, %v445
        %v447 = vrot.slane %v403, %v446
        %v448 = vlaneseq
        %v449 = vshrl.u32 %v448, 7
        %v450 = vsub.s32 1, %v449
        %v451 = vrot.slane %v403, %v450
        %v454 = vmul.f32 %v442, %v447
        %v455 = vmul.f32 %v441, %v451
        %s456 = scalar_lea.vmem %s2, 4
        %v457 = vld [vmem:[%s456] sm:$0xf]
        %vm458 = vcmask 31744
        %v460 = vsel %vm458, %v457, 0
        %vm462 = vcmask 1043456
        %v464 = vsel %vm462, %v454, 0
        %v467 = vsel %vm462, %v455, 0
        %469 = vmatprep.subr.mxu0 %v467
        %470 = vmatpush1.msra.mxu0 %v464
        %471 = vmatprep.subr.mxu0 0.0
        %472 = vmatpush1.msra.mxu0 0.0
        %473 = vmatprep.subr.mxu0 0.0
        %474 = vmatpush1.msra.mxu0 0.0
        %475 = vmatprep.subr.mxu0 0.0
        %476 = vmatpush1.msra.mxu0 0.0
        %477 = vmatprep.subr.mxu0 0.0
        %478 = vmatpush1.msra.mxu0 0.0
        %479 = vmatprep.subr.mxu0 0.0
        %480 = vmatpush1.msra.mxu0 0.0
        %481 = vmatprep.subr.mxu0 0.0
        %482 = vmatpush1.msra.mxu0 0.0
        %483 = vmatprep.subr.mxu0 0.0
        %484 = vmatpush1.msra.mxu0 0.0
        %485 = vmatprep.subr.mxu0 0.0
        %486 = vmatpush1.msra.mxu0 0.0
        %487 = vmatprep.subr.mxu0 0.0
        %488 = vmatpush1.msra.mxu0 0.0
        %489 = vmatprep.subr.mxu0 0.0
        %490 = vmatpush1.msra.mxu0 0.0
        %491 = vmatprep.subr.mxu0 0.0
        %492 = vmatpush1.msra.mxu0 0.0
        %493 = vmatprep.subr.mxu0 0.0
        %494 = vmatpush1.msra.mxu0 0.0
        %495 = vmatprep.subr.mxu0 0.0
        %496 = vmatpush1.msra.mxu0 0.0
        %497 = vmatprep.subr.mxu0 0.0
        %498 = vmatpush1.msra.mxu0 0.0
        %499 = vmatprep.subr.mxu0 0.0
        %500 = vmatpush1.msra.mxu0 0.0
        %501 = vmatprep.subr.mxu0 0.0
        %502 = vmatpush1.msra.mxu0 0.0
        %503 = vmatprep.subr.mxu0 0.0
        %504 = vmatpush1.msra.mxu0 0.0
        %505 = vmatprep.subr.mxu0 0.0
        %506 = vmatpush1.msra.mxu0 0.0
        %507 = vmatprep.subr.mxu0 0.0
        %508 = vmatpush1.msra.mxu0 0.0
        %509 = vmatprep.subr.mxu0 0.0
        %510 = vmatpush1.msra.mxu0 0.0
        %511 = vmatprep.subr.mxu0 0.0
        %512 = vmatpush1.msra.mxu0 0.0
        %513 = vmatprep.subr.mxu0 0.0
        %514 = vmatpush1.msra.mxu0 0.0
        %515 = vmatprep.subr.mxu0 0.0
        %516 = vmatpush1.msra.mxu0 0.0
        %517 = vmatprep.subr.mxu0 0.0
        %518 = vmatpush1.msra.mxu0 0.0
        %519 = vmatprep.subr.mxu0 0.0
        %520 = vmatpush1.msra.mxu0 0.0
        %521 = vmatprep.subr.mxu0 0.0
        %522 = vmatpush1.msra.mxu0 0.0
        %523 = vmatprep.subr.mxu0 0.0
        %524 = vmatpush1.msra.mxu0 0.0
        %525 = vmatprep.subr.mxu0 0.0
        %526 = vmatpush1.msra.mxu0 0.0
        %527 = vmatprep.subr.mxu0 0.0
        %528 = vmatpush1.msra.mxu0 0.0
        %529 = vmatprep.subr.mxu0 0.0
        %530 = vmatpush1.msra.mxu0 0.0
        %531 = vmatprep.subr.mxu0 0.0
        %532 = vmatpush1.msra.mxu0 0.0
        %533 = vmatprep.mubr.f32.mxu0 0.0
        %534 = vmatmul.mubr.f32.gmra.mrb[0].mxu0 %v460
        %v535 = vpop.f32.mrb[0].mxu0
        %v536 = vadd.f32 0.0, %v535
        %v537 = vpop.f32.mrb[0].mxu0
        %v538 = vadd.f32 0.0, %v537
        %539 = vdwg.mxu0
        %v541 = vsel %vm458, %v435, 0
        %v544 = vsel %vm462, %v433, 0
        %v547 = vsel %vm462, %v434, 0
        %549 = vmatprep.subr.mxu0 %v547
        %550 = vmatpush1.msra.mxu0 %v544
        %551 = vmatprep.subr.mxu0 0.0
        %552 = vmatpush1.msra.mxu0 0.0
        %553 = vmatprep.subr.mxu0 0.0
        %554 = vmatpush1.msra.mxu0 0.0
        %555 = vmatprep.subr.mxu0 0.0
        %556 = vmatpush1.msra.mxu0 0.0
        %557 = vmatprep.subr.mxu0 0.0
        %558 = vmatpush1.msra.mxu0 0.0
        %559 = vmatprep.subr.mxu0 0.0
        %560 = vmatpush1.msra.mxu0 0.0
        %561 = vmatprep.subr.mxu0 0.0
        %562 = vmatpush1.msra.mxu0 0.0
        %563 = vmatprep.subr.mxu0 0.0
        %564 = vmatpush1.msra.mxu0 0.0
        %565 = vmatprep.subr.mxu0 0.0
        %566 = vmatpush1.msra.mxu0 0.0
        %567 = vmatprep.subr.mxu0 0.0
        %568 = vmatpush1.msra.mxu0 0.0
        %569 = vmatprep.subr.mxu0 0.0
        %570 = vmatpush1.msra.mxu0 0.0
        %571 = vmatprep.subr.mxu0 0.0
        %572 = vmatpush1.msra.mxu0 0.0
        %573 = vmatprep.subr.mxu0 0.0
        %574 = vmatpush1.msra.mxu0 0.0
        %575 = vmatprep.subr.mxu0 0.0
        %576 = vmatpush1.msra.mxu0 0.0
        %577 = vmatprep.subr.mxu0 0.0
        %578 = vmatpush1.msra.mxu0 0.0
        %579 = vmatprep.subr.mxu0 0.0
        %580 = vmatpush1.msra.mxu0 0.0
        %581 = vmatprep.subr.mxu0 0.0
        %582 = vmatpush1.msra.mxu0 0.0
        %583 = vmatprep.subr.mxu0 0.0
        %584 = vmatpush1.msra.mxu0 0.0
        %585 = vmatprep.subr.mxu0 0.0
        %586 = vmatpush1.msra.mxu0 0.0
        %587 = vmatprep.subr.mxu0 0.0
        %588 = vmatpush1.msra.mxu0 0.0
        %589 = vmatprep.subr.mxu0 0.0
        %590 = vmatpush1.msra.mxu0 0.0
        %591 = vmatprep.subr.mxu0 0.0
        %592 = vmatpush1.msra.mxu0 0.0
        %593 = vmatprep.subr.mxu0 0.0
        %594 = vmatpush1.msra.mxu0 0.0
        %595 = vmatprep.subr.mxu0 0.0
        %596 = vmatpush1.msra.mxu0 0.0
        %597 = vmatprep.subr.mxu0 0.0
        %598 = vmatpush1.msra.mxu0 0.0
        %599 = vmatprep.subr.mxu0 0.0
        %600 = vmatpush1.msra.mxu0 0.0
        %601 = vmatprep.subr.mxu0 0.0
        %602 = vmatpush1.msra.mxu0 0.0
        %603 = vmatprep.subr.mxu0 0.0
        %604 = vmatpush1.msra.mxu0 0.0
        %605 = vmatprep.subr.mxu0 0.0
        %606 = vmatpush1.msra.mxu0 0.0
        %607 = vmatprep.subr.mxu0 0.0
        %608 = vmatpush1.msra.mxu0 0.0
        %609 = vmatprep.subr.mxu0 0.0
        %610 = vmatpush1.msra.mxu0 0.0
        %611 = vmatprep.subr.mxu0 0.0
        %612 = vmatpush1.msra.mxu0 0.0
        %613 = vmatprep.mubr.f32.mxu0 0.0
        %614 = vmatmul.mubr.f32.gmra.mrb[0].mxu0 %v541
        %v615 = vpop.f32.mrb[0].mxu0
        %v616 = vadd.f32 %v536, %v615
        %v617 = vpop.f32.mrb[0].mxu0
        %v618 = vadd.f32 %v538, %v617
        %619 = vdwg.mxu0
        %620 = vrot.lane.b32.xlu0 %v401, 15
        %v621 = vpop.permute.xlu0 %620
        %622 = vrot.lane.b32.xlu0 %v411, 15
        %v623 = vpop.permute.xlu0 %622
        %vm624 = vcmp.lt.s32.totalorder %v418, 15
        %v625 = vsel %vm624, %v621, %v623
        %v626 = vsel %vm624, %v623, %v621
        %v628 = vlaneseq
        %v629 = vshrl.u32 %v628, 7
        %v630 = vsub.s32 0, %v629
        %v631 = vrot.slane %v404, %v630
        %v632 = vlaneseq
        %v633 = vshrl.u32 %v632, 7
        %v634 = vsub.s32 1, %v633
        %v635 = vrot.slane %v404, %v634
        %v638 = vmul.f32 %v626, %v631
        %v639 = vmul.f32 %v625, %v635
        %s640 = scalar_lea.vmem %s2, 8
        %v641 = vld [vmem:[%s640] sm:$0xf]
        %v643 = vsel %vm458, %v641, 0
        %v646 = vsel %vm462, %v638, 0
        %v649 = vsel %vm462, %v639, 0
        %651 = vmatprep.subr.mxu0 %v649
        %652 = vmatpush1.msra.mxu0 %v646
        %653 = vmatprep.subr.mxu0 0.0
        %654 = vmatpush1.msra.mxu0 0.0
        %655 = vmatprep.subr.mxu0 0.0
        %656 = vmatpush1.msra.mxu0 0.0
        %657 = vmatprep.subr.mxu0 0.0
        %658 = vmatpush1.msra.mxu0 0.0
        %659 = vmatprep.subr.mxu0 0.0
        %660 = vmatpush1.msra.mxu0 0.0
        %661 = vmatprep.subr.mxu0 0.0
        %662 = vmatpush1.msra.mxu0 0.0
        %663 = vmatprep.subr.mxu0 0.0
        %664 = vmatpush1.msra.mxu0 0.0
        %665 = vmatprep.subr.mxu0 0.0
        %666 = vmatpush1.msra.mxu0 0.0
        %667 = vmatprep.subr.mxu0 0.0
        %668 = vmatpush1.msra.mxu0 0.0
        %669 = vmatprep.subr.mxu0 0.0
        %670 = vmatpush1.msra.mxu0 0.0
        %671 = vmatprep.subr.mxu0 0.0
        %672 = vmatpush1.msra.mxu0 0.0
        %673 = vmatprep.subr.mxu0 0.0
        %674 = vmatpush1.msra.mxu0 0.0
        %675 = vmatprep.subr.mxu0 0.0
        %676 = vmatpush1.msra.mxu0 0.0
        %677 = vmatprep.subr.mxu0 0.0
        %678 = vmatpush1.msra.mxu0 0.0
        %679 = vmatprep.subr.mxu0 0.0
        %680 = vmatpush1.msra.mxu0 0.0
        %681 = vmatprep.subr.mxu0 0.0
        %682 = vmatpush1.msra.mxu0 0.0
        %683 = vmatprep.subr.mxu0 0.0
        %684 = vmatpush1.msra.mxu0 0.0
        %685 = vmatprep.subr.mxu0 0.0
        %686 = vmatpush1.msra.mxu0 0.0
        %687 = vmatprep.subr.mxu0 0.0
        %688 = vmatpush1.msra.mxu0 0.0
        %689 = vmatprep.subr.mxu0 0.0
        %690 = vmatpush1.msra.mxu0 0.0
        %691 = vmatprep.subr.mxu0 0.0
        %692 = vmatpush1.msra.mxu0 0.0
        %693 = vmatprep.subr.mxu0 0.0
        %694 = vmatpush1.msra.mxu0 0.0
        %695 = vmatprep.subr.mxu0 0.0
        %696 = vmatpush1.msra.mxu0 0.0
        %697 = vmatprep.subr.mxu0 0.0
        %698 = vmatpush1.msra.mxu0 0.0
        %699 = vmatprep.subr.mxu0 0.0
        %700 = vmatpush1.msra.mxu0 0.0
        %701 = vmatprep.subr.mxu0 0.0
        %702 = vmatpush1.msra.mxu0 0.0
        %703 = vmatprep.subr.mxu0 0.0
        %704 = vmatpush1.msra.mxu0 0.0
        %705 = vmatprep.subr.mxu0 0.0
        %706 = vmatpush1.msra.mxu0 0.0
        %707 = vmatprep.subr.mxu0 0.0
        %708 = vmatpush1.msra.mxu0 0.0
        %709 = vmatprep.subr.mxu0 0.0
        %710 = vmatpush1.msra.mxu0 0.0
        %711 = vmatprep.subr.mxu0 0.0
        %712 = vmatpush1.msra.mxu0 0.0
        %713 = vmatprep.subr.mxu0 0.0
        %714 = vmatpush1.msra.mxu0 0.0
        %715 = vmatprep.mubr.f32.mxu0 0.0
        %716 = vmatmul.mubr.f32.gmra.mrb[0].mxu0 %v643
        %v717 = vpop.f32.mrb[0].mxu0
        %v718 = vadd.f32 0.0, %v717
        %v719 = vpop.f32.mrb[0].mxu0
        %v720 = vadd.f32 0.0, %v719
        %721 = vdwg.mxu0
        %v722 = vadd.f32 %v616, %v718
        %v723 = vadd.f32 %v618, %v720
        %724 = vrot.lane.b32.xlu0 %v401, 1
        %v725 = vpop.permute.xlu0 %724
        %726 = vrot.lane.b32.xlu0 %v411, 1
        %v727 = vpop.permute.xlu0 %726
        %vm728 = vcmp.lt.s32.totalorder %v418, 1
        %v729 = vsel %vm728, %v725, %v727
        %v730 = vsel %vm728, %v727, %v725
        %v732 = vlaneseq
        %v733 = vshrl.u32 %v732, 7
        %v734 = vsub.s32 0, %v733
        %v735 = vrot.slane %v405, %v734
        %v736 = vlaneseq
        %v737 = vshrl.u32 %v736, 7
        %v738 = vsub.s32 1, %v737
        %v739 = vrot.slane %v405, %v738
        %v742 = vmul.f32 %v730, %v735
        %v743 = vmul.f32 %v729, %v739
        %s744 = scalar_lea.vmem %s2, 12
        %v745 = vld [vmem:[%s744] sm:$0xf]
        %v747 = vsel %vm458, %v745, 0
        %v750 = vsel %vm462, %v742, 0
        %v753 = vsel %vm462, %v743, 0
        %755 = vmatprep.subr.mxu0 %v753
        %756 = vmatpush1.msra.mxu0 %v750
        %757 = vmatprep.subr.mxu0 0.0
        %758 = vmatpush1.msra.mxu0 0.0
        %759 = vmatprep.subr.mxu0 0.0
        %760 = vmatpush1.msra.mxu0 0.0
        %761 = vmatprep.subr.mxu0 0.0
        %762 = vmatpush1.msra.mxu0 0.0
        %763 = vmatprep.subr.mxu0 0.0
        %764 = vmatpush1.msra.mxu0 0.0
        %765 = vmatprep.subr.mxu0 0.0
        %766 = vmatpush1.msra.mxu0 0.0
        %767 = vmatprep.subr.mxu0 0.0
        %768 = vmatpush1.msra.mxu0 0.0
        %769 = vmatprep.subr.mxu0 0.0
        %770 = vmatpush1.msra.mxu0 0.0
        %771 = vmatprep.subr.mxu0 0.0
        %772 = vmatpush1.msra.mxu0 0.0
        %773 = vmatprep.subr.mxu0 0.0
        %774 = vmatpush1.msra.mxu0 0.0
        %775 = vmatprep.subr.mxu0 0.0
        %776 = vmatpush1.msra.mxu0 0.0
        %777 = vmatprep.subr.mxu0 0.0
        %778 = vmatpush1.msra.mxu0 0.0
        %779 = vmatprep.subr.mxu0 0.0
        %780 = vmatpush1.msra.mxu0 0.0
        %781 = vmatprep.subr.mxu0 0.0
        %782 = vmatpush1.msra.mxu0 0.0
        %783 = vmatprep.subr.mxu0 0.0
        %784 = vmatpush1.msra.mxu0 0.0
        %785 = vmatprep.subr.mxu0 0.0
        %786 = vmatpush1.msra.mxu0 0.0
        %787 = vmatprep.subr.mxu0 0.0
        %788 = vmatpush1.msra.mxu0 0.0
        %789 = vmatprep.subr.mxu0 0.0
        %790 = vmatpush1.msra.mxu0 0.0
        %791 = vmatprep.subr.mxu0 0.0
        %792 = vmatpush1.msra.mxu0 0.0
        %793 = vmatprep.subr.mxu0 0.0
        %794 = vmatpush1.msra.mxu0 0.0
        %795 = vmatprep.subr.mxu0 0.0
        %796 = vmatpush1.msra.mxu0 0.0
        %797 = vmatprep.subr.mxu0 0.0
        %798 = vmatpush1.msra.mxu0 0.0
        %799 = vmatprep.subr.mxu0 0.0
        %800 = vmatpush1.msra.mxu0 0.0
        %801 = vmatprep.subr.mxu0 0.0
        %802 = vmatpush1.msra.mxu0 0.0
        %803 = vmatprep.subr.mxu0 0.0
        %804 = vmatpush1.msra.mxu0 0.0
        %805 = vmatprep.subr.mxu0 0.0
        %806 = vmatpush1.msra.mxu0 0.0
        %807 = vmatprep.subr.mxu0 0.0
        %808 = vmatpush1.msra.mxu0 0.0
        %809 = vmatprep.subr.mxu0 0.0
        %810 = vmatpush1.msra.mxu0 0.0
        %811 = vmatprep.subr.mxu0 0.0
        %812 = vmatpush1.msra.mxu0 0.0
        %813 = vmatprep.subr.mxu0 0.0
        %814 = vmatpush1.msra.mxu0 0.0
        %815 = vmatprep.subr.mxu0 0.0
        %816 = vmatpush1.msra.mxu0 0.0
        %817 = vmatprep.subr.mxu0 0.0
        %818 = vmatpush1.msra.mxu0 0.0
        %819 = vmatprep.mubr.f32.mxu0 0.0
        %820 = vmatmul.mubr.f32.gmra.mrb[0].mxu0 %v747
        %v821 = vpop.f32.mrb[0].mxu0
        %v822 = vadd.f32 0.0, %v821
        %v823 = vpop.f32.mrb[0].mxu0
        %v824 = vadd.f32 0.0, %v823
        %825 = vdwg.mxu0
        %v826 = vadd.f32 %v722, %v822
        %v827 = vadd.f32 %v723, %v824
        %s828 = scalar_lea.vmem %s2, 16
        %v829 = vld [vmem:[%s828] sm:$0xf]
        %v831 = vsel %vm458, %v829, 0
        %v833 = vsel %vm462, %v401, 0
        %v835 = vsel %vm462, %v411, 0
        %837 = vmatprep.subr.mxu0 %v835
        %838 = vmatpush1.msra.mxu0 %v833
        %839 = vmatprep.subr.mxu0 0.0
        %840 = vmatpush1.msra.mxu0 0.0
        %841 = vmatprep.subr.mxu0 0.0
        %842 = vmatpush1.msra.mxu0 0.0
        %843 = vmatprep.subr.mxu0 0.0
        %844 = vmatpush1.msra.mxu0 0.0
        %845 = vmatprep.subr.mxu0 0.0
        %846 = vmatpush1.msra.mxu0 0.0
        %847 = vmatprep.subr.mxu0 0.0
        %848 = vmatpush1.msra.mxu0 0.0
        %849 = vmatprep.subr.mxu0 0.0
        %850 = vmatpush1.msra.mxu0 0.0
        %851 = vmatprep.subr.mxu0 0.0
        %852 = vmatpush1.msra.mxu0 0.0
        %853 = vmatprep.subr.mxu0 0.0
        %854 = vmatpush1.msra.mxu0 0.0
        %855 = vmatprep.subr.mxu0 0.0
        %856 = vmatpush1.msra.mxu0 0.0
        %857 = vmatprep.subr.mxu0 0.0
        %858 = vmatpush1.msra.mxu0 0.0
        %859 = vmatprep.subr.mxu0 0.0
        %860 = vmatpush1.msra.mxu0 0.0
        %861 = vmatprep.subr.mxu0 0.0
        %862 = vmatpush1.msra.mxu0 0.0
        %863 = vmatprep.subr.mxu0 0.0
        %864 = vmatpush1.msra.mxu0 0.0
        %865 = vmatprep.subr.mxu0 0.0
        %866 = vmatpush1.msra.mxu0 0.0
        %867 = vmatprep.subr.mxu0 0.0
        %868 = vmatpush1.msra.mxu0 0.0
        %869 = vmatprep.subr.mxu0 0.0
        %870 = vmatpush1.msra.mxu0 0.0
        %871 = vmatprep.subr.mxu0 0.0
        %872 = vmatpush1.msra.mxu0 0.0
        %873 = vmatprep.subr.mxu0 0.0
        %874 = vmatpush1.msra.mxu0 0.0
        %875 = vmatprep.subr.mxu0 0.0
        %876 = vmatpush1.msra.mxu0 0.0
        %877 = vmatprep.subr.mxu0 0.0
        %878 = vmatpush1.msra.mxu0 0.0
        %879 = vmatprep.subr.mxu0 0.0
        %880 = vmatpush1.msra.mxu0 0.0
        %881 = vmatprep.subr.mxu0 0.0
        %882 = vmatpush1.msra.mxu0 0.0
        %883 = vmatprep.subr.mxu0 0.0
        %884 = vmatpush1.msra.mxu0 0.0
        %885 = vmatprep.subr.mxu0 0.0
        %886 = vmatpush1.msra.mxu0 0.0
        %887 = vmatprep.subr.mxu0 0.0
        %888 = vmatpush1.msra.mxu0 0.0
        %889 = vmatprep.subr.mxu0 0.0
        %890 = vmatpush1.msra.mxu0 0.0
        %891 = vmatprep.subr.mxu0 0.0
        %892 = vmatpush1.msra.mxu0 0.0
        %893 = vmatprep.subr.mxu0 0.0
        %894 = vmatpush1.msra.mxu0 0.0
        %895 = vmatprep.subr.mxu0 0.0
        %896 = vmatpush1.msra.mxu0 0.0
        %897 = vmatprep.subr.mxu0 0.0
        %898 = vmatpush1.msra.mxu0 0.0
        %899 = vmatprep.subr.mxu0 0.0
        %900 = vmatpush1.msra.mxu0 0.0
        %901 = vmatprep.mubr.f32.mxu0 0.0
        %902 = vmatmul.mubr.f32.gmra.mrb[0].mxu0 %v831
        %v903 = vpop.f32.mrb[0].mxu0
        %v904 = vadd.f32 0.0, %v903
        %v905 = vpop.f32.mrb[0].mxu0
        %v906 = vadd.f32 0.0, %v905
        %907 = vdwg.mxu0
        %v908 = vadd.f32 %v826, %v904
        %v909 = vadd.f32 %v827, %v906
        %910 = vrot.lane.b32.xlu0 %v401, 127
        %v911 = vpop.permute.xlu0 %910
        %912 = vrot.lane.b32.xlu0 %v411, 127
        %v913 = vpop.permute.xlu0 %912
        %vm914 = vcmp.lt.s32.totalorder %v418, 127
        %v915 = vsel %vm914, %v911, %v913
        %v916 = vsel %vm914, %v913, %v911
        %v918 = vlaneseq
        %v919 = vshrl.u32 %v918, 7
        %v920 = vsub.s32 0, %v919
        %v921 = vrot.slane %v406, %v920
        %v922 = vlaneseq
        %v923 = vshrl.u32 %v922, 7
        %v924 = vsub.s32 1, %v923
        %v925 = vrot.slane %v406, %v924
        %v928 = vmul.f32 %v915, %v921
        %v929 = vmul.f32 %v916, %v925
        %s930 = scalar_lea.vmem %s2, 20
        %v931 = vld [vmem:[%s930] sm:$0xf]
        %v933 = vsel %vm458, %v931, 0
        %v936 = vsel %vm462, %v928, 0
        %v939 = vsel %vm462, %v929, 0
        %941 = vmatprep.subr.mxu0 %v939
        %942 = vmatpush1.msra.mxu0 %v936
        %943 = vmatprep.subr.mxu0 0.0
        %944 = vmatpush1.msra.mxu0 0.0
        %945 = vmatprep.subr.mxu0 0.0
        %946 = vmatpush1.msra.mxu0 0.0
        %947 = vmatprep.subr.mxu0 0.0
        %948 = vmatpush1.msra.mxu0 0.0
        %949 = vmatprep.subr.mxu0 0.0
        %950 = vmatpush1.msra.mxu0 0.0
        %951 = vmatprep.subr.mxu0 0.0
        %952 = vmatpush1.msra.mxu0 0.0
        %953 = vmatprep.subr.mxu0 0.0
        %954 = vmatpush1.msra.mxu0 0.0
        %955 = vmatprep.subr.mxu0 0.0
        %956 = vmatpush1.msra.mxu0 0.0
        %957 = vmatprep.subr.mxu0 0.0
        %958 = vmatpush1.msra.mxu0 0.0
        %959 = vmatprep.subr.mxu0 0.0
        %960 = vmatpush1.msra.mxu0 0.0
        %961 = vmatprep.subr.mxu0 0.0
        %962 = vmatpush1.msra.mxu0 0.0
        %963 = vmatprep.subr.mxu0 0.0
        %964 = vmatpush1.msra.mxu0 0.0
        %965 = vmatprep.subr.mxu0 0.0
        %966 = vmatpush1.msra.mxu0 0.0
        %967 = vmatprep.subr.mxu0 0.0
        %968 = vmatpush1.msra.mxu0 0.0
        %969 = vmatprep.subr.mxu0 0.0
        %970 = vmatpush1.msra.mxu0 0.0
        %971 = vmatprep.subr.mxu0 0.0
        %972 = vmatpush1.msra.mxu0 0.0
        %973 = vmatprep.subr.mxu0 0.0
        %974 = vmatpush1.msra.mxu0 0.0
        %975 = vmatprep.subr.mxu0 0.0
        %976 = vmatpush1.msra.mxu0 0.0
        %977 = vmatprep.subr.mxu0 0.0
        %978 = vmatpush1.msra.mxu0 0.0
        %979 = vmatprep.subr.mxu0 0.0
        %980 = vmatpush1.msra.mxu0 0.0
        %981 = vmatprep.subr.mxu0 0.0
        %982 = vmatpush1.msra.mxu0 0.0
        %983 = vmatprep.subr.mxu0 0.0
        %984 = vmatpush1.msra.mxu0 0.0
        %985 = vmatprep.subr.mxu0 0.0
        %986 = vmatpush1.msra.mxu0 0.0
        %987 = vmatprep.subr.mxu0 0.0
        %988 = vmatpush1.msra.mxu0 0.0
        %989 = vmatprep.subr.mxu0 0.0
        %990 = vmatpush1.msra.mxu0 0.0
        %991 = vmatprep.subr.mxu0 0.0
        %992 = vmatpush1.msra.mxu0 0.0
        %993 = vmatprep.subr.mxu0 0.0
        %994 = vmatpush1.msra.mxu0 0.0
        %995 = vmatprep.subr.mxu0 0.0
        %996 = vmatpush1.msra.mxu0 0.0
        %997 = vmatprep.subr.mxu0 0.0
        %998 = vmatpush1.msra.mxu0 0.0
        %999 = vmatprep.subr.mxu0 0.0
        %1000 = vmatpush1.msra.mxu0 0.0
        %1001 = vmatprep.subr.mxu0 0.0
        %1002 = vmatpush1.msra.mxu0 0.0
        %1003 = vmatprep.subr.mxu0 0.0
        %1004 = vmatpush1.msra.mxu0 0.0
        %1005 = vmatprep.mubr.f32.mxu0 0.0
        %1006 = vmatmul.mubr.f32.gmra.mrb[0].mxu0 %v933
        %v1007 = vpop.f32.mrb[0].mxu0
        %v1008 = vadd.f32 0.0, %v1007
        %v1009 = vpop.f32.mrb[0].mxu0
        %v1010 = vadd.f32 0.0, %v1009
        %1011 = vdwg.mxu0
        %v1012 = vadd.f32 %v908, %v1008
        %v1013 = vadd.f32 %v909, %v1010
        %1014 = vrot.lane.b32.xlu0 %v401, 113
        %v1015 = vpop.permute.xlu0 %1014
        %1016 = vrot.lane.b32.xlu0 %v411, 113
        %v1017 = vpop.permute.xlu0 %1016
        %vm1018 = vcmp.lt.s32.totalorder %v418, 113
        %v1019 = vsel %vm1018, %v1015, %v1017
        %v1020 = vsel %vm1018, %v1017, %v1015
        %v1022 = vlaneseq
        %v1023 = vshrl.u32 %v1022, 7
        %v1024 = vsub.s32 0, %v1023
        %v1025 = vrot.slane %v407, %v1024
        %v1026 = vlaneseq
        %v1027 = vshrl.u32 %v1026, 7
        %v1028 = vsub.s32 1, %v1027
        %v1029 = vrot.slane %v407, %v1028
        %v1032 = vmul.f32 %v1019, %v1025
        %v1033 = vmul.f32 %v1020, %v1029
        %s1034 = scalar_lea.vmem %s2, 24
        %v1035 = vld [vmem:[%s1034] sm:$0xf]
        %v1037 = vsel %vm458, %v1035, 0
        %v1040 = vsel %vm462, %v1032, 0
        %v1043 = vsel %vm462, %v1033, 0
        %1045 = vmatprep.subr.mxu0 %v1043
        %1046 = vmatpush1.msra.mxu0 %v1040
        %1047 = vmatprep.subr.mxu0 0.0
        %1048 = vmatpush1.msra.mxu0 0.0
        %1049 = vmatprep.subr.mxu0 0.0
        %1050 = vmatpush1.msra.mxu0 0.0
        %1051 = vmatprep.subr.mxu0 0.0
        %1052 = vmatpush1.msra.mxu0 0.0
        %1053 = vmatprep.subr.mxu0 0.0
        %1054 = vmatpush1.msra.mxu0 0.0
        %1055 = vmatprep.subr.mxu0 0.0
        %1056 = vmatpush1.msra.mxu0 0.0
        %1057 = vmatprep.subr.mxu0 0.0
        %1058 = vmatpush1.msra.mxu0 0.0
        %1059 = vmatprep.subr.mxu0 0.0
        %1060 = vmatpush1.msra.mxu0 0.0
        %1061 = vmatprep.subr.mxu0 0.0
        %1062 = vmatpush1.msra.mxu0 0.0
        %1063 = vmatprep.subr.mxu0 0.0
        %1064 = vmatpush1.msra.mxu0 0.0
        %1065 = vmatprep.subr.mxu0 0.0
        %1066 = vmatpush1.msra.mxu0 0.0
        %1067 = vmatprep.subr.mxu0 0.0
        %1068 = vmatpush1.msra.mxu0 0.0
        %1069 = vmatprep.subr.mxu0 0.0
        %1070 = vmatpush1.msra.mxu0 0.0
        %1071 = vmatprep.subr.mxu0 0.0
        %1072 = vmatpush1.msra.mxu0 0.0
        %1073 = vmatprep.subr.mxu0 0.0
        %1074 = vmatpush1.msra.mxu0 0.0
        %1075 = vmatprep.subr.mxu0 0.0
        %1076 = vmatpush1.msra.mxu0 0.0
        %1077 = vmatprep.subr.mxu0 0.0
        %1078 = vmatpush1.msra.mxu0 0.0
        %1079 = vmatprep.subr.mxu0 0.0
        %1080 = vmatpush1.msra.mxu0 0.0
        %1081 = vmatprep.subr.mxu0 0.0
        %1082 = vmatpush1.msra.mxu0 0.0
        %1083 = vmatprep.subr.mxu0 0.0
        %1084 = vmatpush1.msra.mxu0 0.0
        %1085 = vmatprep.subr.mxu0 0.0
        %1086 = vmatpush1.msra.mxu0 0.0
        %1087 = vmatprep.subr.mxu0 0.0
        %1088 = vmatpush1.msra.mxu0 0.0
        %1089 = vmatprep.subr.mxu0 0.0
        %1090 = vmatpush1.msra.mxu0 0.0
        %1091 = vmatprep.subr.mxu0 0.0
        %1092 = vmatpush1.msra.mxu0 0.0
        %1093 = vmatprep.subr.mxu0 0.0
        %1094 = vmatpush1.msra.mxu0 0.0
        %1095 = vmatprep.subr.mxu0 0.0
        %1096 = vmatpush1.msra.mxu0 0.0
        %1097 = vmatprep.subr.mxu0 0.0
        %1098 = vmatpush1.msra.mxu0 0.0
        %1099 = vmatprep.subr.mxu0 0.0
        %1100 = vmatpush1.msra.mxu0 0.0
        %1101 = vmatprep.subr.mxu0 0.0
        %1102 = vmatpush1.msra.mxu0 0.0
        %1103 = vmatprep.subr.mxu0 0.0
        %1104 = vmatpush1.msra.mxu0 0.0
        %1105 = vmatprep.subr.mxu0 0.0
        %1106 = vmatpush1.msra.mxu0 0.0
        %1107 = vmatprep.subr.mxu0 0.0
        %1108 = vmatpush1.msra.mxu0 0.0
        %1109 = vmatprep.mubr.f32.mxu0 0.0
        %1110 = vmatmul.mubr.f32.gmra.mrb[0].mxu0 %v1037
        %v1111 = vpop.f32.mrb[0].mxu0
        %v1112 = vadd.f32 0.0, %v1111
        %v1113 = vpop.f32.mrb[0].mxu0
        %v1114 = vadd.f32 0.0, %v1113
        %1115 = vdwg.mxu0
        %v1116 = vadd.f32 %v1012, %v1112
        %v1117 = vadd.f32 %v1013, %v1114
        %1118 = vrot.lane.b32.xlu0 %v401, 112
        %v1119 = vpop.permute.xlu0 %1118
        %1120 = vrot.lane.b32.xlu0 %v411, 112
        %v1121 = vpop.permute.xlu0 %1120
        %vm1122 = vcmp.lt.s32.totalorder %v418, 112
        %v1123 = vsel %vm1122, %v1119, %v1121
        %v1124 = vsel %vm1122, %v1121, %v1119
        %v1126 = vlaneseq
        %v1127 = vshrl.u32 %v1126, 7
        %v1128 = vsub.s32 0, %v1127
        %v1129 = vrot.slane %v408, %v1128
        %v1130 = vlaneseq
        %v1131 = vshrl.u32 %v1130, 7
        %v1132 = vsub.s32 1, %v1131
        %v1133 = vrot.slane %v408, %v1132
        %v1136 = vmul.f32 %v1123, %v1129
        %v1137 = vmul.f32 %v1124, %v1133
        %s1138 = scalar_lea.vmem %s2, 28
        %v1139 = vld [vmem:[%s1138] sm:$0xf]
        %v1141 = vsel %vm458, %v1139, 0
        %v1144 = vsel %vm462, %v1136, 0
        %v1147 = vsel %vm462, %v1137, 0
        %1149 = vmatprep.subr.mxu0 %v1147
        %1150 = vmatpush1.msra.mxu0 %v1144
        %1151 = vmatprep.subr.mxu0 0.0
        %1152 = vmatpush1.msra.mxu0 0.0
        %1153 = vmatprep.subr.mxu0 0.0
        %1154 = vmatpush1.msra.mxu0 0.0
        %1155 = vmatprep.subr.mxu0 0.0
        %1156 = vmatpush1.msra.mxu0 0.0
        %1157 = vmatprep.subr.mxu0 0.0
        %1158 = vmatpush1.msra.mxu0 0.0
        %1159 = vmatprep.subr.mxu0 0.0
        %1160 = vmatpush1.msra.mxu0 0.0
        %1161 = vmatprep.subr.mxu0 0.0
        %1162 = vmatpush1.msra.mxu0 0.0
        %1163 = vmatprep.subr.mxu0 0.0
        %1164 = vmatpush1.msra.mxu0 0.0
        %1165 = vmatprep.subr.mxu0 0.0
        %1166 = vmatpush1.msra.mxu0 0.0
        %1167 = vmatprep.subr.mxu0 0.0
        %1168 = vmatpush1.msra.mxu0 0.0
        %1169 = vmatprep.subr.mxu0 0.0
        %1170 = vmatpush1.msra.mxu0 0.0
        %1171 = vmatprep.subr.mxu0 0.0
        %1172 = vmatpush1.msra.mxu0 0.0
        %1173 = vmatprep.subr.mxu0 0.0
        %1174 = vmatpush1.msra.mxu0 0.0
        %1175 = vmatprep.subr.mxu0 0.0
        %1176 = vmatpush1.msra.mxu0 0.0
        %1177 = vmatprep.subr.mxu0 0.0
        %1178 = vmatpush1.msra.mxu0 0.0
        %1179 = vmatprep.subr.mxu0 0.0
        %1180 = vmatpush1.msra.mxu0 0.0
        %1181 = vmatprep.subr.mxu0 0.0
        %1182 = vmatpush1.msra.mxu0 0.0
        %1183 = vmatprep.subr.mxu0 0.0
        %1184 = vmatpush1.msra.mxu0 0.0
        %1185 = vmatprep.subr.mxu0 0.0
        %1186 = vmatpush1.msra.mxu0 0.0
        %1187 = vmatprep.subr.mxu0 0.0
        %1188 = vmatpush1.msra.mxu0 0.0
        %1189 = vmatprep.subr.mxu0 0.0
        %1190 = vmatpush1.msra.mxu0 0.0
        %1191 = vmatprep.subr.mxu0 0.0
        %1192 = vmatpush1.msra.mxu0 0.0
        %1193 = vmatprep.subr.mxu0 0.0
        %1194 = vmatpush1.msra.mxu0 0.0
        %1195 = vmatprep.subr.mxu0 0.0
        %1196 = vmatpush1.msra.mxu0 0.0
        %1197 = vmatprep.subr.mxu0 0.0
        %1198 = vmatpush1.msra.mxu0 0.0
        %1199 = vmatprep.subr.mxu0 0.0
        %1200 = vmatpush1.msra.mxu0 0.0
        %1201 = vmatprep.subr.mxu0 0.0
        %1202 = vmatpush1.msra.mxu0 0.0
        %1203 = vmatprep.subr.mxu0 0.0
        %1204 = vmatpush1.msra.mxu0 0.0
        %1205 = vmatprep.subr.mxu0 0.0
        %1206 = vmatpush1.msra.mxu0 0.0
        %1207 = vmatprep.subr.mxu0 0.0
        %1208 = vmatpush1.msra.mxu0 0.0
        %1209 = vmatprep.subr.mxu0 0.0
        %1210 = vmatpush1.msra.mxu0 0.0
        %1211 = vmatprep.subr.mxu0 0.0
        %1212 = vmatpush1.msra.mxu0 0.0
        %1213 = vmatprep.mubr.f32.mxu0 0.0
        %1214 = vmatmul.mubr.f32.gmra.mrb[0].mxu0 %v1141
        %v1215 = vpop.f32.mrb[0].mxu0
        %v1216 = vadd.f32 0.0, %v1215
        %v1217 = vpop.f32.mrb[0].mxu0
        %v1218 = vadd.f32 0.0, %v1217
        %1219 = vdwg.mxu0
        %v1220 = vadd.f32 %v1116, %v1216
        %v1221 = vadd.f32 %v1117, %v1218
        %1222 = vrot.lane.b32.xlu0 %v401, 111
        %v1223 = vpop.permute.xlu0 %1222
        %1224 = vrot.lane.b32.xlu0 %v411, 111
        %v1225 = vpop.permute.xlu0 %1224
        %vm1226 = vcmp.lt.s32.totalorder %v418, 111
        %v1227 = vsel %vm1226, %v1223, %v1225
        %v1228 = vsel %vm1226, %v1225, %v1223
        %v1230 = vlaneseq
        %v1231 = vshrl.u32 %v1230, 7
        %v1232 = vsub.s32 0, %v1231
        %v1233 = vrot.slane %v409, %v1232
        %v1234 = vlaneseq
        %v1235 = vshrl.u32 %v1234, 7
        %v1236 = vsub.s32 1, %v1235
        %v1237 = vrot.slane %v409, %v1236
        %v1240 = vmul.f32 %v1227, %v1233
        %v1241 = vmul.f32 %v1228, %v1237
        %s1242 = scalar_lea.vmem %s2, 32
        %v1243 = vld [vmem:[%s1242] sm:$0xf]
        %v1245 = vsel %vm458, %v1243, 0
        %v1248 = vsel %vm462, %v1240, 0
        %v1251 = vsel %vm462, %v1241, 0
        %1253 = vmatprep.subr.mxu0 %v1251
        %1254 = vmatpush1.msra.mxu0 %v1248
        %1255 = vmatprep.subr.mxu0 0.0
        %1256 = vmatpush1.msra.mxu0 0.0
        %1257 = vmatprep.subr.mxu0 0.0
        %1258 = vmatpush1.msra.mxu0 0.0
        %1259 = vmatprep.subr.mxu0 0.0
        %1260 = vmatpush1.msra.mxu0 0.0
        %1261 = vmatprep.subr.mxu0 0.0
        %1262 = vmatpush1.msra.mxu0 0.0
        %1263 = vmatprep.subr.mxu0 0.0
        %1264 = vmatpush1.msra.mxu0 0.0
        %1265 = vmatprep.subr.mxu0 0.0
        %1266 = vmatpush1.msra.mxu0 0.0
        %1267 = vmatprep.subr.mxu0 0.0
        %1268 = vmatpush1.msra.mxu0 0.0
        %1269 = vmatprep.subr.mxu0 0.0
        %1270 = vmatpush1.msra.mxu0 0.0
        %1271 = vmatprep.subr.mxu0 0.0
        %1272 = vmatpush1.msra.mxu0 0.0
        %1273 = vmatprep.subr.mxu0 0.0
        %1274 = vmatpush1.msra.mxu0 0.0
        %1275 = vmatprep.subr.mxu0 0.0
        %1276 = vmatpush1.msra.mxu0 0.0
        %1277 = vmatprep.subr.mxu0 0.0
        %1278 = vmatpush1.msra.mxu0 0.0
        %1279 = vmatprep.subr.mxu0 0.0
        %1280 = vmatpush1.msra.mxu0 0.0
        %1281 = vmatprep.subr.mxu0 0.0
        %1282 = vmatpush1.msra.mxu0 0.0
        %1283 = vmatprep.subr.mxu0 0.0
        %1284 = vmatpush1.msra.mxu0 0.0
        %1285 = vmatprep.subr.mxu0 0.0
        %1286 = vmatpush1.msra.mxu0 0.0
        %1287 = vmatprep.subr.mxu0 0.0
        %1288 = vmatpush1.msra.mxu0 0.0
        %1289 = vmatprep.subr.mxu0 0.0
        %1290 = vmatpush1.msra.mxu0 0.0
        %1291 = vmatprep.subr.mxu0 0.0
        %1292 = vmatpush1.msra.mxu0 0.0
        %1293 = vmatprep.subr.mxu0 0.0
        %1294 = vmatpush1.msra.mxu0 0.0
        %1295 = vmatprep.subr.mxu0 0.0
        %1296 = vmatpush1.msra.mxu0 0.0
        %1297 = vmatprep.subr.mxu0 0.0
        %1298 = vmatpush1.msra.mxu0 0.0
        %1299 = vmatprep.subr.mxu0 0.0
        %1300 = vmatpush1.msra.mxu0 0.0
        %1301 = vmatprep.subr.mxu0 0.0
        %1302 = vmatpush1.msra.mxu0 0.0
        %1303 = vmatprep.subr.mxu0 0.0
        %1304 = vmatpush1.msra.mxu0 0.0
        %1305 = vmatprep.subr.mxu0 0.0
        %1306 = vmatpush1.msra.mxu0 0.0
        %1307 = vmatprep.subr.mxu0 0.0
        %1308 = vmatpush1.msra.mxu0 0.0
        %1309 = vmatprep.subr.mxu0 0.0
        %1310 = vmatpush1.msra.mxu0 0.0
        %1311 = vmatprep.subr.mxu0 0.0
        %1312 = vmatpush1.msra.mxu0 0.0
        %1313 = vmatprep.subr.mxu0 0.0
        %1314 = vmatpush1.msra.mxu0 0.0
        %1315 = vmatprep.subr.mxu0 0.0
        %1316 = vmatpush1.msra.mxu0 0.0
        %1317 = vmatprep.mubr.f32.mxu0 0.0
        %1318 = vmatmul.mubr.f32.gmra.mrb[0].mxu0 %v1245
        %v1319 = vpop.f32.mrb[0].mxu0
        %v1320 = vadd.f32 0.0, %v1319
        %v1321 = vpop.f32.mrb[0].mxu0
        %v1322 = vadd.f32 0.0, %v1321
        %1323 = vdwg.mxu0
        %v1324 = vadd.f32 %v1220, %v1320
        %v1325 = vadd.f32 %v1221, %v1322
        %v1326 = vld [vmem:[%s3] sm:$0xf]
        %1328 = vset.pattern.permute.xlu0 0
        %1329 = vperm.xlu0 %1328, %v1326
        %v1330 = vpop.permute.xlu0 %1329
        %v1332 = vadd.f32 %v1324, %v1330
        %v1333 = vadd.f32 %v1325, %v1330
        %v1334 = vmax.f32 %v1332, 0.0
        %v1335 = vmax.f32 %v1333, 0.0
        %1336 = vrot.lane.b32.xlu0 %v1334, 17
        %v1337 = vpop.permute.xlu0 %1336
        %1338 = vrot.lane.b32.xlu0 %v1335, 17
        %v1339 = vpop.permute.xlu0 %1338
        %v1340 = vsel %vm419, %v1337, %v1339
        %v1341 = vsel %vm419, %v1339, %v1337
        %v1342 = vmul.f32 %v1341, %v426
        %v1343 = vmul.f32 %v1340, %v430
        %v1344 = vld [vmem:[%s4] sm:$0xf]
        %1345 = vrot.lane.b32.xlu0 %v1334, 16
        %v1346 = vpop.permute.xlu0 %1345
        %1347 = vrot.lane.b32.xlu0 %v1335, 16
        %v1348 = vpop.permute.xlu0 %1347
        %v1349 = vsel %vm440, %v1346, %v1348
        %v1350 = vsel %vm440, %v1348, %v1346
        %v1351 = vmul.f32 %v1350, %v447
        %v1352 = vmul.f32 %v1349, %v451
        %s1353 = scalar_lea.vmem %s4, 4
        %v1354 = vld [vmem:[%s1353] sm:$0xf]
        %v1356 = vsel %vm458, %v1354, 0
        %v1359 = vsel %vm462, %v1351, 0
        %v1362 = vsel %vm462, %v1352, 0
        %1364 = vmatprep.subr.mxu0 %v1362
        %1365 = vmatpush1.msra.mxu0 %v1359
        %1366 = vmatprep.subr.mxu0 0.0
        %1367 = vmatpush1.msra.mxu0 0.0
        %1368 = vmatprep.subr.mxu0 0.0
        %1369 = vmatpush1.msra.mxu0 0.0
        %1370 = vmatprep.subr.mxu0 0.0
        %1371 = vmatpush1.msra.mxu0 0.0
        %1372 = vmatprep.subr.mxu0 0.0
        %1373 = vmatpush1.msra.mxu0 0.0
        %1374 = vmatprep.subr.mxu0 0.0
        %1375 = vmatpush1.msra.mxu0 0.0
        %1376 = vmatprep.subr.mxu0 0.0
        %1377 = vmatpush1.msra.mxu0 0.0
        %1378 = vmatprep.subr.mxu0 0.0
        %1379 = vmatpush1.msra.mxu0 0.0
        %1380 = vmatprep.subr.mxu0 0.0
        %1381 = vmatpush1.msra.mxu0 0.0
        %1382 = vmatprep.subr.mxu0 0.0
        %1383 = vmatpush1.msra.mxu0 0.0
        %1384 = vmatprep.subr.mxu0 0.0
        %1385 = vmatpush1.msra.mxu0 0.0
        %1386 = vmatprep.subr.mxu0 0.0
        %1387 = vmatpush1.msra.mxu0 0.0
        %1388 = vmatprep.subr.mxu0 0.0
        %1389 = vmatpush1.msra.mxu0 0.0
        %1390 = vmatprep.subr.mxu0 0.0
        %1391 = vmatpush1.msra.mxu0 0.0
        %1392 = vmatprep.subr.mxu0 0.0
        %1393 = vmatpush1.msra.mxu0 0.0
        %1394 = vmatprep.subr.mxu0 0.0
        %1395 = vmatpush1.msra.mxu0 0.0
        %1396 = vmatprep.subr.mxu0 0.0
        %1397 = vmatpush1.msra.mxu0 0.0
        %1398 = vmatprep.subr.mxu0 0.0
        %1399 = vmatpush1.msra.mxu0 0.0
        %1400 = vmatprep.subr.mxu0 0.0
        %1401 = vmatpush1.msra.mxu0 0.0
        %1402 = vmatprep.subr.mxu0 0.0
        %1403 = vmatpush1.msra.mxu0 0.0
        %1404 = vmatprep.subr.mxu0 0.0
        %1405 = vmatpush1.msra.mxu0 0.0
        %1406 = vmatprep.subr.mxu0 0.0
        %1407 = vmatpush1.msra.mxu0 0.0
        %1408 = vmatprep.subr.mxu0 0.0
        %1409 = vmatpush1.msra.mxu0 0.0
        %1410 = vmatprep.subr.mxu0 0.0
        %1411 = vmatpush1.msra.mxu0 0.0
        %1412 = vmatprep.subr.mxu0 0.0
        %1413 = vmatpush1.msra.mxu0 0.0
        %1414 = vmatprep.subr.mxu0 0.0
        %1415 = vmatpush1.msra.mxu0 0.0
        %1416 = vmatprep.subr.mxu0 0.0
        %1417 = vmatpush1.msra.mxu0 0.0
        %1418 = vmatprep.subr.mxu0 0.0
        %1419 = vmatpush1.msra.mxu0 0.0
        %1420 = vmatprep.subr.mxu0 0.0
        %1421 = vmatpush1.msra.mxu0 0.0
        %1422 = vmatprep.subr.mxu0 0.0
        %1423 = vmatpush1.msra.mxu0 0.0
        %1424 = vmatprep.subr.mxu0 0.0
        %1425 = vmatpush1.msra.mxu0 0.0
        %1426 = vmatprep.subr.mxu0 0.0
        %1427 = vmatpush1.msra.mxu0 0.0
        %1428 = vmatprep.mubr.f32.mxu0 0.0
        %1429 = vmatmul.mubr.f32.gmra.mrb[0].mxu0 %v1356
        %v1430 = vpop.f32.mrb[0].mxu0
        %v1431 = vadd.f32 0.0, %v1430
        %v1432 = vpop.f32.mrb[0].mxu0
        %v1433 = vadd.f32 0.0, %v1432
        %1434 = vdwg.mxu0
        %v1436 = vsel %vm458, %v1344, 0
        %v1439 = vsel %vm462, %v1342, 0
        %v1442 = vsel %vm462, %v1343, 0
        %1444 = vmatprep.subr.mxu0 %v1442
        %1445 = vmatpush1.msra.mxu0 %v1439
        %1446 = vmatprep.subr.mxu0 0.0
        %1447 = vmatpush1.msra.mxu0 0.0
        %1448 = vmatprep.subr.mxu0 0.0
        %1449 = vmatpush1.msra.mxu0 0.0
        %1450 = vmatprep.subr.mxu0 0.0
        %1451 = vmatpush1.msra.mxu0 0.0
        %1452 = vmatprep.subr.mxu0 0.0
        %1453 = vmatpush1.msra.mxu0 0.0
        %1454 = vmatprep.subr.mxu0 0.0
        %1455 = vmatpush1.msra.mxu0 0.0
        %1456 = vmatprep.subr.mxu0 0.0
        %1457 = vmatpush1.msra.mxu0 0.0
        %1458 = vmatprep.subr.mxu0 0.0
        %1459 = vmatpush1.msra.mxu0 0.0
        %1460 = vmatprep.subr.mxu0 0.0
        %1461 = vmatpush1.msra.mxu0 0.0
        %1462 = vmatprep.subr.mxu0 0.0
        %1463 = vmatpush1.msra.mxu0 0.0
        %1464 = vmatprep.subr.mxu0 0.0
        %1465 = vmatpush1.msra.mxu0 0.0
        %1466 = vmatprep.subr.mxu0 0.0
        %1467 = vmatpush1.msra.mxu0 0.0
        %1468 = vmatprep.subr.mxu0 0.0
        %1469 = vmatpush1.msra.mxu0 0.0
        %1470 = vmatprep.subr.mxu0 0.0
        %1471 = vmatpush1.msra.mxu0 0.0
        %1472 = vmatprep.subr.mxu0 0.0
        %1473 = vmatpush1.msra.mxu0 0.0
        %1474 = vmatprep.subr.mxu0 0.0
        %1475 = vmatpush1.msra.mxu0 0.0
        %1476 = vmatprep.subr.mxu0 0.0
        %1477 = vmatpush1.msra.mxu0 0.0
        %1478 = vmatprep.subr.mxu0 0.0
        %1479 = vmatpush1.msra.mxu0 0.0
        %1480 = vmatprep.subr.mxu0 0.0
        %1481 = vmatpush1.msra.mxu0 0.0
        %1482 = vmatprep.subr.mxu0 0.0
        %1483 = vmatpush1.msra.mxu0 0.0
        %1484 = vmatprep.subr.mxu0 0.0
        %1485 = vmatpush1.msra.mxu0 0.0
        %1486 = vmatprep.subr.mxu0 0.0
        %1487 = vmatpush1.msra.mxu0 0.0
        %1488 = vmatprep.subr.mxu0 0.0
        %1489 = vmatpush1.msra.mxu0 0.0
        %1490 = vmatprep.subr.mxu0 0.0
        %1491 = vmatpush1.msra.mxu0 0.0
        %1492 = vmatprep.subr.mxu0 0.0
        %1493 = vmatpush1.msra.mxu0 0.0
        %1494 = vmatprep.subr.mxu0 0.0
        %1495 = vmatpush1.msra.mxu0 0.0
        %1496 = vmatprep.subr.mxu0 0.0
        %1497 = vmatpush1.msra.mxu0 0.0
        %1498 = vmatprep.subr.mxu0 0.0
        %1499 = vmatpush1.msra.mxu0 0.0
        %1500 = vmatprep.subr.mxu0 0.0
        %1501 = vmatpush1.msra.mxu0 0.0
        %1502 = vmatprep.subr.mxu0 0.0
        %1503 = vmatpush1.msra.mxu0 0.0
        %1504 = vmatprep.subr.mxu0 0.0
        %1505 = vmatpush1.msra.mxu0 0.0
        %1506 = vmatprep.subr.mxu0 0.0
        %1507 = vmatpush1.msra.mxu0 0.0
        %1508 = vmatprep.mubr.f32.mxu0 0.0
        %1509 = vmatmul.mubr.f32.gmra.mrb[0].mxu0 %v1436
        %v1510 = vpop.f32.mrb[0].mxu0
        %v1511 = vadd.f32 %v1431, %v1510
        %v1512 = vpop.f32.mrb[0].mxu0
        %v1513 = vadd.f32 %v1433, %v1512
        %1514 = vdwg.mxu0
        %1515 = vrot.lane.b32.xlu0 %v1334, 15
        %v1516 = vpop.permute.xlu0 %1515
        %1517 = vrot.lane.b32.xlu0 %v1335, 15
        %v1518 = vpop.permute.xlu0 %1517
        %v1519 = vsel %vm624, %v1516, %v1518
        %v1520 = vsel %vm624, %v1518, %v1516
        %v1521 = vmul.f32 %v1520, %v631
        %v1522 = vmul.f32 %v1519, %v635
        %s1523 = scalar_lea.vmem %s4, 8
        %v1524 = vld [vmem:[%s1523] sm:$0xf]
        %v1526 = vsel %vm458, %v1524, 0
        %v1529 = vsel %vm462, %v1521, 0
        %v1532 = vsel %vm462, %v1522, 0
        %1534 = vmatprep.subr.mxu0 %v1532
        %1535 = vmatpush1.msra.mxu0 %v1529
        %1536 = vmatprep.subr.mxu0 0.0
        %1537 = vmatpush1.msra.mxu0 0.0
        %1538 = vmatprep.subr.mxu0 0.0
        %1539 = vmatpush1.msra.mxu0 0.0
        %1540 = vmatprep.subr.mxu0 0.0
        %1541 = vmatpush1.msra.mxu0 0.0
        %1542 = vmatprep.subr.mxu0 0.0
        %1543 = vmatpush1.msra.mxu0 0.0
        %1544 = vmatprep.subr.mxu0 0.0
        %1545 = vmatpush1.msra.mxu0 0.0
        %1546 = vmatprep.subr.mxu0 0.0
        %1547 = vmatpush1.msra.mxu0 0.0
        %1548 = vmatprep.subr.mxu0 0.0
        %1549 = vmatpush1.msra.mxu0 0.0
        %1550 = vmatprep.subr.mxu0 0.0
        %1551 = vmatpush1.msra.mxu0 0.0
        %1552 = vmatprep.subr.mxu0 0.0
        %1553 = vmatpush1.msra.mxu0 0.0
        %1554 = vmatprep.subr.mxu0 0.0
        %1555 = vmatpush1.msra.mxu0 0.0
        %1556 = vmatprep.subr.mxu0 0.0
        %1557 = vmatpush1.msra.mxu0 0.0
        %1558 = vmatprep.subr.mxu0 0.0
        %1559 = vmatpush1.msra.mxu0 0.0
        %1560 = vmatprep.subr.mxu0 0.0
        %1561 = vmatpush1.msra.mxu0 0.0
        %1562 = vmatprep.subr.mxu0 0.0
        %1563 = vmatpush1.msra.mxu0 0.0
        %1564 = vmatprep.subr.mxu0 0.0
        %1565 = vmatpush1.msra.mxu0 0.0
        %1566 = vmatprep.subr.mxu0 0.0
        %1567 = vmatpush1.msra.mxu0 0.0
        %1568 = vmatprep.subr.mxu0 0.0
        %1569 = vmatpush1.msra.mxu0 0.0
        %1570 = vmatprep.subr.mxu0 0.0
        %1571 = vmatpush1.msra.mxu0 0.0
        %1572 = vmatprep.subr.mxu0 0.0
        %1573 = vmatpush1.msra.mxu0 0.0
        %1574 = vmatprep.subr.mxu0 0.0
        %1575 = vmatpush1.msra.mxu0 0.0
        %1576 = vmatprep.subr.mxu0 0.0
        %1577 = vmatpush1.msra.mxu0 0.0
        %1578 = vmatprep.subr.mxu0 0.0
        %1579 = vmatpush1.msra.mxu0 0.0
        %1580 = vmatprep.subr.mxu0 0.0
        %1581 = vmatpush1.msra.mxu0 0.0
        %1582 = vmatprep.subr.mxu0 0.0
        %1583 = vmatpush1.msra.mxu0 0.0
        %1584 = vmatprep.subr.mxu0 0.0
        %1585 = vmatpush1.msra.mxu0 0.0
        %1586 = vmatprep.subr.mxu0 0.0
        %1587 = vmatpush1.msra.mxu0 0.0
        %1588 = vmatprep.subr.mxu0 0.0
        %1589 = vmatpush1.msra.mxu0 0.0
        %1590 = vmatprep.subr.mxu0 0.0
        %1591 = vmatpush1.msra.mxu0 0.0
        %1592 = vmatprep.subr.mxu0 0.0
        %1593 = vmatpush1.msra.mxu0 0.0
        %1594 = vmatprep.subr.mxu0 0.0
        %1595 = vmatpush1.msra.mxu0 0.0
        %1596 = vmatprep.subr.mxu0 0.0
        %1597 = vmatpush1.msra.mxu0 0.0
        %1598 = vmatprep.mubr.f32.mxu0 0.0
        %1599 = vmatmul.mubr.f32.gmra.mrb[0].mxu0 %v1526
        %v1600 = vpop.f32.mrb[0].mxu0
        %v1601 = vadd.f32 0.0, %v1600
        %v1602 = vpop.f32.mrb[0].mxu0
        %v1603 = vadd.f32 0.0, %v1602
        %1604 = vdwg.mxu0
        %v1605 = vadd.f32 %v1511, %v1601
        %v1606 = vadd.f32 %v1513, %v1603
        %1607 = vrot.lane.b32.xlu0 %v1334, 1
        %v1608 = vpop.permute.xlu0 %1607
        %1609 = vrot.lane.b32.xlu0 %v1335, 1
        %v1610 = vpop.permute.xlu0 %1609
        %v1611 = vsel %vm728, %v1608, %v1610
        %v1612 = vsel %vm728, %v1610, %v1608
        %v1613 = vmul.f32 %v1612, %v735
        %v1614 = vmul.f32 %v1611, %v739
        %s1615 = scalar_lea.vmem %s4, 12
        %v1616 = vld [vmem:[%s1615] sm:$0xf]
        %v1618 = vsel %vm458, %v1616, 0
        %v1621 = vsel %vm462, %v1613, 0
        %v1624 = vsel %vm462, %v1614, 0
        %1626 = vmatprep.subr.mxu0 %v1624
        %1627 = vmatpush1.msra.mxu0 %v1621
        %1628 = vmatprep.subr.mxu0 0.0
        %1629 = vmatpush1.msra.mxu0 0.0
        %1630 = vmatprep.subr.mxu0 0.0
        %1631 = vmatpush1.msra.mxu0 0.0
        %1632 = vmatprep.subr.mxu0 0.0
        %1633 = vmatpush1.msra.mxu0 0.0
        %1634 = vmatprep.subr.mxu0 0.0
        %1635 = vmatpush1.msra.mxu0 0.0
        %1636 = vmatprep.subr.mxu0 0.0
        %1637 = vmatpush1.msra.mxu0 0.0
        %1638 = vmatprep.subr.mxu0 0.0
        %1639 = vmatpush1.msra.mxu0 0.0
        %1640 = vmatprep.subr.mxu0 0.0
        %1641 = vmatpush1.msra.mxu0 0.0
        %1642 = vmatprep.subr.mxu0 0.0
        %1643 = vmatpush1.msra.mxu0 0.0
        %1644 = vmatprep.subr.mxu0 0.0
        %1645 = vmatpush1.msra.mxu0 0.0
        %1646 = vmatprep.subr.mxu0 0.0
        %1647 = vmatpush1.msra.mxu0 0.0
        %1648 = vmatprep.subr.mxu0 0.0
        %1649 = vmatpush1.msra.mxu0 0.0
        %1650 = vmatprep.subr.mxu0 0.0
        %1651 = vmatpush1.msra.mxu0 0.0
        %1652 = vmatprep.subr.mxu0 0.0
        %1653 = vmatpush1.msra.mxu0 0.0
        %1654 = vmatprep.subr.mxu0 0.0
        %1655 = vmatpush1.msra.mxu0 0.0
        %1656 = vmatprep.subr.mxu0 0.0
        %1657 = vmatpush1.msra.mxu0 0.0
        %1658 = vmatprep.subr.mxu0 0.0
        %1659 = vmatpush1.msra.mxu0 0.0
        %1660 = vmatprep.subr.mxu0 0.0
        %1661 = vmatpush1.msra.mxu0 0.0
        %1662 = vmatprep.subr.mxu0 0.0
        %1663 = vmatpush1.msra.mxu0 0.0
        %1664 = vmatprep.subr.mxu0 0.0
        %1665 = vmatpush1.msra.mxu0 0.0
        %1666 = vmatprep.subr.mxu0 0.0
        %1667 = vmatpush1.msra.mxu0 0.0
        %1668 = vmatprep.subr.mxu0 0.0
        %1669 = vmatpush1.msra.mxu0 0.0
        %1670 = vmatprep.subr.mxu0 0.0
        %1671 = vmatpush1.msra.mxu0 0.0
        %1672 = vmatprep.subr.mxu0 0.0
        %1673 = vmatpush1.msra.mxu0 0.0
        %1674 = vmatprep.subr.mxu0 0.0
        %1675 = vmatpush1.msra.mxu0 0.0
        %1676 = vmatprep.subr.mxu0 0.0
        %1677 = vmatpush1.msra.mxu0 0.0
        %1678 = vmatprep.subr.mxu0 0.0
        %1679 = vmatpush1.msra.mxu0 0.0
        %1680 = vmatprep.subr.mxu0 0.0
        %1681 = vmatpush1.msra.mxu0 0.0
        %1682 = vmatprep.subr.mxu0 0.0
        %1683 = vmatpush1.msra.mxu0 0.0
        %1684 = vmatprep.subr.mxu0 0.0
        %1685 = vmatpush1.msra.mxu0 0.0
        %1686 = vmatprep.subr.mxu0 0.0
        %1687 = vmatpush1.msra.mxu0 0.0
        %1688 = vmatprep.subr.mxu0 0.0
        %1689 = vmatpush1.msra.mxu0 0.0
        %1690 = vmatprep.mubr.f32.mxu0 0.0
        %1691 = vmatmul.mubr.f32.gmra.mrb[0].mxu0 %v1618
        %v1692 = vpop.f32.mrb[0].mxu0
        %v1693 = vadd.f32 0.0, %v1692
        %v1694 = vpop.f32.mrb[0].mxu0
        %v1695 = vadd.f32 0.0, %v1694
        %1696 = vdwg.mxu0
        %v1697 = vadd.f32 %v1605, %v1693
        %v1698 = vadd.f32 %v1606, %v1695
        %s1699 = scalar_lea.vmem %s4, 16
        %v1700 = vld [vmem:[%s1699] sm:$0xf]
        %v1702 = vsel %vm458, %v1700, 0
        %v1705 = vsel %vm462, %v1334, 0
        %v1708 = vsel %vm462, %v1335, 0
        %1710 = vmatprep.subr.mxu0 %v1708
        %1711 = vmatpush1.msra.mxu0 %v1705
        %1712 = vmatprep.subr.mxu0 0.0
        %1713 = vmatpush1.msra.mxu0 0.0
        %1714 = vmatprep.subr.mxu0 0.0
        %1715 = vmatpush1.msra.mxu0 0.0
        %1716 = vmatprep.subr.mxu0 0.0
        %1717 = vmatpush1.msra.mxu0 0.0
        %1718 = vmatprep.subr.mxu0 0.0
        %1719 = vmatpush1.msra.mxu0 0.0
        %1720 = vmatprep.subr.mxu0 0.0
        %1721 = vmatpush1.msra.mxu0 0.0
        %1722 = vmatprep.subr.mxu0 0.0
        %1723 = vmatpush1.msra.mxu0 0.0
        %1724 = vmatprep.subr.mxu0 0.0
        %1725 = vmatpush1.msra.mxu0 0.0
        %1726 = vmatprep.subr.mxu0 0.0
        %1727 = vmatpush1.msra.mxu0 0.0
        %1728 = vmatprep.subr.mxu0 0.0
        %1729 = vmatpush1.msra.mxu0 0.0
        %1730 = vmatprep.subr.mxu0 0.0
        %1731 = vmatpush1.msra.mxu0 0.0
        %1732 = vmatprep.subr.mxu0 0.0
        %1733 = vmatpush1.msra.mxu0 0.0
        %1734 = vmatprep.subr.mxu0 0.0
        %1735 = vmatpush1.msra.mxu0 0.0
        %1736 = vmatprep.subr.mxu0 0.0
        %1737 = vmatpush1.msra.mxu0 0.0
        %1738 = vmatprep.subr.mxu0 0.0
        %1739 = vmatpush1.msra.mxu0 0.0
        %1740 = vmatprep.subr.mxu0 0.0
        %1741 = vmatpush1.msra.mxu0 0.0
        %1742 = vmatprep.subr.mxu0 0.0
        %1743 = vmatpush1.msra.mxu0 0.0
        %1744 = vmatprep.subr.mxu0 0.0
        %1745 = vmatpush1.msra.mxu0 0.0
        %1746 = vmatprep.subr.mxu0 0.0
        %1747 = vmatpush1.msra.mxu0 0.0
        %1748 = vmatprep.subr.mxu0 0.0
        %1749 = vmatpush1.msra.mxu0 0.0
        %1750 = vmatprep.subr.mxu0 0.0
        %1751 = vmatpush1.msra.mxu0 0.0
        %1752 = vmatprep.subr.mxu0 0.0
        %1753 = vmatpush1.msra.mxu0 0.0
        %1754 = vmatprep.subr.mxu0 0.0
        %1755 = vmatpush1.msra.mxu0 0.0
        %1756 = vmatprep.subr.mxu0 0.0
        %1757 = vmatpush1.msra.mxu0 0.0
        %1758 = vmatprep.subr.mxu0 0.0
        %1759 = vmatpush1.msra.mxu0 0.0
        %1760 = vmatprep.subr.mxu0 0.0
        %1761 = vmatpush1.msra.mxu0 0.0
        %1762 = vmatprep.subr.mxu0 0.0
        %1763 = vmatpush1.msra.mxu0 0.0
        %1764 = vmatprep.subr.mxu0 0.0
        %1765 = vmatpush1.msra.mxu0 0.0
        %1766 = vmatprep.subr.mxu0 0.0
        %1767 = vmatpush1.msra.mxu0 0.0
        %1768 = vmatprep.subr.mxu0 0.0
        %1769 = vmatpush1.msra.mxu0 0.0
        %1770 = vmatprep.subr.mxu0 0.0
        %1771 = vmatpush1.msra.mxu0 0.0
        %1772 = vmatprep.subr.mxu0 0.0
        %1773 = vmatpush1.msra.mxu0 0.0
        %1774 = vmatprep.mubr.f32.mxu0 0.0
        %1775 = vmatmul.mubr.f32.gmra.mrb[0].mxu0 %v1702
        %v1776 = vpop.f32.mrb[0].mxu0
        %v1777 = vadd.f32 0.0, %v1776
        %v1778 = vpop.f32.mrb[0].mxu0
        %v1779 = vadd.f32 0.0, %v1778
        %1780 = vdwg.mxu0
        %v1781 = vadd.f32 %v1697, %v1777
        %v1782 = vadd.f32 %v1698, %v1779
        %1783 = vrot.lane.b32.xlu0 %v1334, 127
        %v1784 = vpop.permute.xlu0 %1783
        %1785 = vrot.lane.b32.xlu0 %v1335, 127
        %v1786 = vpop.permute.xlu0 %1785
        %v1787 = vsel %vm914, %v1784, %v1786
        %v1788 = vsel %vm914, %v1786, %v1784
        %v1789 = vmul.f32 %v1787, %v921
        %v1790 = vmul.f32 %v1788, %v925
        %s1791 = scalar_lea.vmem %s4, 20
        %v1792 = vld [vmem:[%s1791] sm:$0xf]
        %v1794 = vsel %vm458, %v1792, 0
        %v1797 = vsel %vm462, %v1789, 0
        %v1800 = vsel %vm462, %v1790, 0
        %1802 = vmatprep.subr.mxu0 %v1800
        %1803 = vmatpush1.msra.mxu0 %v1797
        %1804 = vmatprep.subr.mxu0 0.0
        %1805 = vmatpush1.msra.mxu0 0.0
        %1806 = vmatprep.subr.mxu0 0.0
        %1807 = vmatpush1.msra.mxu0 0.0
        %1808 = vmatprep.subr.mxu0 0.0
        %1809 = vmatpush1.msra.mxu0 0.0
        %1810 = vmatprep.subr.mxu0 0.0
        %1811 = vmatpush1.msra.mxu0 0.0
        %1812 = vmatprep.subr.mxu0 0.0
        %1813 = vmatpush1.msra.mxu0 0.0
        %1814 = vmatprep.subr.mxu0 0.0
        %1815 = vmatpush1.msra.mxu0 0.0
        %1816 = vmatprep.subr.mxu0 0.0
        %1817 = vmatpush1.msra.mxu0 0.0
        %1818 = vmatprep.subr.mxu0 0.0
        %1819 = vmatpush1.msra.mxu0 0.0
        %1820 = vmatprep.subr.mxu0 0.0
        %1821 = vmatpush1.msra.mxu0 0.0
        %1822 = vmatprep.subr.mxu0 0.0
        %1823 = vmatpush1.msra.mxu0 0.0
        %1824 = vmatprep.subr.mxu0 0.0
        %1825 = vmatpush1.msra.mxu0 0.0
        %1826 = vmatprep.subr.mxu0 0.0
        %1827 = vmatpush1.msra.mxu0 0.0
        %1828 = vmatprep.subr.mxu0 0.0
        %1829 = vmatpush1.msra.mxu0 0.0
        %1830 = vmatprep.subr.mxu0 0.0
        %1831 = vmatpush1.msra.mxu0 0.0
        %1832 = vmatprep.subr.mxu0 0.0
        %1833 = vmatpush1.msra.mxu0 0.0
        %1834 = vmatprep.subr.mxu0 0.0
        %1835 = vmatpush1.msra.mxu0 0.0
        %1836 = vmatprep.subr.mxu0 0.0
        %1837 = vmatpush1.msra.mxu0 0.0
        %1838 = vmatprep.subr.mxu0 0.0
        %1839 = vmatpush1.msra.mxu0 0.0
        %1840 = vmatprep.subr.mxu0 0.0
        %1841 = vmatpush1.msra.mxu0 0.0
        %1842 = vmatprep.subr.mxu0 0.0
        %1843 = vmatpush1.msra.mxu0 0.0
        %1844 = vmatprep.subr.mxu0 0.0
        %1845 = vmatpush1.msra.mxu0 0.0
        %1846 = vmatprep.subr.mxu0 0.0
        %1847 = vmatpush1.msra.mxu0 0.0
        %1848 = vmatprep.subr.mxu0 0.0
        %1849 = vmatpush1.msra.mxu0 0.0
        %1850 = vmatprep.subr.mxu0 0.0
        %1851 = vmatpush1.msra.mxu0 0.0
        %1852 = vmatprep.subr.mxu0 0.0
        %1853 = vmatpush1.msra.mxu0 0.0
        %1854 = vmatprep.subr.mxu0 0.0
        %1855 = vmatpush1.msra.mxu0 0.0
        %1856 = vmatprep.subr.mxu0 0.0
        %1857 = vmatpush1.msra.mxu0 0.0
        %1858 = vmatprep.subr.mxu0 0.0
        %1859 = vmatpush1.msra.mxu0 0.0
        %1860 = vmatprep.subr.mxu0 0.0
        %1861 = vmatpush1.msra.mxu0 0.0
        %1862 = vmatprep.subr.mxu0 0.0
        %1863 = vmatpush1.msra.mxu0 0.0
        %1864 = vmatprep.subr.mxu0 0.0
        %1865 = vmatpush1.msra.mxu0 0.0
        %1866 = vmatprep.mubr.f32.mxu0 0.0
        %1867 = vmatmul.mubr.f32.gmra.mrb[0].mxu0 %v1794
        %v1868 = vpop.f32.mrb[0].mxu0
        %v1869 = vadd.f32 0.0, %v1868
        %v1870 = vpop.f32.mrb[0].mxu0
        %v1871 = vadd.f32 0.0, %v1870
        %1872 = vdwg.mxu0
        %v1873 = vadd.f32 %v1781, %v1869
        %v1874 = vadd.f32 %v1782, %v1871
        %1875 = vrot.lane.b32.xlu0 %v1334, 113
        %v1876 = vpop.permute.xlu0 %1875
        %1877 = vrot.lane.b32.xlu0 %v1335, 113
        %v1878 = vpop.permute.xlu0 %1877
        %v1879 = vsel %vm1018, %v1876, %v1878
        %v1880 = vsel %vm1018, %v1878, %v1876
        %v1881 = vmul.f32 %v1879, %v1025
        %v1882 = vmul.f32 %v1880, %v1029
        %s1883 = scalar_lea.vmem %s4, 24
        %v1884 = vld [vmem:[%s1883] sm:$0xf]
        %v1886 = vsel %vm458, %v1884, 0
        %v1889 = vsel %vm462, %v1881, 0
        %v1892 = vsel %vm462, %v1882, 0
        %1894 = vmatprep.subr.mxu0 %v1892
        %1895 = vmatpush1.msra.mxu0 %v1889
        %1896 = vmatprep.subr.mxu0 0.0
        %1897 = vmatpush1.msra.mxu0 0.0
        %1898 = vmatprep.subr.mxu0 0.0
        %1899 = vmatpush1.msra.mxu0 0.0
        %1900 = vmatprep.subr.mxu0 0.0
        %1901 = vmatpush1.msra.mxu0 0.0
        %1902 = vmatprep.subr.mxu0 0.0
        %1903 = vmatpush1.msra.mxu0 0.0
        %1904 = vmatprep.subr.mxu0 0.0
        %1905 = vmatpush1.msra.mxu0 0.0
        %1906 = vmatprep.subr.mxu0 0.0
        %1907 = vmatpush1.msra.mxu0 0.0
        %1908 = vmatprep.subr.mxu0 0.0
        %1909 = vmatpush1.msra.mxu0 0.0
        %1910 = vmatprep.subr.mxu0 0.0
        %1911 = vmatpush1.msra.mxu0 0.0
        %1912 = vmatprep.subr.mxu0 0.0
        %1913 = vmatpush1.msra.mxu0 0.0
        %1914 = vmatprep.subr.mxu0 0.0
        %1915 = vmatpush1.msra.mxu0 0.0
        %1916 = vmatprep.subr.mxu0 0.0
        %1917 = vmatpush1.msra.mxu0 0.0
        %1918 = vmatprep.subr.mxu0 0.0
        %1919 = vmatpush1.msra.mxu0 0.0
        %1920 = vmatprep.subr.mxu0 0.0
        %1921 = vmatpush1.msra.mxu0 0.0
        %1922 = vmatprep.subr.mxu0 0.0
        %1923 = vmatpush1.msra.mxu0 0.0
        %1924 = vmatprep.subr.mxu0 0.0
        %1925 = vmatpush1.msra.mxu0 0.0
        %1926 = vmatprep.subr.mxu0 0.0
        %1927 = vmatpush1.msra.mxu0 0.0
        %1928 = vmatprep.subr.mxu0 0.0
        %1929 = vmatpush1.msra.mxu0 0.0
        %1930 = vmatprep.subr.mxu0 0.0
        %1931 = vmatpush1.msra.mxu0 0.0
        %1932 = vmatprep.subr.mxu0 0.0
        %1933 = vmatpush1.msra.mxu0 0.0
        %1934 = vmatprep.subr.mxu0 0.0
        %1935 = vmatpush1.msra.mxu0 0.0
        %1936 = vmatprep.subr.mxu0 0.0
        %1937 = vmatpush1.msra.mxu0 0.0
        %1938 = vmatprep.subr.mxu0 0.0
        %1939 = vmatpush1.msra.mxu0 0.0
        %1940 = vmatprep.subr.mxu0 0.0
        %1941 = vmatpush1.msra.mxu0 0.0
        %1942 = vmatprep.subr.mxu0 0.0
        %1943 = vmatpush1.msra.mxu0 0.0
        %1944 = vmatprep.subr.mxu0 0.0
        %1945 = vmatpush1.msra.mxu0 0.0
        %1946 = vmatprep.subr.mxu0 0.0
        %1947 = vmatpush1.msra.mxu0 0.0
        %1948 = vmatprep.subr.mxu0 0.0
        %1949 = vmatpush1.msra.mxu0 0.0
        %1950 = vmatprep.subr.mxu0 0.0
        %1951 = vmatpush1.msra.mxu0 0.0
        %1952 = vmatprep.subr.mxu0 0.0
        %1953 = vmatpush1.msra.mxu0 0.0
        %1954 = vmatprep.subr.mxu0 0.0
        %1955 = vmatpush1.msra.mxu0 0.0
        %1956 = vmatprep.subr.mxu0 0.0
        %1957 = vmatpush1.msra.mxu0 0.0
        %1958 = vmatprep.mubr.f32.mxu0 0.0
        %1959 = vmatmul.mubr.f32.gmra.mrb[0].mxu0 %v1886
        %v1960 = vpop.f32.mrb[0].mxu0
        %v1961 = vadd.f32 0.0, %v1960
        %v1962 = vpop.f32.mrb[0].mxu0
        %v1963 = vadd.f32 0.0, %v1962
        %1964 = vdwg.mxu0
        %v1965 = vadd.f32 %v1873, %v1961
        %v1966 = vadd.f32 %v1874, %v1963
        %1967 = vrot.lane.b32.xlu0 %v1334, 112
        %v1968 = vpop.permute.xlu0 %1967
        %1969 = vrot.lane.b32.xlu0 %v1335, 112
        %v1970 = vpop.permute.xlu0 %1969
        %v1971 = vsel %vm1122, %v1968, %v1970
        %v1972 = vsel %vm1122, %v1970, %v1968
        %v1973 = vmul.f32 %v1971, %v1129
        %v1974 = vmul.f32 %v1972, %v1133
        %s1975 = scalar_lea.vmem %s4, 28
        %v1976 = vld [vmem:[%s1975] sm:$0xf]
        %v1978 = vsel %vm458, %v1976, 0
        %v1981 = vsel %vm462, %v1973, 0
        %v1984 = vsel %vm462, %v1974, 0
        %1986 = vmatprep.subr.mxu0 %v1984
        %1987 = vmatpush1.msra.mxu0 %v1981
        %1988 = vmatprep.subr.mxu0 0.0
        %1989 = vmatpush1.msra.mxu0 0.0
        %1990 = vmatprep.subr.mxu0 0.0
        %1991 = vmatpush1.msra.mxu0 0.0
        %1992 = vmatprep.subr.mxu0 0.0
        %1993 = vmatpush1.msra.mxu0 0.0
        %1994 = vmatprep.subr.mxu0 0.0
        %1995 = vmatpush1.msra.mxu0 0.0
        %1996 = vmatprep.subr.mxu0 0.0
        %1997 = vmatpush1.msra.mxu0 0.0
        %1998 = vmatprep.subr.mxu0 0.0
        %1999 = vmatpush1.msra.mxu0 0.0
        %2000 = vmatprep.subr.mxu0 0.0
        %2001 = vmatpush1.msra.mxu0 0.0
        %2002 = vmatprep.subr.mxu0 0.0
        %2003 = vmatpush1.msra.mxu0 0.0
        %2004 = vmatprep.subr.mxu0 0.0
        %2005 = vmatpush1.msra.mxu0 0.0
        %2006 = vmatprep.subr.mxu0 0.0
        %2007 = vmatpush1.msra.mxu0 0.0
        %2008 = vmatprep.subr.mxu0 0.0
        %2009 = vmatpush1.msra.mxu0 0.0
        %2010 = vmatprep.subr.mxu0 0.0
        %2011 = vmatpush1.msra.mxu0 0.0
        %2012 = vmatprep.subr.mxu0 0.0
        %2013 = vmatpush1.msra.mxu0 0.0
        %2014 = vmatprep.subr.mxu0 0.0
        %2015 = vmatpush1.msra.mxu0 0.0
        %2016 = vmatprep.subr.mxu0 0.0
        %2017 = vmatpush1.msra.mxu0 0.0
        %2018 = vmatprep.subr.mxu0 0.0
        %2019 = vmatpush1.msra.mxu0 0.0
        %2020 = vmatprep.subr.mxu0 0.0
        %2021 = vmatpush1.msra.mxu0 0.0
        %2022 = vmatprep.subr.mxu0 0.0
        %2023 = vmatpush1.msra.mxu0 0.0
        %2024 = vmatprep.subr.mxu0 0.0
        %2025 = vmatpush1.msra.mxu0 0.0
        %2026 = vmatprep.subr.mxu0 0.0
        %2027 = vmatpush1.msra.mxu0 0.0
        %2028 = vmatprep.subr.mxu0 0.0
        %2029 = vmatpush1.msra.mxu0 0.0
        %2030 = vmatprep.subr.mxu0 0.0
        %2031 = vmatpush1.msra.mxu0 0.0
        %2032 = vmatprep.subr.mxu0 0.0
        %2033 = vmatpush1.msra.mxu0 0.0
        %2034 = vmatprep.subr.mxu0 0.0
        %2035 = vmatpush1.msra.mxu0 0.0
        %2036 = vmatprep.subr.mxu0 0.0
        %2037 = vmatpush1.msra.mxu0 0.0
        %2038 = vmatprep.subr.mxu0 0.0
        %2039 = vmatpush1.msra.mxu0 0.0
        %2040 = vmatprep.subr.mxu0 0.0
        %2041 = vmatpush1.msra.mxu0 0.0
        %2042 = vmatprep.subr.mxu0 0.0
        %2043 = vmatpush1.msra.mxu0 0.0
        %2044 = vmatprep.subr.mxu0 0.0
        %2045 = vmatpush1.msra.mxu0 0.0
        %2046 = vmatprep.subr.mxu0 0.0
        %2047 = vmatpush1.msra.mxu0 0.0
        %2048 = vmatprep.subr.mxu0 0.0
        %2049 = vmatpush1.msra.mxu0 0.0
        %2050 = vmatprep.mubr.f32.mxu0 0.0
        %2051 = vmatmul.mubr.f32.gmra.mrb[0].mxu0 %v1978
        %v2052 = vpop.f32.mrb[0].mxu0
        %v2053 = vadd.f32 0.0, %v2052
        %v2054 = vpop.f32.mrb[0].mxu0
        %v2055 = vadd.f32 0.0, %v2054
        %2056 = vdwg.mxu0
        %v2057 = vadd.f32 %v1965, %v2053
        %v2058 = vadd.f32 %v1966, %v2055
        %2059 = vrot.lane.b32.xlu0 %v1334, 111
        %v2060 = vpop.permute.xlu0 %2059
        %2061 = vrot.lane.b32.xlu0 %v1335, 111
        %v2062 = vpop.permute.xlu0 %2061
        %v2063 = vsel %vm1226, %v2060, %v2062
        %v2064 = vsel %vm1226, %v2062, %v2060
        %v2065 = vmul.f32 %v2063, %v1233
        %v2066 = vmul.f32 %v2064, %v1237
        %s2067 = scalar_lea.vmem %s4, 32
        %v2068 = vld [vmem:[%s2067] sm:$0xf]
        %v2070 = vsel %vm458, %v2068, 0
        %v2073 = vsel %vm462, %v2065, 0
        %v2076 = vsel %vm462, %v2066, 0
        %2078 = vmatprep.subr.mxu0 %v2076
        %2079 = vmatpush1.msra.mxu0 %v2073
        %2080 = vmatprep.subr.mxu0 0.0
        %2081 = vmatpush1.msra.mxu0 0.0
        %2082 = vmatprep.subr.mxu0 0.0
        %2083 = vmatpush1.msra.mxu0 0.0
        %2084 = vmatprep.subr.mxu0 0.0
        %2085 = vmatpush1.msra.mxu0 0.0
        %2086 = vmatprep.subr.mxu0 0.0
        %2087 = vmatpush1.msra.mxu0 0.0
        %2088 = vmatprep.subr.mxu0 0.0
        %2089 = vmatpush1.msra.mxu0 0.0
        %2090 = vmatprep.subr.mxu0 0.0
        %2091 = vmatpush1.msra.mxu0 0.0
        %2092 = vmatprep.subr.mxu0 0.0
        %2093 = vmatpush1.msra.mxu0 0.0
        %2094 = vmatprep.subr.mxu0 0.0
        %2095 = vmatpush1.msra.mxu0 0.0
        %2096 = vmatprep.subr.mxu0 0.0
        %2097 = vmatpush1.msra.mxu0 0.0
        %2098 = vmatprep.subr.mxu0 0.0
        %2099 = vmatpush1.msra.mxu0 0.0
        %2100 = vmatprep.subr.mxu0 0.0
        %2101 = vmatpush1.msra.mxu0 0.0
        %2102 = vmatprep.subr.mxu0 0.0
        %2103 = vmatpush1.msra.mxu0 0.0
        %2104 = vmatprep.subr.mxu0 0.0
        %2105 = vmatpush1.msra.mxu0 0.0
        %2106 = vmatprep.subr.mxu0 0.0
        %2107 = vmatpush1.msra.mxu0 0.0
        %2108 = vmatprep.subr.mxu0 0.0
        %2109 = vmatpush1.msra.mxu0 0.0
        %2110 = vmatprep.subr.mxu0 0.0
        %2111 = vmatpush1.msra.mxu0 0.0
        %2112 = vmatprep.subr.mxu0 0.0
        %2113 = vmatpush1.msra.mxu0 0.0
        %2114 = vmatprep.subr.mxu0 0.0
        %2115 = vmatpush1.msra.mxu0 0.0
        %2116 = vmatprep.subr.mxu0 0.0
        %2117 = vmatpush1.msra.mxu0 0.0
        %2118 = vmatprep.subr.mxu0 0.0
        %2119 = vmatpush1.msra.mxu0 0.0
        %2120 = vmatprep.subr.mxu0 0.0
        %2121 = vmatpush1.msra.mxu0 0.0
        %2122 = vmatprep.subr.mxu0 0.0
        %2123 = vmatpush1.msra.mxu0 0.0
        %2124 = vmatprep.subr.mxu0 0.0
        %2125 = vmatpush1.msra.mxu0 0.0
        %2126 = vmatprep.subr.mxu0 0.0
        %2127 = vmatpush1.msra.mxu0 0.0
        %2128 = vmatprep.subr.mxu0 0.0
        %2129 = vmatpush1.msra.mxu0 0.0
        %2130 = vmatprep.subr.mxu0 0.0
        %2131 = vmatpush1.msra.mxu0 0.0
        %2132 = vmatprep.subr.mxu0 0.0
        %2133 = vmatpush1.msra.mxu0 0.0
        %2134 = vmatprep.subr.mxu0 0.0
        %2135 = vmatpush1.msra.mxu0 0.0
        %2136 = vmatprep.subr.mxu0 0.0
        %2137 = vmatpush1.msra.mxu0 0.0
        %2138 = vmatprep.subr.mxu0 0.0
        %2139 = vmatpush1.msra.mxu0 0.0
        %2140 = vmatprep.subr.mxu0 0.0
        %2141 = vmatpush1.msra.mxu0 0.0
        %2142 = vmatprep.mubr.f32.mxu0 0.0
        %2143 = vmatmul.mubr.f32.gmra.mrb[0].mxu0 %v2070
        %v2144 = vpop.f32.mrb[0].mxu0
        %v2145 = vadd.f32 0.0, %v2144
        %v2146 = vpop.f32.mrb[0].mxu0
        %v2147 = vadd.f32 0.0, %v2146
        %2148 = vdwg.mxu0
        %v2149 = vadd.f32 %v2057, %v2145
        %v2150 = vadd.f32 %v2058, %v2147
        %v2151 = vld [vmem:[%s5] sm:$0xf]
        %2153 = vset.pattern.permute.xlu0 0
        %2154 = vperm.xlu0 %2153, %v2151
        %v2155 = vpop.permute.xlu0 %2154
        %v2157 = vadd.f32 %v2149, %v2155
        %v2158 = vadd.f32 %v2150, %v2155
        %v2159 = vsel %vm462, %v2157, 0.0
        %v2160 = vsel %vm462, %v2158, 0.0
        %v2161 = vadd.f32 %v2159, %v2160
        %2162 = vadd.xlane.f32.xlu0 %v2161
        %v2163 = vpop.xlane.xlu0 %2162
        %v2164 = vrcp.pop 256.0
        %v2165 = vmul.f32 %v2163, %v2164
        %v2166 = vld [vmem:[%s6] sm:$0x3]
        %v2167 = vld [vmem:[%s7] sm:$0x3]
        %v2169 = vsel %vm458, %v2166, 0
        %v2172 = vsel %vm462, %v2165, 0
        %2174 = vmatprep.subr.mxu0 0.0
        %2175 = vmatpush1.msra.mxu0 %v2172
        %2176 = vmatprep.subr.mxu0 0.0
        %2177 = vmatpush1.msra.mxu0 0.0
        %2178 = vmatprep.subr.mxu0 0.0
        %2179 = vmatpush1.msra.mxu0 0.0
        %2180 = vmatprep.subr.mxu0 0.0
        %2181 = vmatpush1.msra.mxu0 0.0
        %2182 = vmatprep.subr.mxu0 0.0
        %2183 = vmatpush1.msra.mxu0 0.0
        %2184 = vmatprep.subr.mxu0 0.0
        %2185 = vmatpush1.msra.mxu0 0.0
        %2186 = vmatprep.subr.mxu0 0.0
        %2187 = vmatpush1.msra.mxu0 0.0
        %2188 = vmatprep.subr.mxu0 0.0
        %2189 = vmatpush1.msra.mxu0 0.0
        %2190 = vmatprep.subr.mxu0 0.0
        %2191 = vmatpush1.msra.mxu0 0.0
        %2192 = vmatprep.subr.mxu0 0.0
        %2193 = vmatpush1.msra.mxu0 0.0
        %2194 = vmatprep.subr.mxu0 0.0
        %2195 = vmatpush1.msra.mxu0 0.0
        %2196 = vmatprep.subr.mxu0 0.0
        %2197 = vmatpush1.msra.mxu0 0.0
        %2198 = vmatprep.subr.mxu0 0.0
        %2199 = vmatpush1.msra.mxu0 0.0
        %2200 = vmatprep.subr.mxu0 0.0
        %2201 = vmatpush1.msra.mxu0 0.0
        %2202 = vmatprep.subr.mxu0 0.0
        %2203 = vmatpush1.msra.mxu0 0.0
        %2204 = vmatprep.subr.mxu0 0.0
        %2205 = vmatpush1.msra.mxu0 0.0
        %2206 = vmatprep.subr.mxu0 0.0
        %2207 = vmatpush1.msra.mxu0 0.0
        %2208 = vmatprep.subr.mxu0 0.0
        %2209 = vmatpush1.msra.mxu0 0.0
        %2210 = vmatprep.subr.mxu0 0.0
        %2211 = vmatpush1.msra.mxu0 0.0
        %2212 = vmatprep.subr.mxu0 0.0
        %2213 = vmatpush1.msra.mxu0 0.0
        %2214 = vmatprep.subr.mxu0 0.0
        %2215 = vmatpush1.msra.mxu0 0.0
        %2216 = vmatprep.subr.mxu0 0.0
        %2217 = vmatpush1.msra.mxu0 0.0
        %2218 = vmatprep.subr.mxu0 0.0
        %2219 = vmatpush1.msra.mxu0 0.0
        %2220 = vmatprep.subr.mxu0 0.0
        %2221 = vmatpush1.msra.mxu0 0.0
        %2222 = vmatprep.subr.mxu0 0.0
        %2223 = vmatpush1.msra.mxu0 0.0
        %2224 = vmatprep.subr.mxu0 0.0
        %2225 = vmatpush1.msra.mxu0 0.0
        %2226 = vmatprep.subr.mxu0 0.0
        %2227 = vmatpush1.msra.mxu0 0.0
        %2228 = vmatprep.subr.mxu0 0.0
        %2229 = vmatpush1.msra.mxu0 0.0
        %2230 = vmatprep.subr.mxu0 0.0
        %2231 = vmatpush1.msra.mxu0 0.0
        %2232 = vmatprep.subr.mxu0 0.0
        %2233 = vmatpush1.msra.mxu0 0.0
        %2234 = vmatprep.subr.mxu0 0.0
        %2235 = vmatpush1.msra.mxu0 0.0
        %2236 = vmatprep.subr.mxu0 0.0
        %2237 = vmatpush1.msra.mxu0 0.0
        %2238 = vmatprep.mubr.f32.mxu0 0.0
        %2239 = vmatmul.mubr.f32.gmra.mrb[0].mxu0 %v2169
        %v2240 = vpop.f32.mrb[0].mxu0
        %v2241 = vadd.f32 %v2167, %v2240
        %v2242 = vpop.f32.mrb[0].mxu0
        %2243 = vdwg.mxu0
        %v2244 = vmax.f32 %v2241, 0.0
        %v2245 = vld [vmem:[%s8] sm:$0xf]
        %v2246 = vld [vmem:[%s9] sm:$0xf]
        %vm2247 = vcmask 15360
        %v2249 = vsel %vm2247, %v2245, 0
        %vm2251 = vcmask 1041408
        %v2253 = vsel %vm2251, %v2244, 0
        %2255 = vmatprep.subr.mxu0 0.0
        %2256 = vmatpush1.msra.mxu0 %v2253
        %2257 = vmatprep.subr.mxu0 0.0
        %2258 = vmatpush1.msra.mxu0 0.0
        %2259 = vmatprep.subr.mxu0 0.0
        %2260 = vmatpush1.msra.mxu0 0.0
        %2261 = vmatprep.subr.mxu0 0.0
        %2262 = vmatpush1.msra.mxu0 0.0
        %2263 = vmatprep.subr.mxu0 0.0
        %2264 = vmatpush1.msra.mxu0 0.0
        %2265 = vmatprep.subr.mxu0 0.0
        %2266 = vmatpush1.msra.mxu0 0.0
        %2267 = vmatprep.subr.mxu0 0.0
        %2268 = vmatpush1.msra.mxu0 0.0
        %2269 = vmatprep.subr.mxu0 0.0
        %2270 = vmatpush1.msra.mxu0 0.0
        %2271 = vmatprep.subr.mxu0 0.0
        %2272 = vmatpush1.msra.mxu0 0.0
        %2273 = vmatprep.subr.mxu0 0.0
        %2274 = vmatpush1.msra.mxu0 0.0
        %2275 = vmatprep.subr.mxu0 0.0
        %2276 = vmatpush1.msra.mxu0 0.0
        %2277 = vmatprep.subr.mxu0 0.0
        %2278 = vmatpush1.msra.mxu0 0.0
        %2279 = vmatprep.subr.mxu0 0.0
        %2280 = vmatpush1.msra.mxu0 0.0
        %2281 = vmatprep.subr.mxu0 0.0
        %2282 = vmatpush1.msra.mxu0 0.0
        %2283 = vmatprep.subr.mxu0 0.0
        %2284 = vmatpush1.msra.mxu0 0.0
        %2285 = vmatprep.subr.mxu0 0.0
        %2286 = vmatpush1.msra.mxu0 0.0
        %2287 = vmatprep.subr.mxu0 0.0
        %2288 = vmatpush1.msra.mxu0 0.0
        %2289 = vmatprep.subr.mxu0 0.0
        %2290 = vmatpush1.msra.mxu0 0.0
        %2291 = vmatprep.subr.mxu0 0.0
        %2292 = vmatpush1.msra.mxu0 0.0
        %2293 = vmatprep.subr.mxu0 0.0
        %2294 = vmatpush1.msra.mxu0 0.0
        %2295 = vmatprep.subr.mxu0 0.0
        %2296 = vmatpush1.msra.mxu0 0.0
        %2297 = vmatprep.subr.mxu0 0.0
        %2298 = vmatpush1.msra.mxu0 0.0
        %2299 = vmatprep.subr.mxu0 0.0
        %2300 = vmatpush1.msra.mxu0 0.0
        %2301 = vmatprep.subr.mxu0 0.0
        %2302 = vmatpush1.msra.mxu0 0.0
        %2303 = vmatprep.subr.mxu0 0.0
        %2304 = vmatpush1.msra.mxu0 0.0
        %2305 = vmatprep.subr.mxu0 0.0
        %2306 = vmatpush1.msra.mxu0 0.0
        %2307 = vmatprep.subr.mxu0 0.0
        %2308 = vmatpush1.msra.mxu0 0.0
        %2309 = vmatprep.subr.mxu0 0.0
        %2310 = vmatpush1.msra.mxu0 0.0
        %2311 = vmatprep.subr.mxu0 0.0
        %2312 = vmatpush1.msra.mxu0 0.0
        %2313 = vmatprep.subr.mxu0 0.0
        %2314 = vmatpush1.msra.mxu0 0.0
        %2315 = vmatprep.subr.mxu0 0.0
        %2316 = vmatpush1.msra.mxu0 0.0
        %2317 = vmatprep.subr.mxu0 0.0
        %2318 = vmatpush1.msra.mxu0 0.0
        %2319 = vmatprep.mubr.f32.mxu0 0.0
        %2320 = vmatmul.mubr.f32.gmra.mrb[0].mxu0 %v2249
        %v2321 = vpop.f32.mrb[0].mxu0
        %v2322 = vadd.f32 %v2246, %v2321
        %v2323 = vpop.f32.mrb[0].mxu0
        %2324 = vdwg.mxu0
        %v2325 = vxor.u32 %v2322, 2147483648
        %v2326 = vmul.f32 %v2325, 1.442695
        %v2327 = vpow.pop %v2326
        %v2328 = vadd.f32 %v2327, 1.0
        %v2329 = vrcp.pop %v2328
        %v2330 = vmul.f32 1.0, %v2329
        %2332 = vset.pattern.permute.xlu0 0
        %2333 = vperm.xlu0 %2332, %v2330
        %v2334 = vpop.permute.xlu0 %2333
        %v2336 = vmul.f32 %v2157, %v2334
        %v2337 = vmul.f32 %v2158, %v2334
        %v2340 = vcombine.low %v2336, %v2337
        %v2342 = vadd.f32 %v401, %v2340
        %v2343 = vmax.f32 %v2342, 0.0
        %v2345 = vcombine.high %v2343, %v2343
        %2347 = vrot.lane.b32.xlu0 %v2343, 17
        %v2348 = vpop.permute.xlu0 %2347
        %2349 = vrot.lane.b32.xlu0 %v2345, 17
        %v2350 = vpop.permute.xlu0 %2349
        %v2351 = vsel %vm419, %v2348, %v2350
        %v2352 = vsel %vm419, %v2350, %v2348
        %v2353 = vmul.f32 %v2352, %v426
        %v2354 = vmul.f32 %v2351, %v430
        %s2355 = scalar_lea.vmem %s2, 36
        %v2356 = vld [vmem:[%s2355] sm:$0xf]
        %2357 = vrot.lane.b32.xlu0 %v2343, 16
        %v2358 = vpop.permute.xlu0 %2357
        %2359 = vrot.lane.b32.xlu0 %v2345, 16
        %v2360 = vpop.permute.xlu0 %2359
        %v2361 = vsel %vm440, %v2358, %v2360
        %v2362 = vsel %vm440, %v2360, %v2358
        %v2363 = vmul.f32 %v2362, %v447
        %v2364 = vmul.f32 %v2361, %v451
        %s2365 = scalar_lea.vmem %s2, 40
        %v2366 = vld [vmem:[%s2365] sm:$0xf]
        %v2368 = vsel %vm458, %v2366, 0
        %v2371 = vsel %vm462, %v2363, 0
        %v2374 = vsel %vm462, %v2364, 0
        %2376 = vmatprep.subr.mxu0 %v2374
        %2377 = vmatpush1.msra.mxu0 %v2371
        %2378 = vmatprep.subr.mxu0 0.0
        %2379 = vmatpush1.msra.mxu0 0.0
        %2380 = vmatprep.subr.mxu0 0.0
        %2381 = vmatpush1.msra.mxu0 0.0
        %2382 = vmatprep.subr.mxu0 0.0
        %2383 = vmatpush1.msra.mxu0 0.0
        %2384 = vmatprep.subr.mxu0 0.0
        %2385 = vmatpush1.msra.mxu0 0.0
        %2386 = vmatprep.subr.mxu0 0.0
        %2387 = vmatpush1.msra.mxu0 0.0
        %2388 = vmatprep.subr.mxu0 0.0
        %2389 = vmatpush1.msra.mxu0 0.0
        %2390 = vmatprep.subr.mxu0 0.0
        %2391 = vmatpush1.msra.mxu0 0.0
        %2392 = vmatprep.subr.mxu0 0.0
        %2393 = vmatpush1.msra.mxu0 0.0
        %2394 = vmatprep.subr.mxu0 0.0
        %2395 = vmatpush1.msra.mxu0 0.0
        %2396 = vmatprep.subr.mxu0 0.0
        %2397 = vmatpush1.msra.mxu0 0.0
        %2398 = vmatprep.subr.mxu0 0.0
        %2399 = vmatpush1.msra.mxu0 0.0
        %2400 = vmatprep.subr.mxu0 0.0
        %2401 = vmatpush1.msra.mxu0 0.0
        %2402 = vmatprep.subr.mxu0 0.0
        %2403 = vmatpush1.msra.mxu0 0.0
        %2404 = vmatprep.subr.mxu0 0.0
        %2405 = vmatpush1.msra.mxu0 0.0
        %2406 = vmatprep.subr.mxu0 0.0
        %2407 = vmatpush1.msra.mxu0 0.0
        %2408 = vmatprep.subr.mxu0 0.0
        %2409 = vmatpush1.msra.mxu0 0.0
        %2410 = vmatprep.subr.mxu0 0.0
        %2411 = vmatpush1.msra.mxu0 0.0
        %2412 = vmatprep.subr.mxu0 0.0
        %2413 = vmatpush1.msra.mxu0 0.0
        %2414 = vmatprep.subr.mxu0 0.0
        %2415 = vmatpush1.msra.mxu0 0.0
        %2416 = vmatprep.subr.mxu0 0.0
        %2417 = vmatpush1.msra.mxu0 0.0
        %2418 = vmatprep.subr.mxu0 0.0
        %2419 = vmatpush1.msra.mxu0 0.0
        %2420 = vmatprep.subr.mxu0 0.0
        %2421 = vmatpush1.msra.mxu0 0.0
        %2422 = vmatprep.subr.mxu0 0.0
        %2423 = vmatpush1.msra.mxu0 0.0
        %2424 = vmatprep.subr.mxu0 0.0
        %2425 = vmatpush1.msra.mxu0 0.0
        %2426 = vmatprep.subr.mxu0 0.0
        %2427 = vmatpush1.msra.mxu0 0.0
        %2428 = vmatprep.subr.mxu0 0.0
        %2429 = vmatpush1.msra.mxu0 0.0
        %2430 = vmatprep.subr.mxu0 0.0
        %2431 = vmatpush1.msra.mxu0 0.0
        %2432 = vmatprep.subr.mxu0 0.0
        %2433 = vmatpush1.msra.mxu0 0.0
        %2434 = vmatprep.subr.mxu0 0.0
        %2435 = vmatpush1.msra.mxu0 0.0
        %2436 = vmatprep.subr.mxu0 0.0
        %2437 = vmatpush1.msra.mxu0 0.0
        %2438 = vmatprep.subr.mxu0 0.0
        %2439 = vmatpush1.msra.mxu0 0.0
        %2440 = vmatprep.mubr.f32.mxu0 0.0
        %2441 = vmatmul.mubr.f32.gmra.mrb[0].mxu0 %v2368
        %v2442 = vpop.f32.mrb[0].mxu0
        %v2443 = vadd.f32 0.0, %v2442
        %v2444 = vpop.f32.mrb[0].mxu0
        %v2445 = vadd.f32 0.0, %v2444
        %2446 = vdwg.mxu0
        %v2448 = vsel %vm458, %v2356, 0
        %v2451 = vsel %vm462, %v2353, 0
        %v2454 = vsel %vm462, %v2354, 0
        %2456 = vmatprep.subr.mxu0 %v2454
        %2457 = vmatpush1.msra.mxu0 %v2451
        %2458 = vmatprep.subr.mxu0 0.0
        %2459 = vmatpush1.msra.mxu0 0.0
        %2460 = vmatprep.subr.mxu0 0.0
        %2461 = vmatpush1.msra.mxu0 0.0
        %2462 = vmatprep.subr.mxu0 0.0
        %2463 = vmatpush1.msra.mxu0 0.0
        %2464 = vmatprep.subr.mxu0 0.0
        %2465 = vmatpush1.msra.mxu0 0.0
        %2466 = vmatprep.subr.mxu0 0.0
        %2467 = vmatpush1.msra.mxu0 0.0
        %2468 = vmatprep.subr.mxu0 0.0
        %2469 = vmatpush1.msra.mxu0 0.0
        %2470 = vmatprep.subr.mxu0 0.0
        %2471 = vmatpush1.msra.mxu0 0.0
        %2472 = vmatprep.subr.mxu0 0.0
        %2473 = vmatpush1.msra.mxu0 0.0
        %2474 = vmatprep.subr.mxu0 0.0
        %2475 = vmatpush1.msra.mxu0 0.0
        %2476 = vmatprep.subr.mxu0 0.0
        %2477 = vmatpush1.msra.mxu0 0.0
        %2478 = vmatprep.subr.mxu0 0.0
        %2479 = vmatpush1.msra.mxu0 0.0
        %2480 = vmatprep.subr.mxu0 0.0
        %2481 = vmatpush1.msra.mxu0 0.0
        %2482 = vmatprep.subr.mxu0 0.0
        %2483 = vmatpush1.msra.mxu0 0.0
        %2484 = vmatprep.subr.mxu0 0.0
        %2485 = vmatpush1.msra.mxu0 0.0
        %2486 = vmatprep.subr.mxu0 0.0
        %2487 = vmatpush1.msra.mxu0 0.0
        %2488 = vmatprep.subr.mxu0 0.0
        %2489 = vmatpush1.msra.mxu0 0.0
        %2490 = vmatprep.subr.mxu0 0.0
        %2491 = vmatpush1.msra.mxu0 0.0
        %2492 = vmatprep.subr.mxu0 0.0
        %2493 = vmatpush1.msra.mxu0 0.0
        %2494 = vmatprep.subr.mxu0 0.0
        %2495 = vmatpush1.msra.mxu0 0.0
        %2496 = vmatprep.subr.mxu0 0.0
        %2497 = vmatpush1.msra.mxu0 0.0
        %2498 = vmatprep.subr.mxu0 0.0
        %2499 = vmatpush1.msra.mxu0 0.0
        %2500 = vmatprep.subr.mxu0 0.0
        %2501 = vmatpush1.msra.mxu0 0.0
        %2502 = vmatprep.subr.mxu0 0.0
        %2503 = vmatpush1.msra.mxu0 0.0
        %2504 = vmatprep.subr.mxu0 0.0
        %2505 = vmatpush1.msra.mxu0 0.0
        %2506 = vmatprep.subr.mxu0 0.0
        %2507 = vmatpush1.msra.mxu0 0.0
        %2508 = vmatprep.subr.mxu0 0.0
        %2509 = vmatpush1.msra.mxu0 0.0
        %2510 = vmatprep.subr.mxu0 0.0
        %2511 = vmatpush1.msra.mxu0 0.0
        %2512 = vmatprep.subr.mxu0 0.0
        %2513 = vmatpush1.msra.mxu0 0.0
        %2514 = vmatprep.subr.mxu0 0.0
        %2515 = vmatpush1.msra.mxu0 0.0
        %2516 = vmatprep.subr.mxu0 0.0
        %2517 = vmatpush1.msra.mxu0 0.0
        %2518 = vmatprep.subr.mxu0 0.0
        %2519 = vmatpush1.msra.mxu0 0.0
        %2520 = vmatprep.mubr.f32.mxu0 0.0
        %2521 = vmatmul.mubr.f32.gmra.mrb[0].mxu0 %v2448
        %v2522 = vpop.f32.mrb[0].mxu0
        %v2523 = vadd.f32 %v2443, %v2522
        %v2524 = vpop.f32.mrb[0].mxu0
        %v2525 = vadd.f32 %v2445, %v2524
        %2526 = vdwg.mxu0
        %2527 = vrot.lane.b32.xlu0 %v2343, 15
        %v2528 = vpop.permute.xlu0 %2527
        %2529 = vrot.lane.b32.xlu0 %v2345, 15
        %v2530 = vpop.permute.xlu0 %2529
        %v2531 = vsel %vm624, %v2528, %v2530
        %v2532 = vsel %vm624, %v2530, %v2528
        %v2533 = vmul.f32 %v2532, %v631
        %v2534 = vmul.f32 %v2531, %v635
        %s2535 = scalar_lea.vmem %s2, 44
        %v2536 = vld [vmem:[%s2535] sm:$0xf]
        %v2538 = vsel %vm458, %v2536, 0
        %v2541 = vsel %vm462, %v2533, 0
        %v2544 = vsel %vm462, %v2534, 0
        %2546 = vmatprep.subr.mxu0 %v2544
        %2547 = vmatpush1.msra.mxu0 %v2541
        %2548 = vmatprep.subr.mxu0 0.0
        %2549 = vmatpush1.msra.mxu0 0.0
        %2550 = vmatprep.subr.mxu0 0.0
        %2551 = vmatpush1.msra.mxu0 0.0
        %2552 = vmatprep.subr.mxu0 0.0
        %2553 = vmatpush1.msra.mxu0 0.0
        %2554 = vmatprep.subr.mxu0 0.0
        %2555 = vmatpush1.msra.mxu0 0.0
        %2556 = vmatprep.subr.mxu0 0.0
        %2557 = vmatpush1.msra.mxu0 0.0
        %2558 = vmatprep.subr.mxu0 0.0
        %2559 = vmatpush1.msra.mxu0 0.0
        %2560 = vmatprep.subr.mxu0 0.0
        %2561 = vmatpush1.msra.mxu0 0.0
        %2562 = vmatprep.subr.mxu0 0.0
        %2563 = vmatpush1.msra.mxu0 0.0
        %2564 = vmatprep.subr.mxu0 0.0
        %2565 = vmatpush1.msra.mxu0 0.0
        %2566 = vmatprep.subr.mxu0 0.0
        %2567 = vmatpush1.msra.mxu0 0.0
        %2568 = vmatprep.subr.mxu0 0.0
        %2569 = vmatpush1.msra.mxu0 0.0
        %2570 = vmatprep.subr.mxu0 0.0
        %2571 = vmatpush1.msra.mxu0 0.0
        %2572 = vmatprep.subr.mxu0 0.0
        %2573 = vmatpush1.msra.mxu0 0.0
        %2574 = vmatprep.subr.mxu0 0.0
        %2575 = vmatpush1.msra.mxu0 0.0
        %2576 = vmatprep.subr.mxu0 0.0
        %2577 = vmatpush1.msra.mxu0 0.0
        %2578 = vmatprep.subr.mxu0 0.0
        %2579 = vmatpush1.msra.mxu0 0.0
        %2580 = vmatprep.subr.mxu0 0.0
        %2581 = vmatpush1.msra.mxu0 0.0
        %2582 = vmatprep.subr.mxu0 0.0
        %2583 = vmatpush1.msra.mxu0 0.0
        %2584 = vmatprep.subr.mxu0 0.0
        %2585 = vmatpush1.msra.mxu0 0.0
        %2586 = vmatprep.subr.mxu0 0.0
        %2587 = vmatpush1.msra.mxu0 0.0
        %2588 = vmatprep.subr.mxu0 0.0
        %2589 = vmatpush1.msra.mxu0 0.0
        %2590 = vmatprep.subr.mxu0 0.0
        %2591 = vmatpush1.msra.mxu0 0.0
        %2592 = vmatprep.subr.mxu0 0.0
        %2593 = vmatpush1.msra.mxu0 0.0
        %2594 = vmatprep.subr.mxu0 0.0
        %2595 = vmatpush1.msra.mxu0 0.0
        %2596 = vmatprep.subr.mxu0 0.0
        %2597 = vmatpush1.msra.mxu0 0.0
        %2598 = vmatprep.subr.mxu0 0.0
        %2599 = vmatpush1.msra.mxu0 0.0
        %2600 = vmatprep.subr.mxu0 0.0
        %2601 = vmatpush1.msra.mxu0 0.0
        %2602 = vmatprep.subr.mxu0 0.0
        %2603 = vmatpush1.msra.mxu0 0.0
        %2604 = vmatprep.subr.mxu0 0.0
        %2605 = vmatpush1.msra.mxu0 0.0
        %2606 = vmatprep.subr.mxu0 0.0
        %2607 = vmatpush1.msra.mxu0 0.0
        %2608 = vmatprep.subr.mxu0 0.0
        %2609 = vmatpush1.msra.mxu0 0.0
        %2610 = vmatprep.mubr.f32.mxu0 0.0
        %2611 = vmatmul.mubr.f32.gmra.mrb[0].mxu0 %v2538
        %v2612 = vpop.f32.mrb[0].mxu0
        %v2613 = vadd.f32 0.0, %v2612
        %v2614 = vpop.f32.mrb[0].mxu0
        %v2615 = vadd.f32 0.0, %v2614
        %2616 = vdwg.mxu0
        %v2617 = vadd.f32 %v2523, %v2613
        %v2618 = vadd.f32 %v2525, %v2615
        %2619 = vrot.lane.b32.xlu0 %v2343, 1
        %v2620 = vpop.permute.xlu0 %2619
        %2621 = vrot.lane.b32.xlu0 %v2345, 1
        %v2622 = vpop.permute.xlu0 %2621
        %v2623 = vsel %vm728, %v2620, %v2622
        %v2624 = vsel %vm728, %v2622, %v2620
        %v2625 = vmul.f32 %v2624, %v735
        %v2626 = vmul.f32 %v2623, %v739
        %s2627 = scalar_lea.vmem %s2, 48
        %v2628 = vld [vmem:[%s2627] sm:$0xf]
        %v2630 = vsel %vm458, %v2628, 0
        %v2633 = vsel %vm462, %v2625, 0
        %v2636 = vsel %vm462, %v2626, 0
        %2638 = vmatprep.subr.mxu0 %v2636
        %2639 = vmatpush1.msra.mxu0 %v2633
        %2640 = vmatprep.subr.mxu0 0.0
        %2641 = vmatpush1.msra.mxu0 0.0
        %2642 = vmatprep.subr.mxu0 0.0
        %2643 = vmatpush1.msra.mxu0 0.0
        %2644 = vmatprep.subr.mxu0 0.0
        %2645 = vmatpush1.msra.mxu0 0.0
        %2646 = vmatprep.subr.mxu0 0.0
        %2647 = vmatpush1.msra.mxu0 0.0
        %2648 = vmatprep.subr.mxu0 0.0
        %2649 = vmatpush1.msra.mxu0 0.0
        %2650 = vmatprep.subr.mxu0 0.0
        %2651 = vmatpush1.msra.mxu0 0.0
        %2652 = vmatprep.subr.mxu0 0.0
        %2653 = vmatpush1.msra.mxu0 0.0
        %2654 = vmatprep.subr.mxu0 0.0
        %2655 = vmatpush1.msra.mxu0 0.0
        %2656 = vmatprep.subr.mxu0 0.0
        %2657 = vmatpush1.msra.mxu0 0.0
        %2658 = vmatprep.subr.mxu0 0.0
        %2659 = vmatpush1.msra.mxu0 0.0
        %2660 = vmatprep.subr.mxu0 0.0
        %2661 = vmatpush1.msra.mxu0 0.0
        %2662 = vmatprep.subr.mxu0 0.0
        %2663 = vmatpush1.msra.mxu0 0.0
        %2664 = vmatprep.subr.mxu0 0.0
        %2665 = vmatpush1.msra.mxu0 0.0
        %2666 = vmatprep.subr.mxu0 0.0
        %2667 = vmatpush1.msra.mxu0 0.0
        %2668 = vmatprep.subr.mxu0 0.0
        %2669 = vmatpush1.msra.mxu0 0.0
        %2670 = vmatprep.subr.mxu0 0.0
        %2671 = vmatpush1.msra.mxu0 0.0
        %2672 = vmatprep.subr.mxu0 0.0
        %2673 = vmatpush1.msra.mxu0 0.0
        %2674 = vmatprep.subr.mxu0 0.0
        %2675 = vmatpush1.msra.mxu0 0.0
        %2676 = vmatprep.subr.mxu0 0.0
        %2677 = vmatpush1.msra.mxu0 0.0
        %2678 = vmatprep.subr.mxu0 0.0
        %2679 = vmatpush1.msra.mxu0 0.0
        %2680 = vmatprep.subr.mxu0 0.0
        %2681 = vmatpush1.msra.mxu0 0.0
        %2682 = vmatprep.subr.mxu0 0.0
        %2683 = vmatpush1.msra.mxu0 0.0
        %2684 = vmatprep.subr.mxu0 0.0
        %2685 = vmatpush1.msra.mxu0 0.0
        %2686 = vmatprep.subr.mxu0 0.0
        %2687 = vmatpush1.msra.mxu0 0.0
        %2688 = vmatprep.subr.mxu0 0.0
        %2689 = vmatpush1.msra.mxu0 0.0
        %2690 = vmatprep.subr.mxu0 0.0
        %2691 = vmatpush1.msra.mxu0 0.0
        %2692 = vmatprep.subr.mxu0 0.0
        %2693 = vmatpush1.msra.mxu0 0.0
        %2694 = vmatprep.subr.mxu0 0.0
        %2695 = vmatpush1.msra.mxu0 0.0
        %2696 = vmatprep.subr.mxu0 0.0
        %2697 = vmatpush1.msra.mxu0 0.0
        %2698 = vmatprep.subr.mxu0 0.0
        %2699 = vmatpush1.msra.mxu0 0.0
        %2700 = vmatprep.subr.mxu0 0.0
        %2701 = vmatpush1.msra.mxu0 0.0
        %2702 = vmatprep.mubr.f32.mxu0 0.0
        %2703 = vmatmul.mubr.f32.gmra.mrb[0].mxu0 %v2630
        %v2704 = vpop.f32.mrb[0].mxu0
        %v2705 = vadd.f32 0.0, %v2704
        %v2706 = vpop.f32.mrb[0].mxu0
        %v2707 = vadd.f32 0.0, %v2706
        %2708 = vdwg.mxu0
        %v2709 = vadd.f32 %v2617, %v2705
        %v2710 = vadd.f32 %v2618, %v2707
        %s2711 = scalar_lea.vmem %s2, 52
        %v2712 = vld [vmem:[%s2711] sm:$0xf]
        %v2714 = vsel %vm458, %v2712, 0
        %v2716 = vsel %vm462, %v2343, 0
        %v2718 = vsel %vm462, %v2345, 0
        %2720 = vmatprep.subr.mxu0 %v2718
        %2721 = vmatpush1.msra.mxu0 %v2716
        %2722 = vmatprep.subr.mxu0 0.0
        %2723 = vmatpush1.msra.mxu0 0.0
        %2724 = vmatprep.subr.mxu0 0.0
        %2725 = vmatpush1.msra.mxu0 0.0
        %2726 = vmatprep.subr.mxu0 0.0
        %2727 = vmatpush1.msra.mxu0 0.0
        %2728 = vmatprep.subr.mxu0 0.0
        %2729 = vmatpush1.msra.mxu0 0.0
        %2730 = vmatprep.subr.mxu0 0.0
        %2731 = vmatpush1.msra.mxu0 0.0
        %2732 = vmatprep.subr.mxu0 0.0
        %2733 = vmatpush1.msra.mxu0 0.0
        %2734 = vmatprep.subr.mxu0 0.0
        %2735 = vmatpush1.msra.mxu0 0.0
        %2736 = vmatprep.subr.mxu0 0.0
        %2737 = vmatpush1.msra.mxu0 0.0
        %2738 = vmatprep.subr.mxu0 0.0
        %2739 = vmatpush1.msra.mxu0 0.0
        %2740 = vmatprep.subr.mxu0 0.0
        %2741 = vmatpush1.msra.mxu0 0.0
        %2742 = vmatprep.subr.mxu0 0.0
        %2743 = vmatpush1.msra.mxu0 0.0
        %2744 = vmatprep.subr.mxu0 0.0
        %2745 = vmatpush1.msra.mxu0 0.0
        %2746 = vmatprep.subr.mxu0 0.0
        %2747 = vmatpush1.msra.mxu0 0.0
        %2748 = vmatprep.subr.mxu0 0.0
        %2749 = vmatpush1.msra.mxu0 0.0
        %2750 = vmatprep.subr.mxu0 0.0
        %2751 = vmatpush1.msra.mxu0 0.0
        %2752 = vmatprep.subr.mxu0 0.0
        %2753 = vmatpush1.msra.mxu0 0.0
        %2754 = vmatprep.subr.mxu0 0.0
        %2755 = vmatpush1.msra.mxu0 0.0
        %2756 = vmatprep.subr.mxu0 0.0
        %2757 = vmatpush1.msra.mxu0 0.0
        %2758 = vmatprep.subr.mxu0 0.0
        %2759 = vmatpush1.msra.mxu0 0.0
        %2760 = vmatprep.subr.mxu0 0.0
        %2761 = vmatpush1.msra.mxu0 0.0
        %2762 = vmatprep.subr.mxu0 0.0
        %2763 = vmatpush1.msra.mxu0 0.0
        %2764 = vmatprep.subr.mxu0 0.0
        %2765 = vmatpush1.msra.mxu0 0.0
        %2766 = vmatprep.subr.mxu0 0.0
        %2767 = vmatpush1.msra.mxu0 0.0
        %2768 = vmatprep.subr.mxu0 0.0
        %2769 = vmatpush1.msra.mxu0 0.0
        %2770 = vmatprep.subr.mxu0 0.0
        %2771 = vmatpush1.msra.mxu0 0.0
        %2772 = vmatprep.subr.mxu0 0.0
        %2773 = vmatpush1.msra.mxu0 0.0
        %2774 = vmatprep.subr.mxu0 0.0
        %2775 = vmatpush1.msra.mxu0 0.0
        %2776 = vmatprep.subr.mxu0 0.0
        %2777 = vmatpush1.msra.mxu0 0.0
        %2778 = vmatprep.subr.mxu0 0.0
        %2779 = vmatpush1.msra.mxu0 0.0
        %2780 = vmatprep.subr.mxu0 0.0
        %2781 = vmatpush1.msra.mxu0 0.0
        %2782 = vmatprep.subr.mxu0 0.0
        %2783 = vmatpush1.msra.mxu0 0.0
        %2784 = vmatprep.mubr.f32.mxu0 0.0
        %2785 = vmatmul.mubr.f32.gmra.mrb[0].mxu0 %v2714
        %v2786 = vpop.f32.mrb[0].mxu0
        %v2787 = vadd.f32 0.0, %v2786
        %v2788 = vpop.f32.mrb[0].mxu0
        %v2789 = vadd.f32 0.0, %v2788
        %2790 = vdwg.mxu0
        %v2791 = vadd.f32 %v2709, %v2787
        %v2792 = vadd.f32 %v2710, %v2789
        %2793 = vrot.lane.b32.xlu0 %v2343, 127
        %v2794 = vpop.permute.xlu0 %2793
        %2795 = vrot.lane.b32.xlu0 %v2345, 127
        %v2796 = vpop.permute.xlu0 %2795
        %v2797 = vsel %vm914, %v2794, %v2796
        %v2798 = vsel %vm914, %v2796, %v2794
        %v2799 = vmul.f32 %v2797, %v921
        %v2800 = vmul.f32 %v2798, %v925
        %s2801 = scalar_lea.vmem %s2, 56
        %v2802 = vld [vmem:[%s2801] sm:$0xf]
        %v2804 = vsel %vm458, %v2802, 0
        %v2807 = vsel %vm462, %v2799, 0
        %v2810 = vsel %vm462, %v2800, 0
        %2812 = vmatprep.subr.mxu0 %v2810
        %2813 = vmatpush1.msra.mxu0 %v2807
        %2814 = vmatprep.subr.mxu0 0.0
        %2815 = vmatpush1.msra.mxu0 0.0
        %2816 = vmatprep.subr.mxu0 0.0
        %2817 = vmatpush1.msra.mxu0 0.0
        %2818 = vmatprep.subr.mxu0 0.0
        %2819 = vmatpush1.msra.mxu0 0.0
        %2820 = vmatprep.subr.mxu0 0.0
        %2821 = vmatpush1.msra.mxu0 0.0
        %2822 = vmatprep.subr.mxu0 0.0
        %2823 = vmatpush1.msra.mxu0 0.0
        %2824 = vmatprep.subr.mxu0 0.0
        %2825 = vmatpush1.msra.mxu0 0.0
        %2826 = vmatprep.subr.mxu0 0.0
        %2827 = vmatpush1.msra.mxu0 0.0
        %2828 = vmatprep.subr.mxu0 0.0
        %2829 = vmatpush1.msra.mxu0 0.0
        %2830 = vmatprep.subr.mxu0 0.0
        %2831 = vmatpush1.msra.mxu0 0.0
        %2832 = vmatprep.subr.mxu0 0.0
        %2833 = vmatpush1.msra.mxu0 0.0
        %2834 = vmatprep.subr.mxu0 0.0
        %2835 = vmatpush1.msra.mxu0 0.0
        %2836 = vmatprep.subr.mxu0 0.0
        %2837 = vmatpush1.msra.mxu0 0.0
        %2838 = vmatprep.subr.mxu0 0.0
        %2839 = vmatpush1.msra.mxu0 0.0
        %2840 = vmatprep.subr.mxu0 0.0
        %2841 = vmatpush1.msra.mxu0 0.0
        %2842 = vmatprep.subr.mxu0 0.0
        %2843 = vmatpush1.msra.mxu0 0.0
        %2844 = vmatprep.subr.mxu0 0.0
        %2845 = vmatpush1.msra.mxu0 0.0
        %2846 = vmatprep.subr.mxu0 0.0
        %2847 = vmatpush1.msra.mxu0 0.0
        %2848 = vmatprep.subr.mxu0 0.0
        %2849 = vmatpush1.msra.mxu0 0.0
        %2850 = vmatprep.subr.mxu0 0.0
        %2851 = vmatpush1.msra.mxu0 0.0
        %2852 = vmatprep.subr.mxu0 0.0
        %2853 = vmatpush1.msra.mxu0 0.0
        %2854 = vmatprep.subr.mxu0 0.0
        %2855 = vmatpush1.msra.mxu0 0.0
        %2856 = vmatprep.subr.mxu0 0.0
        %2857 = vmatpush1.msra.mxu0 0.0
        %2858 = vmatprep.subr.mxu0 0.0
        %2859 = vmatpush1.msra.mxu0 0.0
        %2860 = vmatprep.subr.mxu0 0.0
        %2861 = vmatpush1.msra.mxu0 0.0
        %2862 = vmatprep.subr.mxu0 0.0
        %2863 = vmatpush1.msra.mxu0 0.0
        %2864 = vmatprep.subr.mxu0 0.0
        %2865 = vmatpush1.msra.mxu0 0.0
        %2866 = vmatprep.subr.mxu0 0.0
        %2867 = vmatpush1.msra.mxu0 0.0
        %2868 = vmatprep.subr.mxu0 0.0
        %2869 = vmatpush1.msra.mxu0 0.0
        %2870 = vmatprep.subr.mxu0 0.0
        %2871 = vmatpush1.msra.mxu0 0.0
        %2872 = vmatprep.subr.mxu0 0.0
        %2873 = vmatpush1.msra.mxu0 0.0
        %2874 = vmatprep.subr.mxu0 0.0
        %2875 = vmatpush1.msra.mxu0 0.0
        %2876 = vmatprep.mubr.f32.mxu0 0.0
        %2877 = vmatmul.mubr.f32.gmra.mrb[0].mxu0 %v2804
        %v2878 = vpop.f32.mrb[0].mxu0
        %v2879 = vadd.f32 0.0, %v2878
        %v2880 = vpop.f32.mrb[0].mxu0
        %v2881 = vadd.f32 0.0, %v2880
        %2882 = vdwg.mxu0
        %v2883 = vadd.f32 %v2791, %v2879
        %v2884 = vadd.f32 %v2792, %v2881
        %2885 = vrot.lane.b32.xlu0 %v2343, 113
        %v2886 = vpop.permute.xlu0 %2885
        %2887 = vrot.lane.b32.xlu0 %v2345, 113
        %v2888 = vpop.permute.xlu0 %2887
        %v2889 = vsel %vm1018, %v2886, %v2888
        %v2890 = vsel %vm1018, %v2888, %v2886
        %v2891 = vmul.f32 %v2889, %v1025
        %v2892 = vmul.f32 %v2890, %v1029
        %s2893 = scalar_lea.vmem %s2, 60
        %v2894 = vld [vmem:[%s2893] sm:$0xf]
        %v2896 = vsel %vm458, %v2894, 0
        %v2899 = vsel %vm462, %v2891, 0
        %v2902 = vsel %vm462, %v2892, 0
        %2904 = vmatprep.subr.mxu0 %v2902
        %2905 = vmatpush1.msra.mxu0 %v2899
        %2906 = vmatprep.subr.mxu0 0.0
        %2907 = vmatpush1.msra.mxu0 0.0
        %2908 = vmatprep.subr.mxu0 0.0
        %2909 = vmatpush1.msra.mxu0 0.0
        %2910 = vmatprep.subr.mxu0 0.0
        %2911 = vmatpush1.msra.mxu0 0.0
        %2912 = vmatprep.subr.mxu0 0.0
        %2913 = vmatpush1.msra.mxu0 0.0
        %2914 = vmatprep.subr.mxu0 0.0
        %2915 = vmatpush1.msra.mxu0 0.0
        %2916 = vmatprep.subr.mxu0 0.0
        %2917 = vmatpush1.msra.mxu0 0.0
        %2918 = vmatprep.subr.mxu0 0.0
        %2919 = vmatpush1.msra.mxu0 0.0
        %2920 = vmatprep.subr.mxu0 0.0
        %2921 = vmatpush1.msra.mxu0 0.0
        %2922 = vmatprep.subr.mxu0 0.0
        %2923 = vmatpush1.msra.mxu0 0.0
        %2924 = vmatprep.subr.mxu0 0.0
        %2925 = vmatpush1.msra.mxu0 0.0
        %2926 = vmatprep.subr.mxu0 0.0
        %2927 = vmatpush1.msra.mxu0 0.0
        %2928 = vmatprep.subr.mxu0 0.0
        %2929 = vmatpush1.msra.mxu0 0.0
        %2930 = vmatprep.subr.mxu0 0.0
        %2931 = vmatpush1.msra.mxu0 0.0
        %2932 = vmatprep.subr.mxu0 0.0
        %2933 = vmatpush1.msra.mxu0 0.0
        %2934 = vmatprep.subr.mxu0 0.0
        %2935 = vmatpush1.msra.mxu0 0.0
        %2936 = vmatprep.subr.mxu0 0.0
        %2937 = vmatpush1.msra.mxu0 0.0
        %2938 = vmatprep.subr.mxu0 0.0
        %2939 = vmatpush1.msra.mxu0 0.0
        %2940 = vmatprep.subr.mxu0 0.0
        %2941 = vmatpush1.msra.mxu0 0.0
        %2942 = vmatprep.subr.mxu0 0.0
        %2943 = vmatpush1.msra.mxu0 0.0
        %2944 = vmatprep.subr.mxu0 0.0
        %2945 = vmatpush1.msra.mxu0 0.0
        %2946 = vmatprep.subr.mxu0 0.0
        %2947 = vmatpush1.msra.mxu0 0.0
        %2948 = vmatprep.subr.mxu0 0.0
        %2949 = vmatpush1.msra.mxu0 0.0
        %2950 = vmatprep.subr.mxu0 0.0
        %2951 = vmatpush1.msra.mxu0 0.0
        %2952 = vmatprep.subr.mxu0 0.0
        %2953 = vmatpush1.msra.mxu0 0.0
        %2954 = vmatprep.subr.mxu0 0.0
        %2955 = vmatpush1.msra.mxu0 0.0
        %2956 = vmatprep.subr.mxu0 0.0
        %2957 = vmatpush1.msra.mxu0 0.0
        %2958 = vmatprep.subr.mxu0 0.0
        %2959 = vmatpush1.msra.mxu0 0.0
        %2960 = vmatprep.subr.mxu0 0.0
        %2961 = vmatpush1.msra.mxu0 0.0
        %2962 = vmatprep.subr.mxu0 0.0
        %2963 = vmatpush1.msra.mxu0 0.0
        %2964 = vmatprep.subr.mxu0 0.0
        %2965 = vmatpush1.msra.mxu0 0.0
        %2966 = vmatprep.subr.mxu0 0.0
        %2967 = vmatpush1.msra.mxu0 0.0
        %2968 = vmatprep.mubr.f32.mxu0 0.0
        %2969 = vmatmul.mubr.f32.gmra.mrb[0].mxu0 %v2896
        %v2970 = vpop.f32.mrb[0].mxu0
        %v2971 = vadd.f32 0.0, %v2970
        %v2972 = vpop.f32.mrb[0].mxu0
        %v2973 = vadd.f32 0.0, %v2972
        %2974 = vdwg.mxu0
        %v2975 = vadd.f32 %v2883, %v2971
        %v2976 = vadd.f32 %v2884, %v2973
        %2977 = vrot.lane.b32.xlu0 %v2343, 112
        %v2978 = vpop.permute.xlu0 %2977
        %2979 = vrot.lane.b32.xlu0 %v2345, 112
        %v2980 = vpop.permute.xlu0 %2979
        %v2981 = vsel %vm1122, %v2978, %v2980
        %v2982 = vsel %vm1122, %v2980, %v2978
        %v2983 = vmul.f32 %v2981, %v1129
        %v2984 = vmul.f32 %v2982, %v1133
        %s2985 = scalar_lea.vmem %s2, 64
        %v2986 = vld [vmem:[%s2985] sm:$0xf]
        %v2988 = vsel %vm458, %v2986, 0
        %v2991 = vsel %vm462, %v2983, 0
        %v2994 = vsel %vm462, %v2984, 0
        %2996 = vmatprep.subr.mxu0 %v2994
        %2997 = vmatpush1.msra.mxu0 %v2991
        %2998 = vmatprep.subr.mxu0 0.0
        %2999 = vmatpush1.msra.mxu0 0.0
        %3000 = vmatprep.subr.mxu0 0.0
        %3001 = vmatpush1.msra.mxu0 0.0
        %3002 = vmatprep.subr.mxu0 0.0
        %3003 = vmatpush1.msra.mxu0 0.0
        %3004 = vmatprep.subr.mxu0 0.0
        %3005 = vmatpush1.msra.mxu0 0.0
        %3006 = vmatprep.subr.mxu0 0.0
        %3007 = vmatpush1.msra.mxu0 0.0
        %3008 = vmatprep.subr.mxu0 0.0
        %3009 = vmatpush1.msra.mxu0 0.0
        %3010 = vmatprep.subr.mxu0 0.0
        %3011 = vmatpush1.msra.mxu0 0.0
        %3012 = vmatprep.subr.mxu0 0.0
        %3013 = vmatpush1.msra.mxu0 0.0
        %3014 = vmatprep.subr.mxu0 0.0
        %3015 = vmatpush1.msra.mxu0 0.0
        %3016 = vmatprep.subr.mxu0 0.0
        %3017 = vmatpush1.msra.mxu0 0.0
        %3018 = vmatprep.subr.mxu0 0.0
        %3019 = vmatpush1.msra.mxu0 0.0
        %3020 = vmatprep.subr.mxu0 0.0
        %3021 = vmatpush1.msra.mxu0 0.0
        %3022 = vmatprep.subr.mxu0 0.0
        %3023 = vmatpush1.msra.mxu0 0.0
        %3024 = vmatprep.subr.mxu0 0.0
        %3025 = vmatpush1.msra.mxu0 0.0
        %3026 = vmatprep.subr.mxu0 0.0
        %3027 = vmatpush1.msra.mxu0 0.0
        %3028 = vmatprep.subr.mxu0 0.0
        %3029 = vmatpush1.msra.mxu0 0.0
        %3030 = vmatprep.subr.mxu0 0.0
        %3031 = vmatpush1.msra.mxu0 0.0
        %3032 = vmatprep.subr.mxu0 0.0
        %3033 = vmatpush1.msra.mxu0 0.0
        %3034 = vmatprep.subr.mxu0 0.0
        %3035 = vmatpush1.msra.mxu0 0.0
        %3036 = vmatprep.subr.mxu0 0.0
        %3037 = vmatpush1.msra.mxu0 0.0
        %3038 = vmatprep.subr.mxu0 0.0
        %3039 = vmatpush1.msra.mxu0 0.0
        %3040 = vmatprep.subr.mxu0 0.0
        %3041 = vmatpush1.msra.mxu0 0.0
        %3042 = vmatprep.subr.mxu0 0.0
        %3043 = vmatpush1.msra.mxu0 0.0
        %3044 = vmatprep.subr.mxu0 0.0
        %3045 = vmatpush1.msra.mxu0 0.0
        %3046 = vmatprep.subr.mxu0 0.0
        %3047 = vmatpush1.msra.mxu0 0.0
        %3048 = vmatprep.subr.mxu0 0.0
        %3049 = vmatpush1.msra.mxu0 0.0
        %3050 = vmatprep.subr.mxu0 0.0
        %3051 = vmatpush1.msra.mxu0 0.0
        %3052 = vmatprep.subr.mxu0 0.0
        %3053 = vmatpush1.msra.mxu0 0.0
        %3054 = vmatprep.subr.mxu0 0.0
        %3055 = vmatpush1.msra.mxu0 0.0
        %3056 = vmatprep.subr.mxu0 0.0
        %3057 = vmatpush1.msra.mxu0 0.0
        %3058 = vmatprep.subr.mxu0 0.0
        %3059 = vmatpush1.msra.mxu0 0.0
        %3060 = vmatprep.mubr.f32.mxu0 0.0
        %3061 = vmatmul.mubr.f32.gmra.mrb[0].mxu0 %v2988
        %v3062 = vpop.f32.mrb[0].mxu0
        %v3063 = vadd.f32 0.0, %v3062
        %v3064 = vpop.f32.mrb[0].mxu0
        %v3065 = vadd.f32 0.0, %v3064
        %3066 = vdwg.mxu0
        %v3067 = vadd.f32 %v2975, %v3063
        %v3068 = vadd.f32 %v2976, %v3065
        %3069 = vrot.lane.b32.xlu0 %v2343, 111
        %v3070 = vpop.permute.xlu0 %3069
        %3071 = vrot.lane.b32.xlu0 %v2345, 111
        %v3072 = vpop.permute.xlu0 %3071
        %v3073 = vsel %vm1226, %v3070, %v3072
        %v3074 = vsel %vm1226, %v3072, %v3070
        %v3075 = vmul.f32 %v3073, %v1233
        %v3076 = vmul.f32 %v3074, %v1237
        %s3077 = scalar_lea.vmem %s2, 68
        %v3078 = vld [vmem:[%s3077] sm:$0xf]
        %v3080 = vsel %vm458, %v3078, 0
        %v3083 = vsel %vm462, %v3075, 0
        %v3086 = vsel %vm462, %v3076, 0
        %3088 = vmatprep.subr.mxu0 %v3086
        %3089 = vmatpush1.msra.mxu0 %v3083
        %3090 = vmatprep.subr.mxu0 0.0
        %3091 = vmatpush1.msra.mxu0 0.0
        %3092 = vmatprep.subr.mxu0 0.0
        %3093 = vmatpush1.msra.mxu0 0.0
        %3094 = vmatprep.subr.mxu0 0.0
        %3095 = vmatpush1.msra.mxu0 0.0
        %3096 = vmatprep.subr.mxu0 0.0
        %3097 = vmatpush1.msra.mxu0 0.0
        %3098 = vmatprep.subr.mxu0 0.0
        %3099 = vmatpush1.msra.mxu0 0.0
        %3100 = vmatprep.subr.mxu0 0.0
        %3101 = vmatpush1.msra.mxu0 0.0
        %3102 = vmatprep.subr.mxu0 0.0
        %3103 = vmatpush1.msra.mxu0 0.0
        %3104 = vmatprep.subr.mxu0 0.0
        %3105 = vmatpush1.msra.mxu0 0.0
        %3106 = vmatprep.subr.mxu0 0.0
        %3107 = vmatpush1.msra.mxu0 0.0
        %3108 = vmatprep.subr.mxu0 0.0
        %3109 = vmatpush1.msra.mxu0 0.0
        %3110 = vmatprep.subr.mxu0 0.0
        %3111 = vmatpush1.msra.mxu0 0.0
        %3112 = vmatprep.subr.mxu0 0.0
        %3113 = vmatpush1.msra.mxu0 0.0
        %3114 = vmatprep.subr.mxu0 0.0
        %3115 = vmatpush1.msra.mxu0 0.0
        %3116 = vmatprep.subr.mxu0 0.0
        %3117 = vmatpush1.msra.mxu0 0.0
        %3118 = vmatprep.subr.mxu0 0.0
        %3119 = vmatpush1.msra.mxu0 0.0
        %3120 = vmatprep.subr.mxu0 0.0
        %3121 = vmatpush1.msra.mxu0 0.0
        %3122 = vmatprep.subr.mxu0 0.0
        %3123 = vmatpush1.msra.mxu0 0.0
        %3124 = vmatprep.subr.mxu0 0.0
        %3125 = vmatpush1.msra.mxu0 0.0
        %3126 = vmatprep.subr.mxu0 0.0
        %3127 = vmatpush1.msra.mxu0 0.0
        %3128 = vmatprep.subr.mxu0 0.0
        %3129 = vmatpush1.msra.mxu0 0.0
        %3130 = vmatprep.subr.mxu0 0.0
        %3131 = vmatpush1.msra.mxu0 0.0
        %3132 = vmatprep.subr.mxu0 0.0
        %3133 = vmatpush1.msra.mxu0 0.0
        %3134 = vmatprep.subr.mxu0 0.0
        %3135 = vmatpush1.msra.mxu0 0.0
        %3136 = vmatprep.subr.mxu0 0.0
        %3137 = vmatpush1.msra.mxu0 0.0
        %3138 = vmatprep.subr.mxu0 0.0
        %3139 = vmatpush1.msra.mxu0 0.0
        %3140 = vmatprep.subr.mxu0 0.0
        %3141 = vmatpush1.msra.mxu0 0.0
        %3142 = vmatprep.subr.mxu0 0.0
        %3143 = vmatpush1.msra.mxu0 0.0
        %3144 = vmatprep.subr.mxu0 0.0
        %3145 = vmatpush1.msra.mxu0 0.0
        %3146 = vmatprep.subr.mxu0 0.0
        %3147 = vmatpush1.msra.mxu0 0.0
        %3148 = vmatprep.subr.mxu0 0.0
        %3149 = vmatpush1.msra.mxu0 0.0
        %3150 = vmatprep.subr.mxu0 0.0
        %3151 = vmatpush1.msra.mxu0 0.0
        %3152 = vmatprep.mubr.f32.mxu0 0.0
        %3153 = vmatmul.mubr.f32.gmra.mrb[0].mxu0 %v3080
        %v3154 = vpop.f32.mrb[0].mxu0
        %v3155 = vadd.f32 0.0, %v3154
        %v3156 = vpop.f32.mrb[0].mxu0
        %v3157 = vadd.f32 0.0, %v3156
        %3158 = vdwg.mxu0
        %v3159 = vadd.f32 %v3067, %v3155
        %v3160 = vadd.f32 %v3068, %v3157
        %s3161 = scalar_lea.vmem %s3, 4
        %v3162 = vld [vmem:[%s3161] sm:$0xf]
        %3164 = vset.pattern.permute.xlu0 0
        %3165 = vperm.xlu0 %3164, %v3162
        %v3166 = vpop.permute.xlu0 %3165
        %v3168 = vadd.f32 %v3159, %v3166
        %v3169 = vadd.f32 %v3160, %v3166
        %v3170 = vmax.f32 %v3168, 0.0
        %v3171 = vmax.f32 %v3169, 0.0
        %3172 = vrot.lane.b32.xlu0 %v3170, 17
        %v3173 = vpop.permute.xlu0 %3172
        %3174 = vrot.lane.b32.xlu0 %v3171, 17
        %v3175 = vpop.permute.xlu0 %3174
        %v3176 = vsel %vm419, %v3173, %v3175
        %v3177 = vsel %vm419, %v3175, %v3173
        %v3178 = vmul.f32 %v3177, %v426
        %v3179 = vmul.f32 %v3176, %v430
        %s3180 = scalar_lea.vmem %s4, 36
        %v3181 = vld [vmem:[%s3180] sm:$0xf]
        %3182 = vrot.lane.b32.xlu0 %v3170, 16
        %v3183 = vpop.permute.xlu0 %3182
        %3184 = vrot.lane.b32.xlu0 %v3171, 16
        %v3185 = vpop.permute.xlu0 %3184
        %v3186 = vsel %vm440, %v3183, %v3185
        %v3187 = vsel %vm440, %v3185, %v3183
        %v3188 = vmul.f32 %v3187, %v447
        %v3189 = vmul.f32 %v3186, %v451
        %s3190 = scalar_lea.vmem %s4, 40
        %v3191 = vld [vmem:[%s3190] sm:$0xf]
        %v3193 = vsel %vm458, %v3191, 0
        %v3196 = vsel %vm462, %v3188, 0
        %v3199 = vsel %vm462, %v3189, 0
        %3201 = vmatprep.subr.mxu0 %v3199
        %3202 = vmatpush1.msra.mxu0 %v3196
        %3203 = vmatprep.subr.mxu0 0.0
        %3204 = vmatpush1.msra.mxu0 0.0
        %3205 = vmatprep.subr.mxu0 0.0
        %3206 = vmatpush1.msra.mxu0 0.0
        %3207 = vmatprep.subr.mxu0 0.0
        %3208 = vmatpush1.msra.mxu0 0.0
        %3209 = vmatprep.subr.mxu0 0.0
        %3210 = vmatpush1.msra.mxu0 0.0
        %3211 = vmatprep.subr.mxu0 0.0
        %3212 = vmatpush1.msra.mxu0 0.0
        %3213 = vmatprep.subr.mxu0 0.0
        %3214 = vmatpush1.msra.mxu0 0.0
        %3215 = vmatprep.subr.mxu0 0.0
        %3216 = vmatpush1.msra.mxu0 0.0
        %3217 = vmatprep.subr.mxu0 0.0
        %3218 = vmatpush1.msra.mxu0 0.0
        %3219 = vmatprep.subr.mxu0 0.0
        %3220 = vmatpush1.msra.mxu0 0.0
        %3221 = vmatprep.subr.mxu0 0.0
        %3222 = vmatpush1.msra.mxu0 0.0
        %3223 = vmatprep.subr.mxu0 0.0
        %3224 = vmatpush1.msra.mxu0 0.0
        %3225 = vmatprep.subr.mxu0 0.0
        %3226 = vmatpush1.msra.mxu0 0.0
        %3227 = vmatprep.subr.mxu0 0.0
        %3228 = vmatpush1.msra.mxu0 0.0
        %3229 = vmatprep.subr.mxu0 0.0
        %3230 = vmatpush1.msra.mxu0 0.0
        %3231 = vmatprep.subr.mxu0 0.0
        %3232 = vmatpush1.msra.mxu0 0.0
        %3233 = vmatprep.subr.mxu0 0.0
        %3234 = vmatpush1.msra.mxu0 0.0
        %3235 = vmatprep.subr.mxu0 0.0
        %3236 = vmatpush1.msra.mxu0 0.0
        %3237 = vmatprep.subr.mxu0 0.0
        %3238 = vmatpush1.msra.mxu0 0.0
        %3239 = vmatprep.subr.mxu0 0.0
        %3240 = vmatpush1.msra.mxu0 0.0
        %3241 = vmatprep.subr.mxu0 0.0
        %3242 = vmatpush1.msra.mxu0 0.0
        %3243 = vmatprep.subr.mxu0 0.0
        %3244 = vmatpush1.msra.mxu0 0.0
        %3245 = vmatprep.subr.mxu0 0.0
        %3246 = vmatpush1.msra.mxu0 0.0
        %3247 = vmatprep.subr.mxu0 0.0
        %3248 = vmatpush1.msra.mxu0 0.0
        %3249 = vmatprep.subr.mxu0 0.0
        %3250 = vmatpush1.msra.mxu0 0.0
        %3251 = vmatprep.subr.mxu0 0.0
        %3252 = vmatpush1.msra.mxu0 0.0
        %3253 = vmatprep.subr.mxu0 0.0
        %3254 = vmatpush1.msra.mxu0 0.0
        %3255 = vmatprep.subr.mxu0 0.0
        %3256 = vmatpush1.msra.mxu0 0.0
        %3257 = vmatprep.subr.mxu0 0.0
        %3258 = vmatpush1.msra.mxu0 0.0
        %3259 = vmatprep.subr.mxu0 0.0
        %3260 = vmatpush1.msra.mxu0 0.0
        %3261 = vmatprep.subr.mxu0 0.0
        %3262 = vmatpush1.msra.mxu0 0.0
        %3263 = vmatprep.subr.mxu0 0.0
        %3264 = vmatpush1.msra.mxu0 0.0
        %3265 = vmatprep.mubr.f32.mxu0 0.0
        %3266 = vmatmul.mubr.f32.gmra.mrb[0].mxu0 %v3193
        %v3267 = vpop.f32.mrb[0].mxu0
        %v3268 = vadd.f32 0.0, %v3267
        %v3269 = vpop.f32.mrb[0].mxu0
        %v3270 = vadd.f32 0.0, %v3269
        %3271 = vdwg.mxu0
        %v3273 = vsel %vm458, %v3181, 0
        %v3276 = vsel %vm462, %v3178, 0
        %v3279 = vsel %vm462, %v3179, 0
        %3281 = vmatprep.subr.mxu0 %v3279
        %3282 = vmatpush1.msra.mxu0 %v3276
        %3283 = vmatprep.subr.mxu0 0.0
        %3284 = vmatpush1.msra.mxu0 0.0
        %3285 = vmatprep.subr.mxu0 0.0
        %3286 = vmatpush1.msra.mxu0 0.0
        %3287 = vmatprep.subr.mxu0 0.0
        %3288 = vmatpush1.msra.mxu0 0.0
        %3289 = vmatprep.subr.mxu0 0.0
        %3290 = vmatpush1.msra.mxu0 0.0
        %3291 = vmatprep.subr.mxu0 0.0
        %3292 = vmatpush1.msra.mxu0 0.0
        %3293 = vmatprep.subr.mxu0 0.0
        %3294 = vmatpush1.msra.mxu0 0.0
        %3295 = vmatprep.subr.mxu0 0.0
        %3296 = vmatpush1.msra.mxu0 0.0
        %3297 = vmatprep.subr.mxu0 0.0
        %3298 = vmatpush1.msra.mxu0 0.0
        %3299 = vmatprep.subr.mxu0 0.0
        %3300 = vmatpush1.msra.mxu0 0.0
        %3301 = vmatprep.subr.mxu0 0.0
        %3302 = vmatpush1.msra.mxu0 0.0
        %3303 = vmatprep.subr.mxu0 0.0
        %3304 = vmatpush1.msra.mxu0 0.0
        %3305 = vmatprep.subr.mxu0 0.0
        %3306 = vmatpush1.msra.mxu0 0.0
        %3307 = vmatprep.subr.mxu0 0.0
        %3308 = vmatpush1.msra.mxu0 0.0
        %3309 = vmatprep.subr.mxu0 0.0
        %3310 = vmatpush1.msra.mxu0 0.0
        %3311 = vmatprep.subr.mxu0 0.0
        %3312 = vmatpush1.msra.mxu0 0.0
        %3313 = vmatprep.subr.mxu0 0.0
        %3314 = vmatpush1.msra.mxu0 0.0
        %3315 = vmatprep.subr.mxu0 0.0
        %3316 = vmatpush1.msra.mxu0 0.0
        %3317 = vmatprep.subr.mxu0 0.0
        %3318 = vmatpush1.msra.mxu0 0.0
        %3319 = vmatprep.subr.mxu0 0.0
        %3320 = vmatpush1.msra.mxu0 0.0
        %3321 = vmatprep.subr.mxu0 0.0
        %3322 = vmatpush1.msra.mxu0 0.0
        %3323 = vmatprep.subr.mxu0 0.0
        %3324 = vmatpush1.msra.mxu0 0.0
        %3325 = vmatprep.subr.mxu0 0.0
        %3326 = vmatpush1.msra.mxu0 0.0
        %3327 = vmatprep.subr.mxu0 0.0
        %3328 = vmatpush1.msra.mxu0 0.0
        %3329 = vmatprep.subr.mxu0 0.0
        %3330 = vmatpush1.msra.mxu0 0.0
        %3331 = vmatprep.subr.mxu0 0.0
        %3332 = vmatpush1.msra.mxu0 0.0
        %3333 = vmatprep.subr.mxu0 0.0
        %3334 = vmatpush1.msra.mxu0 0.0
        %3335 = vmatprep.subr.mxu0 0.0
        %3336 = vmatpush1.msra.mxu0 0.0
        %3337 = vmatprep.subr.mxu0 0.0
        %3338 = vmatpush1.msra.mxu0 0.0
        %3339 = vmatprep.subr.mxu0 0.0
        %3340 = vmatpush1.msra.mxu0 0.0
        %3341 = vmatprep.subr.mxu0 0.0
        %3342 = vmatpush1.msra.mxu0 0.0
        %3343 = vmatprep.subr.mxu0 0.0
        %3344 = vmatpush1.msra.mxu0 0.0
        %3345 = vmatprep.mubr.f32.mxu0 0.0
        %3346 = vmatmul.mubr.f32.gmra.mrb[0].mxu0 %v3273
        %v3347 = vpop.f32.mrb[0].mxu0
        %v3348 = vadd.f32 %v3268, %v3347
        %v3349 = vpop.f32.mrb[0].mxu0
        %v3350 = vadd.f32 %v3270, %v3349
        %3351 = vdwg.mxu0
        %3352 = vrot.lane.b32.xlu0 %v3170, 15
        %v3353 = vpop.permute.xlu0 %3352
        %3354 = vrot.lane.b32.xlu0 %v3171, 15
        %v3355 = vpop.permute.xlu0 %3354
        %v3356 = vsel %vm624, %v3353, %v3355
        %v3357 = vsel %vm624, %v3355, %v3353
        %v3358 = vmul.f32 %v3357, %v631
        %v3359 = vmul.f32 %v3356, %v635
        %s3360 = scalar_lea.vmem %s4, 44
        %v3361 = vld [vmem:[%s3360] sm:$0xf]
        %v3363 = vsel %vm458, %v3361, 0
        %v3366 = vsel %vm462, %v3358, 0
        %v3369 = vsel %vm462, %v3359, 0
        %3371 = vmatprep.subr.mxu0 %v3369
        %3372 = vmatpush1.msra.mxu0 %v3366
        %3373 = vmatprep.subr.mxu0 0.0
        %3374 = vmatpush1.msra.mxu0 0.0
        %3375 = vmatprep.subr.mxu0 0.0
        %3376 = vmatpush1.msra.mxu0 0.0
        %3377 = vmatprep.subr.mxu0 0.0
        %3378 = vmatpush1.msra.mxu0 0.0
        %3379 = vmatprep.subr.mxu0 0.0
        %3380 = vmatpush1.msra.mxu0 0.0
        %3381 = vmatprep.subr.mxu0 0.0
        %3382 = vmatpush1.msra.mxu0 0.0
        %3383 = vmatprep.subr.mxu0 0.0
        %3384 = vmatpush1.msra.mxu0 0.0
        %3385 = vmatprep.subr.mxu0 0.0
        %3386 = vmatpush1.msra.mxu0 0.0
        %3387 = vmatprep.subr.mxu0 0.0
        %3388 = vmatpush1.msra.mxu0 0.0
        %3389 = vmatprep.subr.mxu0 0.0
        %3390 = vmatpush1.msra.mxu0 0.0
        %3391 = vmatprep.subr.mxu0 0.0
        %3392 = vmatpush1.msra.mxu0 0.0
        %3393 = vmatprep.subr.mxu0 0.0
        %3394 = vmatpush1.msra.mxu0 0.0
        %3395 = vmatprep.subr.mxu0 0.0
        %3396 = vmatpush1.msra.mxu0 0.0
        %3397 = vmatprep.subr.mxu0 0.0
        %3398 = vmatpush1.msra.mxu0 0.0
        %3399 = vmatprep.subr.mxu0 0.0
        %3400 = vmatpush1.msra.mxu0 0.0
        %3401 = vmatprep.subr.mxu0 0.0
        %3402 = vmatpush1.msra.mxu0 0.0
        %3403 = vmatprep.subr.mxu0 0.0
        %3404 = vmatpush1.msra.mxu0 0.0
        %3405 = vmatprep.subr.mxu0 0.0
        %3406 = vmatpush1.msra.mxu0 0.0
        %3407 = vmatprep.subr.mxu0 0.0
        %3408 = vmatpush1.msra.mxu0 0.0
        %3409 = vmatprep.subr.mxu0 0.0
        %3410 = vmatpush1.msra.mxu0 0.0
        %3411 = vmatprep.subr.mxu0 0.0
        %3412 = vmatpush1.msra.mxu0 0.0
        %3413 = vmatprep.subr.mxu0 0.0
        %3414 = vmatpush1.msra.mxu0 0.0
        %3415 = vmatprep.subr.mxu0 0.0
        %3416 = vmatpush1.msra.mxu0 0.0
        %3417 = vmatprep.subr.mxu0 0.0
        %3418 = vmatpush1.msra.mxu0 0.0
        %3419 = vmatprep.subr.mxu0 0.0
        %3420 = vmatpush1.msra.mxu0 0.0
        %3421 = vmatprep.subr.mxu0 0.0
        %3422 = vmatpush1.msra.mxu0 0.0
        %3423 = vmatprep.subr.mxu0 0.0
        %3424 = vmatpush1.msra.mxu0 0.0
        %3425 = vmatprep.subr.mxu0 0.0
        %3426 = vmatpush1.msra.mxu0 0.0
        %3427 = vmatprep.subr.mxu0 0.0
        %3428 = vmatpush1.msra.mxu0 0.0
        %3429 = vmatprep.subr.mxu0 0.0
        %3430 = vmatpush1.msra.mxu0 0.0
        %3431 = vmatprep.subr.mxu0 0.0
        %3432 = vmatpush1.msra.mxu0 0.0
        %3433 = vmatprep.subr.mxu0 0.0
        %3434 = vmatpush1.msra.mxu0 0.0
        %3435 = vmatprep.mubr.f32.mxu0 0.0
        %3436 = vmatmul.mubr.f32.gmra.mrb[0].mxu0 %v3363
        %v3437 = vpop.f32.mrb[0].mxu0
        %v3438 = vadd.f32 0.0, %v3437
        %v3439 = vpop.f32.mrb[0].mxu0
        %v3440 = vadd.f32 0.0, %v3439
        %3441 = vdwg.mxu0
        %v3442 = vadd.f32 %v3348, %v3438
        %v3443 = vadd.f32 %v3350, %v3440
        %3444 = vrot.lane.b32.xlu0 %v3170, 1
        %v3445 = vpop.permute.xlu0 %3444
        %3446 = vrot.lane.b32.xlu0 %v3171, 1
        %v3447 = vpop.permute.xlu0 %3446
        %v3448 = vsel %vm728, %v3445, %v3447
        %v3449 = vsel %vm728, %v3447, %v3445
        %v3450 = vmul.f32 %v3449, %v735
        %v3451 = vmul.f32 %v3448, %v739
        %s3452 = scalar_lea.vmem %s4, 48
        %v3453 = vld [vmem:[%s3452] sm:$0xf]
        %v3455 = vsel %vm458, %v3453, 0
        %v3458 = vsel %vm462, %v3450, 0
        %v3461 = vsel %vm462, %v3451, 0
        %3463 = vmatprep.subr.mxu0 %v3461
        %3464 = vmatpush1.msra.mxu0 %v3458
        %3465 = vmatprep.subr.mxu0 0.0
        %3466 = vmatpush1.msra.mxu0 0.0
        %3467 = vmatprep.subr.mxu0 0.0
        %3468 = vmatpush1.msra.mxu0 0.0
        %3469 = vmatprep.subr.mxu0 0.0
        %3470 = vmatpush1.msra.mxu0 0.0
        %3471 = vmatprep.subr.mxu0 0.0
        %3472 = vmatpush1.msra.mxu0 0.0
        %3473 = vmatprep.subr.mxu0 0.0
        %3474 = vmatpush1.msra.mxu0 0.0
        %3475 = vmatprep.subr.mxu0 0.0
        %3476 = vmatpush1.msra.mxu0 0.0
        %3477 = vmatprep.subr.mxu0 0.0
        %3478 = vmatpush1.msra.mxu0 0.0
        %3479 = vmatprep.subr.mxu0 0.0
        %3480 = vmatpush1.msra.mxu0 0.0
        %3481 = vmatprep.subr.mxu0 0.0
        %3482 = vmatpush1.msra.mxu0 0.0
        %3483 = vmatprep.subr.mxu0 0.0
        %3484 = vmatpush1.msra.mxu0 0.0
        %3485 = vmatprep.subr.mxu0 0.0
        %3486 = vmatpush1.msra.mxu0 0.0
        %3487 = vmatprep.subr.mxu0 0.0
        %3488 = vmatpush1.msra.mxu0 0.0
        %3489 = vmatprep.subr.mxu0 0.0
        %3490 = vmatpush1.msra.mxu0 0.0
        %3491 = vmatprep.subr.mxu0 0.0
        %3492 = vmatpush1.msra.mxu0 0.0
        %3493 = vmatprep.subr.mxu0 0.0
        %3494 = vmatpush1.msra.mxu0 0.0
        %3495 = vmatprep.subr.mxu0 0.0
        %3496 = vmatpush1.msra.mxu0 0.0
        %3497 = vmatprep.subr.mxu0 0.0
        %3498 = vmatpush1.msra.mxu0 0.0
        %3499 = vmatprep.subr.mxu0 0.0
        %3500 = vmatpush1.msra.mxu0 0.0
        %3501 = vmatprep.subr.mxu0 0.0
        %3502 = vmatpush1.msra.mxu0 0.0
        %3503 = vmatprep.subr.mxu0 0.0
        %3504 = vmatpush1.msra.mxu0 0.0
        %3505 = vmatprep.subr.mxu0 0.0
        %3506 = vmatpush1.msra.mxu0 0.0
        %3507 = vmatprep.subr.mxu0 0.0
        %3508 = vmatpush1.msra.mxu0 0.0
        %3509 = vmatprep.subr.mxu0 0.0
        %3510 = vmatpush1.msra.mxu0 0.0
        %3511 = vmatprep.subr.mxu0 0.0
        %3512 = vmatpush1.msra.mxu0 0.0
        %3513 = vmatprep.subr.mxu0 0.0
        %3514 = vmatpush1.msra.mxu0 0.0
        %3515 = vmatprep.subr.mxu0 0.0
        %3516 = vmatpush1.msra.mxu0 0.0
        %3517 = vmatprep.subr.mxu0 0.0
        %3518 = vmatpush1.msra.mxu0 0.0
        %3519 = vmatprep.subr.mxu0 0.0
        %3520 = vmatpush1.msra.mxu0 0.0
        %3521 = vmatprep.subr.mxu0 0.0
        %3522 = vmatpush1.msra.mxu0 0.0
        %3523 = vmatprep.subr.mxu0 0.0
        %3524 = vmatpush1.msra.mxu0 0.0
        %3525 = vmatprep.subr.mxu0 0.0
        %3526 = vmatpush1.msra.mxu0 0.0
        %3527 = vmatprep.mubr.f32.mxu0 0.0
        %3528 = vmatmul.mubr.f32.gmra.mrb[0].mxu0 %v3455
        %v3529 = vpop.f32.mrb[0].mxu0
        %v3530 = vadd.f32 0.0, %v3529
        %v3531 = vpop.f32.mrb[0].mxu0
        %v3532 = vadd.f32 0.0, %v3531
        %3533 = vdwg.mxu0
        %v3534 = vadd.f32 %v3442, %v3530
        %v3535 = vadd.f32 %v3443, %v3532
        %s3536 = scalar_lea.vmem %s4, 52
        %v3537 = vld [vmem:[%s3536] sm:$0xf]
        %v3539 = vsel %vm458, %v3537, 0
        %v3542 = vsel %vm462, %v3170, 0
        %v3545 = vsel %vm462, %v3171, 0
        %3547 = vmatprep.subr.mxu0 %v3545
        %3548 = vmatpush1.msra.mxu0 %v3542
        %3549 = vmatprep.subr.mxu0 0.0
        %3550 = vmatpush1.msra.mxu0 0.0
        %3551 = vmatprep.subr.mxu0 0.0
        %3552 = vmatpush1.msra.mxu0 0.0
        %3553 = vmatprep.subr.mxu0 0.0
        %3554 = vmatpush1.msra.mxu0 0.0
        %3555 = vmatprep.subr.mxu0 0.0
        %3556 = vmatpush1.msra.mxu0 0.0
        %3557 = vmatprep.subr.mxu0 0.0
        %3558 = vmatpush1.msra.mxu0 0.0
        %3559 = vmatprep.subr.mxu0 0.0
        %3560 = vmatpush1.msra.mxu0 0.0
        %3561 = vmatprep.subr.mxu0 0.0
        %3562 = vmatpush1.msra.mxu0 0.0
        %3563 = vmatprep.subr.mxu0 0.0
        %3564 = vmatpush1.msra.mxu0 0.0
        %3565 = vmatprep.subr.mxu0 0.0
        %3566 = vmatpush1.msra.mxu0 0.0
        %3567 = vmatprep.subr.mxu0 0.0
        %3568 = vmatpush1.msra.mxu0 0.0
        %3569 = vmatprep.subr.mxu0 0.0
        %3570 = vmatpush1.msra.mxu0 0.0
        %3571 = vmatprep.subr.mxu0 0.0
        %3572 = vmatpush1.msra.mxu0 0.0
        %3573 = vmatprep.subr.mxu0 0.0
        %3574 = vmatpush1.msra.mxu0 0.0
        %3575 = vmatprep.subr.mxu0 0.0
        %3576 = vmatpush1.msra.mxu0 0.0
        %3577 = vmatprep.subr.mxu0 0.0
        %3578 = vmatpush1.msra.mxu0 0.0
        %3579 = vmatprep.subr.mxu0 0.0
        %3580 = vmatpush1.msra.mxu0 0.0
        %3581 = vmatprep.subr.mxu0 0.0
        %3582 = vmatpush1.msra.mxu0 0.0
        %3583 = vmatprep.subr.mxu0 0.0
        %3584 = vmatpush1.msra.mxu0 0.0
        %3585 = vmatprep.subr.mxu0 0.0
        %3586 = vmatpush1.msra.mxu0 0.0
        %3587 = vmatprep.subr.mxu0 0.0
        %3588 = vmatpush1.msra.mxu0 0.0
        %3589 = vmatprep.subr.mxu0 0.0
        %3590 = vmatpush1.msra.mxu0 0.0
        %3591 = vmatprep.subr.mxu0 0.0
        %3592 = vmatpush1.msra.mxu0 0.0
        %3593 = vmatprep.subr.mxu0 0.0
        %3594 = vmatpush1.msra.mxu0 0.0
        %3595 = vmatprep.subr.mxu0 0.0
        %3596 = vmatpush1.msra.mxu0 0.0
        %3597 = vmatprep.subr.mxu0 0.0
        %3598 = vmatpush1.msra.mxu0 0.0
        %3599 = vmatprep.subr.mxu0 0.0
        %3600 = vmatpush1.msra.mxu0 0.0
        %3601 = vmatprep.subr.mxu0 0.0
        %3602 = vmatpush1.msra.mxu0 0.0
        %3603 = vmatprep.subr.mxu0 0.0
        %3604 = vmatpush1.msra.mxu0 0.0
        %3605 = vmatprep.subr.mxu0 0.0
        %3606 = vmatpush1.msra.mxu0 0.0
        %3607 = vmatprep.subr.mxu0 0.0
        %3608 = vmatpush1.msra.mxu0 0.0
        %3609 = vmatprep.subr.mxu0 0.0
        %3610 = vmatpush1.msra.mxu0 0.0
        %3611 = vmatprep.mubr.f32.mxu0 0.0
        %3612 = vmatmul.mubr.f32.gmra.mrb[0].mxu0 %v3539
        %v3613 = vpop.f32.mrb[0].mxu0
        %v3614 = vadd.f32 0.0, %v3613
        %v3615 = vpop.f32.mrb[0].mxu0
        %v3616 = vadd.f32 0.0, %v3615
        %3617 = vdwg.mxu0
        %v3618 = vadd.f32 %v3534, %v3614
        %v3619 = vadd.f32 %v3535, %v3616
        %3620 = vrot.lane.b32.xlu0 %v3170, 127
        %v3621 = vpop.permute.xlu0 %3620
        %3622 = vrot.lane.b32.xlu0 %v3171, 127
        %v3623 = vpop.permute.xlu0 %3622
        %v3624 = vsel %vm914, %v3621, %v3623
        %v3625 = vsel %vm914, %v3623, %v3621
        %v3626 = vmul.f32 %v3624, %v921
        %v3627 = vmul.f32 %v3625, %v925
        %s3628 = scalar_lea.vmem %s4, 56
        %v3629 = vld [vmem:[%s3628] sm:$0xf]
        %v3631 = vsel %vm458, %v3629, 0
        %v3634 = vsel %vm462, %v3626, 0
        %v3637 = vsel %vm462, %v3627, 0
        %3639 = vmatprep.subr.mxu0 %v3637
        %3640 = vmatpush1.msra.mxu0 %v3634
        %3641 = vmatprep.subr.mxu0 0.0
        %3642 = vmatpush1.msra.mxu0 0.0
        %3643 = vmatprep.subr.mxu0 0.0
        %3644 = vmatpush1.msra.mxu0 0.0
        %3645 = vmatprep.subr.mxu0 0.0
        %3646 = vmatpush1.msra.mxu0 0.0
        %3647 = vmatprep.subr.mxu0 0.0
        %3648 = vmatpush1.msra.mxu0 0.0
        %3649 = vmatprep.subr.mxu0 0.0
        %3650 = vmatpush1.msra.mxu0 0.0
        %3651 = vmatprep.subr.mxu0 0.0
        %3652 = vmatpush1.msra.mxu0 0.0
        %3653 = vmatprep.subr.mxu0 0.0
        %3654 = vmatpush1.msra.mxu0 0.0
        %3655 = vmatprep.subr.mxu0 0.0
        %3656 = vmatpush1.msra.mxu0 0.0
        %3657 = vmatprep.subr.mxu0 0.0
        %3658 = vmatpush1.msra.mxu0 0.0
        %3659 = vmatprep.subr.mxu0 0.0
        %3660 = vmatpush1.msra.mxu0 0.0
        %3661 = vmatprep.subr.mxu0 0.0
        %3662 = vmatpush1.msra.mxu0 0.0
        %3663 = vmatprep.subr.mxu0 0.0
        %3664 = vmatpush1.msra.mxu0 0.0
        %3665 = vmatprep.subr.mxu0 0.0
        %3666 = vmatpush1.msra.mxu0 0.0
        %3667 = vmatprep.subr.mxu0 0.0
        %3668 = vmatpush1.msra.mxu0 0.0
        %3669 = vmatprep.subr.mxu0 0.0
        %3670 = vmatpush1.msra.mxu0 0.0
        %3671 = vmatprep.subr.mxu0 0.0
        %3672 = vmatpush1.msra.mxu0 0.0
        %3673 = vmatprep.subr.mxu0 0.0
        %3674 = vmatpush1.msra.mxu0 0.0
        %3675 = vmatprep.subr.mxu0 0.0
        %3676 = vmatpush1.msra.mxu0 0.0
        %3677 = vmatprep.subr.mxu0 0.0
        %3678 = vmatpush1.msra.mxu0 0.0
        %3679 = vmatprep.subr.mxu0 0.0
        %3680 = vmatpush1.msra.mxu0 0.0
        %3681 = vmatprep.subr.mxu0 0.0
        %3682 = vmatpush1.msra.mxu0 0.0
        %3683 = vmatprep.subr.mxu0 0.0
        %3684 = vmatpush1.msra.mxu0 0.0
        %3685 = vmatprep.subr.mxu0 0.0
        %3686 = vmatpush1.msra.mxu0 0.0
        %3687 = vmatprep.subr.mxu0 0.0
        %3688 = vmatpush1.msra.mxu0 0.0
        %3689 = vmatprep.subr.mxu0 0.0
        %3690 = vmatpush1.msra.mxu0 0.0
        %3691 = vmatprep.subr.mxu0 0.0
        %3692 = vmatpush1.msra.mxu0 0.0
        %3693 = vmatprep.subr.mxu0 0.0
        %3694 = vmatpush1.msra.mxu0 0.0
        %3695 = vmatprep.subr.mxu0 0.0
        %3696 = vmatpush1.msra.mxu0 0.0
        %3697 = vmatprep.subr.mxu0 0.0
        %3698 = vmatpush1.msra.mxu0 0.0
        %3699 = vmatprep.subr.mxu0 0.0
        %3700 = vmatpush1.msra.mxu0 0.0
        %3701 = vmatprep.subr.mxu0 0.0
        %3702 = vmatpush1.msra.mxu0 0.0
        %3703 = vmatprep.mubr.f32.mxu0 0.0
        %3704 = vmatmul.mubr.f32.gmra.mrb[0].mxu0 %v3631
        %v3705 = vpop.f32.mrb[0].mxu0
        %v3706 = vadd.f32 0.0, %v3705
        %v3707 = vpop.f32.mrb[0].mxu0
        %v3708 = vadd.f32 0.0, %v3707
        %3709 = vdwg.mxu0
        %v3710 = vadd.f32 %v3618, %v3706
        %v3711 = vadd.f32 %v3619, %v3708
        %3712 = vrot.lane.b32.xlu0 %v3170, 113
        %v3713 = vpop.permute.xlu0 %3712
        %3714 = vrot.lane.b32.xlu0 %v3171, 113
        %v3715 = vpop.permute.xlu0 %3714
        %v3716 = vsel %vm1018, %v3713, %v3715
        %v3717 = vsel %vm1018, %v3715, %v3713
        %v3718 = vmul.f32 %v3716, %v1025
        %v3719 = vmul.f32 %v3717, %v1029
        %s3720 = scalar_lea.vmem %s4, 60
        %v3721 = vld [vmem:[%s3720] sm:$0xf]
        %v3723 = vsel %vm458, %v3721, 0
        %v3726 = vsel %vm462, %v3718, 0
        %v3729 = vsel %vm462, %v3719, 0
        %3731 = vmatprep.subr.mxu0 %v3729
        %3732 = vmatpush1.msra.mxu0 %v3726
        %3733 = vmatprep.subr.mxu0 0.0
        %3734 = vmatpush1.msra.mxu0 0.0
        %3735 = vmatprep.subr.mxu0 0.0
        %3736 = vmatpush1.msra.mxu0 0.0
        %3737 = vmatprep.subr.mxu0 0.0
        %3738 = vmatpush1.msra.mxu0 0.0
        %3739 = vmatprep.subr.mxu0 0.0
        %3740 = vmatpush1.msra.mxu0 0.0
        %3741 = vmatprep.subr.mxu0 0.0
        %3742 = vmatpush1.msra.mxu0 0.0
        %3743 = vmatprep.subr.mxu0 0.0
        %3744 = vmatpush1.msra.mxu0 0.0
        %3745 = vmatprep.subr.mxu0 0.0
        %3746 = vmatpush1.msra.mxu0 0.0
        %3747 = vmatprep.subr.mxu0 0.0
        %3748 = vmatpush1.msra.mxu0 0.0
        %3749 = vmatprep.subr.mxu0 0.0
        %3750 = vmatpush1.msra.mxu0 0.0
        %3751 = vmatprep.subr.mxu0 0.0
        %3752 = vmatpush1.msra.mxu0 0.0
        %3753 = vmatprep.subr.mxu0 0.0
        %3754 = vmatpush1.msra.mxu0 0.0
        %3755 = vmatprep.subr.mxu0 0.0
        %3756 = vmatpush1.msra.mxu0 0.0
        %3757 = vmatprep.subr.mxu0 0.0
        %3758 = vmatpush1.msra.mxu0 0.0
        %3759 = vmatprep.subr.mxu0 0.0
        %3760 = vmatpush1.msra.mxu0 0.0
        %3761 = vmatprep.subr.mxu0 0.0
        %3762 = vmatpush1.msra.mxu0 0.0
        %3763 = vmatprep.subr.mxu0 0.0
        %3764 = vmatpush1.msra.mxu0 0.0
        %3765 = vmatprep.subr.mxu0 0.0
        %3766 = vmatpush1.msra.mxu0 0.0
        %3767 = vmatprep.subr.mxu0 0.0
        %3768 = vmatpush1.msra.mxu0 0.0
        %3769 = vmatprep.subr.mxu0 0.0
        %3770 = vmatpush1.msra.mxu0 0.0
        %3771 = vmatprep.subr.mxu0 0.0
        %3772 = vmatpush1.msra.mxu0 0.0
        %3773 = vmatprep.subr.mxu0 0.0
        %3774 = vmatpush1.msra.mxu0 0.0
        %3775 = vmatprep.subr.mxu0 0.0
        %3776 = vmatpush1.msra.mxu0 0.0
        %3777 = vmatprep.subr.mxu0 0.0
        %3778 = vmatpush1.msra.mxu0 0.0
        %3779 = vmatprep.subr.mxu0 0.0
        %3780 = vmatpush1.msra.mxu0 0.0
        %3781 = vmatprep.subr.mxu0 0.0
        %3782 = vmatpush1.msra.mxu0 0.0
        %3783 = vmatprep.subr.mxu0 0.0
        %3784 = vmatpush1.msra.mxu0 0.0
        %3785 = vmatprep.subr.mxu0 0.0
        %3786 = vmatpush1.msra.mxu0 0.0
        %3787 = vmatprep.subr.mxu0 0.0
        %3788 = vmatpush1.msra.mxu0 0.0
        %3789 = vmatprep.subr.mxu0 0.0
        %3790 = vmatpush1.msra.mxu0 0.0
        %3791 = vmatprep.subr.mxu0 0.0
        %3792 = vmatpush1.msra.mxu0 0.0
        %3793 = vmatprep.subr.mxu0 0.0
        %3794 = vmatpush1.msra.mxu0 0.0
        %3795 = vmatprep.mubr.f32.mxu0 0.0
        %3796 = vmatmul.mubr.f32.gmra.mrb[0].mxu0 %v3723
        %v3797 = vpop.f32.mrb[0].mxu0
        %v3798 = vadd.f32 0.0, %v3797
        %v3799 = vpop.f32.mrb[0].mxu0
        %v3800 = vadd.f32 0.0, %v3799
        %3801 = vdwg.mxu0
        %v3802 = vadd.f32 %v3710, %v3798
        %v3803 = vadd.f32 %v3711, %v3800
        %3804 = vrot.lane.b32.xlu0 %v3170, 112
        %v3805 = vpop.permute.xlu0 %3804
        %3806 = vrot.lane.b32.xlu0 %v3171, 112
        %v3807 = vpop.permute.xlu0 %3806
        %v3808 = vsel %vm1122, %v3805, %v3807
        %v3809 = vsel %vm1122, %v3807, %v3805
        %v3810 = vmul.f32 %v3808, %v1129
        %v3811 = vmul.f32 %v3809, %v1133
        %s3812 = scalar_lea.vmem %s4, 64
        %v3813 = vld [vmem:[%s3812] sm:$0xf]
        %v3815 = vsel %vm458, %v3813, 0
        %v3818 = vsel %vm462, %v3810, 0
        %v3821 = vsel %vm462, %v3811, 0
        %3823 = vmatprep.subr.mxu0 %v3821
        %3824 = vmatpush1.msra.mxu0 %v3818
        %3825 = vmatprep.subr.mxu0 0.0
        %3826 = vmatpush1.msra.mxu0 0.0
        %3827 = vmatprep.subr.mxu0 0.0
        %3828 = vmatpush1.msra.mxu0 0.0
        %3829 = vmatprep.subr.mxu0 0.0
        %3830 = vmatpush1.msra.mxu0 0.0
        %3831 = vmatprep.subr.mxu0 0.0
        %3832 = vmatpush1.msra.mxu0 0.0
        %3833 = vmatprep.subr.mxu0 0.0
        %3834 = vmatpush1.msra.mxu0 0.0
        %3835 = vmatprep.subr.mxu0 0.0
        %3836 = vmatpush1.msra.mxu0 0.0
        %3837 = vmatprep.subr.mxu0 0.0
        %3838 = vmatpush1.msra.mxu0 0.0
        %3839 = vmatprep.subr.mxu0 0.0
        %3840 = vmatpush1.msra.mxu0 0.0
        %3841 = vmatprep.subr.mxu0 0.0
        %3842 = vmatpush1.msra.mxu0 0.0
        %3843 = vmatprep.subr.mxu0 0.0
        %3844 = vmatpush1.msra.mxu0 0.0
        %3845 = vmatprep.subr.mxu0 0.0
        %3846 = vmatpush1.msra.mxu0 0.0
        %3847 = vmatprep.subr.mxu0 0.0
        %3848 = vmatpush1.msra.mxu0 0.0
        %3849 = vmatprep.subr.mxu0 0.0
        %3850 = vmatpush1.msra.mxu0 0.0
        %3851 = vmatprep.subr.mxu0 0.0
        %3852 = vmatpush1.msra.mxu0 0.0
        %3853 = vmatprep.subr.mxu0 0.0
        %3854 = vmatpush1.msra.mxu0 0.0
        %3855 = vmatprep.subr.mxu0 0.0
        %3856 = vmatpush1.msra.mxu0 0.0
        %3857 = vmatprep.subr.mxu0 0.0
        %3858 = vmatpush1.msra.mxu0 0.0
        %3859 = vmatprep.subr.mxu0 0.0
        %3860 = vmatpush1.msra.mxu0 0.0
        %3861 = vmatprep.subr.mxu0 0.0
        %3862 = vmatpush1.msra.mxu0 0.0
        %3863 = vmatprep.subr.mxu0 0.0
        %3864 = vmatpush1.msra.mxu0 0.0
        %3865 = vmatprep.subr.mxu0 0.0
        %3866 = vmatpush1.msra.mxu0 0.0
        %3867 = vmatprep.subr.mxu0 0.0
        %3868 = vmatpush1.msra.mxu0 0.0
        %3869 = vmatprep.subr.mxu0 0.0
        %3870 = vmatpush1.msra.mxu0 0.0
        %3871 = vmatprep.subr.mxu0 0.0
        %3872 = vmatpush1.msra.mxu0 0.0
        %3873 = vmatprep.subr.mxu0 0.0
        %3874 = vmatpush1.msra.mxu0 0.0
        %3875 = vmatprep.subr.mxu0 0.0
        %3876 = vmatpush1.msra.mxu0 0.0
        %3877 = vmatprep.subr.mxu0 0.0
        %3878 = vmatpush1.msra.mxu0 0.0
        %3879 = vmatprep.subr.mxu0 0.0
        %3880 = vmatpush1.msra.mxu0 0.0
        %3881 = vmatprep.subr.mxu0 0.0
        %3882 = vmatpush1.msra.mxu0 0.0
        %3883 = vmatprep.subr.mxu0 0.0
        %3884 = vmatpush1.msra.mxu0 0.0
        %3885 = vmatprep.subr.mxu0 0.0
        %3886 = vmatpush1.msra.mxu0 0.0
        %3887 = vmatprep.mubr.f32.mxu0 0.0
        %3888 = vmatmul.mubr.f32.gmra.mrb[0].mxu0 %v3815
        %v3889 = vpop.f32.mrb[0].mxu0
        %v3890 = vadd.f32 0.0, %v3889
        %v3891 = vpop.f32.mrb[0].mxu0
        %v3892 = vadd.f32 0.0, %v3891
        %3893 = vdwg.mxu0
        %v3894 = vadd.f32 %v3802, %v3890
        %v3895 = vadd.f32 %v3803, %v3892
        %3896 = vrot.lane.b32.xlu0 %v3170, 111
        %v3897 = vpop.permute.xlu0 %3896
        %3898 = vrot.lane.b32.xlu0 %v3171, 111
        %v3899 = vpop.permute.xlu0 %3898
        %v3900 = vsel %vm1226, %v3897, %v3899
        %v3901 = vsel %vm1226, %v3899, %v3897
        %v3902 = vmul.f32 %v3900, %v1233
        %v3903 = vmul.f32 %v3901, %v1237
        %s3904 = scalar_lea.vmem %s4, 68
        %v3905 = vld [vmem:[%s3904] sm:$0xf]
        %v3907 = vsel %vm458, %v3905, 0
        %v3910 = vsel %vm462, %v3902, 0
        %v3913 = vsel %vm462, %v3903, 0
        %3915 = vmatprep.subr.mxu0 %v3913
        %3916 = vmatpush1.msra.mxu0 %v3910
        %3917 = vmatprep.subr.mxu0 0.0
        %3918 = vmatpush1.msra.mxu0 0.0
        %3919 = vmatprep.subr.mxu0 0.0
        %3920 = vmatpush1.msra.mxu0 0.0
        %3921 = vmatprep.subr.mxu0 0.0
        %3922 = vmatpush1.msra.mxu0 0.0
        %3923 = vmatprep.subr.mxu0 0.0
        %3924 = vmatpush1.msra.mxu0 0.0
        %3925 = vmatprep.subr.mxu0 0.0
        %3926 = vmatpush1.msra.mxu0 0.0
        %3927 = vmatprep.subr.mxu0 0.0
        %3928 = vmatpush1.msra.mxu0 0.0
        %3929 = vmatprep.subr.mxu0 0.0
        %3930 = vmatpush1.msra.mxu0 0.0
        %3931 = vmatprep.subr.mxu0 0.0
        %3932 = vmatpush1.msra.mxu0 0.0
        %3933 = vmatprep.subr.mxu0 0.0
        %3934 = vmatpush1.msra.mxu0 0.0
        %3935 = vmatprep.subr.mxu0 0.0
        %3936 = vmatpush1.msra.mxu0 0.0
        %3937 = vmatprep.subr.mxu0 0.0
        %3938 = vmatpush1.msra.mxu0 0.0
        %3939 = vmatprep.subr.mxu0 0.0
        %3940 = vmatpush1.msra.mxu0 0.0
        %3941 = vmatprep.subr.mxu0 0.0
        %3942 = vmatpush1.msra.mxu0 0.0
        %3943 = vmatprep.subr.mxu0 0.0
        %3944 = vmatpush1.msra.mxu0 0.0
        %3945 = vmatprep.subr.mxu0 0.0
        %3946 = vmatpush1.msra.mxu0 0.0
        %3947 = vmatprep.subr.mxu0 0.0
        %3948 = vmatpush1.msra.mxu0 0.0
        %3949 = vmatprep.subr.mxu0 0.0
        %3950 = vmatpush1.msra.mxu0 0.0
        %3951 = vmatprep.subr.mxu0 0.0
        %3952 = vmatpush1.msra.mxu0 0.0
        %3953 = vmatprep.subr.mxu0 0.0
        %3954 = vmatpush1.msra.mxu0 0.0
        %3955 = vmatprep.subr.mxu0 0.0
        %3956 = vmatpush1.msra.mxu0 0.0
        %3957 = vmatprep.subr.mxu0 0.0
        %3958 = vmatpush1.msra.mxu0 0.0
        %3959 = vmatprep.subr.mxu0 0.0
        %3960 = vmatpush1.msra.mxu0 0.0
        %3961 = vmatprep.subr.mxu0 0.0
        %3962 = vmatpush1.msra.mxu0 0.0
        %3963 = vmatprep.subr.mxu0 0.0
        %3964 = vmatpush1.msra.mxu0 0.0
        %3965 = vmatprep.subr.mxu0 0.0
        %3966 = vmatpush1.msra.mxu0 0.0
        %3967 = vmatprep.subr.mxu0 0.0
        %3968 = vmatpush1.msra.mxu0 0.0
        %3969 = vmatprep.subr.mxu0 0.0
        %3970 = vmatpush1.msra.mxu0 0.0
        %3971 = vmatprep.subr.mxu0 0.0
        %3972 = vmatpush1.msra.mxu0 0.0
        %3973 = vmatprep.subr.mxu0 0.0
        %3974 = vmatpush1.msra.mxu0 0.0
        %3975 = vmatprep.subr.mxu0 0.0
        %3976 = vmatpush1.msra.mxu0 0.0
        %3977 = vmatprep.subr.mxu0 0.0
        %3978 = vmatpush1.msra.mxu0 0.0
        %3979 = vmatprep.mubr.f32.mxu0 0.0
        %3980 = vmatmul.mubr.f32.gmra.mrb[0].mxu0 %v3907
        %v3981 = vpop.f32.mrb[0].mxu0
        %v3982 = vadd.f32 0.0, %v3981
        %v3983 = vpop.f32.mrb[0].mxu0
        %v3984 = vadd.f32 0.0, %v3983
        %3985 = vdwg.mxu0
        %v3986 = vadd.f32 %v3894, %v3982
        %v3987 = vadd.f32 %v3895, %v3984
        %s3988 = scalar_lea.vmem %s5, 4
        %v3989 = vld [vmem:[%s3988] sm:$0xf]
        %3991 = vset.pattern.permute.xlu0 0
        %3992 = vperm.xlu0 %3991, %v3989
        %v3993 = vpop.permute.xlu0 %3992
        %v3995 = vadd.f32 %v3986, %v3993
        %v3996 = vadd.f32 %v3987, %v3993
        %v3997 = vsel %vm462, %v3995, 0.0
        %v3998 = vsel %vm462, %v3996, 0.0
        %v3999 = vadd.f32 %v3997, %v3998
        %4000 = vadd.xlane.f32.xlu0 %v3999
        %v4001 = vpop.xlane.xlu0 %4000
        %v4002 = vmul.f32 %v4001, %v2164
        %s4003 = scalar_lea.vmem %s6, 2
        %v4004 = vld [vmem:[%s4003] sm:$0x3]
        %s4005 = scalar_lea.vmem %s7, 2
        %v4006 = vld [vmem:[%s4005] sm:$0x3]
        %v4008 = vsel %vm458, %v4004, 0
        %v4011 = vsel %vm462, %v4002, 0
        %4013 = vmatprep.subr.mxu0 0.0
        %4014 = vmatpush1.msra.mxu0 %v4011
        %4015 = vmatprep.subr.mxu0 0.0
        %4016 = vmatpush1.msra.mxu0 0.0
        %4017 = vmatprep.subr.mxu0 0.0
        %4018 = vmatpush1.msra.mxu0 0.0
        %4019 = vmatprep.subr.mxu0 0.0
        %4020 = vmatpush1.msra.mxu0 0.0
        %4021 = vmatprep.subr.mxu0 0.0
        %4022 = vmatpush1.msra.mxu0 0.0
        %4023 = vmatprep.subr.mxu0 0.0
        %4024 = vmatpush1.msra.mxu0 0.0
        %4025 = vmatprep.subr.mxu0 0.0
        %4026 = vmatpush1.msra.mxu0 0.0
        %4027 = vmatprep.subr.mxu0 0.0
        %4028 = vmatpush1.msra.mxu0 0.0
        %4029 = vmatprep.subr.mxu0 0.0
        %4030 = vmatpush1.msra.mxu0 0.0
        %4031 = vmatprep.subr.mxu0 0.0
        %4032 = vmatpush1.msra.mxu0 0.0
        %4033 = vmatprep.subr.mxu0 0.0
        %4034 = vmatpush1.msra.mxu0 0.0
        %4035 = vmatprep.subr.mxu0 0.0
        %4036 = vmatpush1.msra.mxu0 0.0
        %4037 = vmatprep.subr.mxu0 0.0
        %4038 = vmatpush1.msra.mxu0 0.0
        %4039 = vmatprep.subr.mxu0 0.0
        %4040 = vmatpush1.msra.mxu0 0.0
        %4041 = vmatprep.subr.mxu0 0.0
        %4042 = vmatpush1.msra.mxu0 0.0
        %4043 = vmatprep.subr.mxu0 0.0
        %4044 = vmatpush1.msra.mxu0 0.0
        %4045 = vmatprep.subr.mxu0 0.0
        %4046 = vmatpush1.msra.mxu0 0.0
        %4047 = vmatprep.subr.mxu0 0.0
        %4048 = vmatpush1.msra.mxu0 0.0
        %4049 = vmatprep.subr.mxu0 0.0
        %4050 = vmatpush1.msra.mxu0 0.0
        %4051 = vmatprep.subr.mxu0 0.0
        %4052 = vmatpush1.msra.mxu0 0.0
        %4053 = vmatprep.subr.mxu0 0.0
        %4054 = vmatpush1.msra.mxu0 0.0
        %4055 = vmatprep.subr.mxu0 0.0
        %4056 = vmatpush1.msra.mxu0 0.0
        %4057 = vmatprep.subr.mxu0 0.0
        %4058 = vmatpush1.msra.mxu0 0.0
        %4059 = vmatprep.subr.mxu0 0.0
        %4060 = vmatpush1.msra.mxu0 0.0
        %4061 = vmatprep.subr.mxu0 0.0
        %4062 = vmatpush1.msra.mxu0 0.0
        %4063 = vmatprep.subr.mxu0 0.0
        %4064 = vmatpush1.msra.mxu0 0.0
        %4065 = vmatprep.subr.mxu0 0.0
        %4066 = vmatpush1.msra.mxu0 0.0
        %4067 = vmatprep.subr.mxu0 0.0
        %4068 = vmatpush1.msra.mxu0 0.0
        %4069 = vmatprep.subr.mxu0 0.0
        %4070 = vmatpush1.msra.mxu0 0.0
        %4071 = vmatprep.subr.mxu0 0.0
        %4072 = vmatpush1.msra.mxu0 0.0
        %4073 = vmatprep.subr.mxu0 0.0
        %4074 = vmatpush1.msra.mxu0 0.0
        %4075 = vmatprep.subr.mxu0 0.0
        %4076 = vmatpush1.msra.mxu0 0.0
        %4077 = vmatprep.mubr.f32.mxu0 0.0
        %4078 = vmatmul.mubr.f32.gmra.mrb[0].mxu0 %v4008
        %v4079 = vpop.f32.mrb[0].mxu0
        %v4080 = vadd.f32 %v4006, %v4079
        %v4081 = vpop.f32.mrb[0].mxu0
        %4082 = vdwg.mxu0
        %v4083 = vmax.f32 %v4080, 0.0
        %s4084 = scalar_lea.vmem %s8, 4
        %v4085 = vld [vmem:[%s4084] sm:$0xf]
        %s4086 = scalar_lea.vmem %s9, 4
        %v4087 = vld [vmem:[%s4086] sm:$0xf]
        %v4089 = vsel %vm2247, %v4085, 0
        %v4092 = vsel %vm2251, %v4083, 0
        %4094 = vmatprep.subr.mxu0 0.0
        %4095 = vmatpush1.msra.mxu0 %v4092
        %4096 = vmatprep.subr.mxu0 0.0
        %4097 = vmatpush1.msra.mxu0 0.0
        %4098 = vmatprep.subr.mxu0 0.0
        %4099 = vmatpush1.msra.mxu0 0.0
        %4100 = vmatprep.subr.mxu0 0.0
        %4101 = vmatpush1.msra.mxu0 0.0
        %4102 = vmatprep.subr.mxu0 0.0
        %4103 = vmatpush1.msra.mxu0 0.0
        %4104 = vmatprep.subr.mxu0 0.0
        %4105 = vmatpush1.msra.mxu0 0.0
        %4106 = vmatprep.subr.mxu0 0.0
        %4107 = vmatpush1.msra.mxu0 0.0
        %4108 = vmatprep.subr.mxu0 0.0
        %4109 = vmatpush1.msra.mxu0 0.0
        %4110 = vmatprep.subr.mxu0 0.0
        %4111 = vmatpush1.msra.mxu0 0.0
        %4112 = vmatprep.subr.mxu0 0.0
        %4113 = vmatpush1.msra.mxu0 0.0
        %4114 = vmatprep.subr.mxu0 0.0
        %4115 = vmatpush1.msra.mxu0 0.0
        %4116 = vmatprep.subr.mxu0 0.0
        %4117 = vmatpush1.msra.mxu0 0.0
        %4118 = vmatprep.subr.mxu0 0.0
        %4119 = vmatpush1.msra.mxu0 0.0
        %4120 = vmatprep.subr.mxu0 0.0
        %4121 = vmatpush1.msra.mxu0 0.0
        %4122 = vmatprep.subr.mxu0 0.0
        %4123 = vmatpush1.msra.mxu0 0.0
        %4124 = vmatprep.subr.mxu0 0.0
        %4125 = vmatpush1.msra.mxu0 0.0
        %4126 = vmatprep.subr.mxu0 0.0
        %4127 = vmatpush1.msra.mxu0 0.0
        %4128 = vmatprep.subr.mxu0 0.0
        %4129 = vmatpush1.msra.mxu0 0.0
        %4130 = vmatprep.subr.mxu0 0.0
        %4131 = vmatpush1.msra.mxu0 0.0
        %4132 = vmatprep.subr.mxu0 0.0
        %4133 = vmatpush1.msra.mxu0 0.0
        %4134 = vmatprep.subr.mxu0 0.0
        %4135 = vmatpush1.msra.mxu0 0.0
        %4136 = vmatprep.subr.mxu0 0.0
        %4137 = vmatpush1.msra.mxu0 0.0
        %4138 = vmatprep.subr.mxu0 0.0
        %4139 = vmatpush1.msra.mxu0 0.0
        %4140 = vmatprep.subr.mxu0 0.0
        %4141 = vmatpush1.msra.mxu0 0.0
        %4142 = vmatprep.subr.mxu0 0.0
        %4143 = vmatpush1.msra.mxu0 0.0
        %4144 = vmatprep.subr.mxu0 0.0
        %4145 = vmatpush1.msra.mxu0 0.0
        %4146 = vmatprep.subr.mxu0 0.0
        %4147 = vmatpush1.msra.mxu0 0.0
        %4148 = vmatprep.subr.mxu0 0.0
        %4149 = vmatpush1.msra.mxu0 0.0
        %4150 = vmatprep.subr.mxu0 0.0
        %4151 = vmatpush1.msra.mxu0 0.0
        %4152 = vmatprep.subr.mxu0 0.0
        %4153 = vmatpush1.msra.mxu0 0.0
        %4154 = vmatprep.subr.mxu0 0.0
        %4155 = vmatpush1.msra.mxu0 0.0
        %4156 = vmatprep.subr.mxu0 0.0
        %4157 = vmatpush1.msra.mxu0 0.0
        %4158 = vmatprep.mubr.f32.mxu0 0.0
        %4159 = vmatmul.mubr.f32.gmra.mrb[0].mxu0 %v4089
        %v4160 = vpop.f32.mrb[0].mxu0
        %v4161 = vadd.f32 %v4087, %v4160
        %v4162 = vpop.f32.mrb[0].mxu0
        %4163 = vdwg.mxu0
        %v4164 = vxor.u32 %v4161, 2147483648
        %v4165 = vmul.f32 %v4164, 1.442695
        %v4166 = vpow.pop %v4165
        %v4167 = vadd.f32 %v4166, 1.0
        %v4168 = vrcp.pop %v4167
        %v4169 = vmul.f32 1.0, %v4168
        %4171 = vset.pattern.permute.xlu0 0
        %4172 = vperm.xlu0 %4171, %v4169
        %v4173 = vpop.permute.xlu0 %4172
        %v4175 = vmul.f32 %v3995, %v4173
        %v4176 = vmul.f32 %v3996, %v4173
        %v4179 = vcombine.low %v4175, %v4176
        %v4181 = vadd.f32 %v2343, %v4179
        %v4182 = vmax.f32 %v4181, 0.0
        %4183 = vst [vmem:[%s400] sm:$0xff] %v4182
        %v4184 = vand.u32 %v411, 4294901760
        %4185 = vmatprep.subr.mxu0 %v4184
        %v4186 = vand.u32 %v401, 4294901760
        %4187 = vmatpush1.xpose.msra.mxu0 %v4186
        %4188 = vmatprep.subr.mxu0 0.0
        %4189 = vmatpush1.xpose.msra.mxu0 0.0
        %4190 = vmatprep.subr.mxu0 0.0
        %4191 = vmatpush1.xpose.msra.mxu0 0.0
        %4192 = vmatprep.subr.mxu0 0.0
        %4193 = vmatpush1.xpose.msra.mxu0 0.0
        %4194 = vmatprep.subr.mxu0 0.0
        %4195 = vmatpush1.xpose.msra.mxu0 0.0
        %4196 = vmatprep.subr.mxu0 0.0
        %4197 = vmatpush1.xpose.msra.mxu0 0.0
        %4198 = vmatprep.subr.mxu0 0.0
        %4199 = vmatpush1.xpose.msra.mxu0 0.0
        %4200 = vmatprep.subr.mxu0 0.0
        %4201 = vmatpush1.xpose.msra.mxu0 0.0
        %4202 = vmatprep.subr.mxu0 0.0
        %4203 = vmatpush1.xpose.msra.mxu0 0.0
        %4204 = vmatprep.subr.mxu0 0.0
        %4205 = vmatpush1.xpose.msra.mxu0 0.0
        %4206 = vmatprep.subr.mxu0 0.0
        %4207 = vmatpush1.xpose.msra.mxu0 0.0
        %4208 = vmatprep.subr.mxu0 0.0
        %4209 = vmatpush1.xpose.msra.mxu0 0.0
        %4210 = vmatprep.subr.mxu0 0.0
        %4211 = vmatpush1.xpose.msra.mxu0 0.0
        %4212 = vmatprep.subr.mxu0 0.0
        %4213 = vmatpush1.xpose.msra.mxu0 0.0
        %4214 = vmatprep.subr.mxu0 0.0
        %4215 = vmatpush1.xpose.msra.mxu0 0.0
        %4216 = vmatprep.subr.mxu0 0.0
        %4217 = vmatpush1.xpose.msra.mxu0 0.0
        %4218 = vmatprep.subr.mxu0 0.0
        %4219 = vmatpush1.xpose.msra.mxu0 0.0
        %4220 = vmatprep.subr.mxu0 0.0
        %4221 = vmatpush1.xpose.msra.mxu0 0.0
        %4222 = vmatprep.subr.mxu0 0.0
        %4223 = vmatpush1.xpose.msra.mxu0 0.0
        %4224 = vmatprep.subr.mxu0 0.0
        %4225 = vmatpush1.xpose.msra.mxu0 0.0
        %4226 = vmatprep.subr.mxu0 0.0
        %4227 = vmatpush1.xpose.msra.mxu0 0.0
        %4228 = vmatprep.subr.mxu0 0.0
        %4229 = vmatpush1.xpose.msra.mxu0 0.0
        %4230 = vmatprep.subr.mxu0 0.0
        %4231 = vmatpush1.xpose.msra.mxu0 0.0
        %4232 = vmatprep.subr.mxu0 0.0
        %4233 = vmatpush1.xpose.msra.mxu0 0.0
        %4234 = vmatprep.subr.mxu0 0.0
        %4235 = vmatpush1.xpose.msra.mxu0 0.0
        %4236 = vmatprep.subr.mxu0 0.0
        %4237 = vmatpush1.xpose.msra.mxu0 0.0
        %4238 = vmatprep.subr.mxu0 0.0
        %4239 = vmatpush1.xpose.msra.mxu0 0.0
        %4240 = vmatprep.subr.mxu0 0.0
        %4241 = vmatpush1.xpose.msra.mxu0 0.0
        %4242 = vmatprep.subr.mxu0 0.0
        %4243 = vmatpush1.xpose.msra.mxu0 0.0
        %4244 = vmatprep.subr.mxu0 0.0
        %4245 = vmatpush1.xpose.msra.mxu0 0.0
        %4246 = vmatprep.subr.mxu0 0.0
        %4247 = vmatpush1.xpose.msra.mxu0 0.0
        %4248 = vmatprep.subr.mxu0 0.0
        %4249 = vmatpush1.xpose.msra.mxu0 0.0
        %v4250 = vand.u32 %v411, 4294901760
        %v4251 = vsub.f32 %v411, %v4250
        %v4252 = vand.u32 %v4251, 4294901760
        %v4253 = vsub.f32 %v4251, %v4252
        %v4254 = vand.u32 %v4253, 4294901760
        %4255 = vmatprep.mubr.f32.mxu0 %v4254
        %v4256 = vand.u32 %v401, 4294901760
        %v4257 = vsub.f32 %v401, %v4256
        %v4258 = vand.u32 %v4257, 4294901760
        %v4259 = vsub.f32 %v4257, %v4258
        %v4260 = vand.u32 %v4259, 4294901760
        %4261 = vmatmul.mubr.f32.gmra.mrb[0].mxu0 %v4260
        %v4262 = vpop.f32.mrb[0].mxu0
        %v4263 = vadd.f32 0.0, %v4262
        %v4264 = vpop.f32.mrb[0].mxu0
        %4265 = vdwg.mxu0
        %v4266 = vand.u32 %v411, 4294901760
        %v4267 = vsub.f32 %v411, %v4266
        %v4268 = vand.u32 %v4267, 4294901760
        %v4269 = vsub.f32 %v4267, %v4268
        %v4270 = vand.u32 %v4269, 4294901760
        %4271 = vmatprep.subr.mxu0 %v4270
        %v4272 = vand.u32 %v401, 4294901760
        %v4273 = vsub.f32 %v401, %v4272
        %v4274 = vand.u32 %v4273, 4294901760
        %v4275 = vsub.f32 %v4273, %v4274
        %v4276 = vand.u32 %v4275, 4294901760
        %4277 = vmatpush1.xpose.msra.mxu0 %v4276
        %4278 = vmatprep.subr.mxu0 0.0
        %4279 = vmatpush1.xpose.msra.mxu0 0.0
        %4280 = vmatprep.subr.mxu0 0.0
        %4281 = vmatpush1.xpose.msra.mxu0 0.0
        %4282 = vmatprep.subr.mxu0 0.0
        %4283 = vmatpush1.xpose.msra.mxu0 0.0
        %4284 = vmatprep.subr.mxu0 0.0
        %4285 = vmatpush1.xpose.msra.mxu0 0.0
        %4286 = vmatprep.subr.mxu0 0.0
        %4287 = vmatpush1.xpose.msra.mxu0 0.0
        %4288 = vmatprep.subr.mxu0 0.0
        %4289 = vmatpush1.xpose.msra.mxu0 0.0
        %4290 = vmatprep.subr.mxu0 0.0
        %4291 = vmatpush1.xpose.msra.mxu0 0.0
        %4292 = vmatprep.subr.mxu0 0.0
        %4293 = vmatpush1.xpose.msra.mxu0 0.0
        %4294 = vmatprep.subr.mxu0 0.0
        %4295 = vmatpush1.xpose.msra.mxu0 0.0
        %4296 = vmatprep.subr.mxu0 0.0
        %4297 = vmatpush1.xpose.msra.mxu0 0.0
        %4298 = vmatprep.subr.mxu0 0.0
        %4299 = vmatpush1.xpose.msra.mxu0 0.0
        %4300 = vmatprep.subr.mxu0 0.0
        %4301 = vmatpush1.xpose.msra.mxu0 0.0
        %4302 = vmatprep.subr.mxu0 0.0
        %4303 = vmatpush1.xpose.msra.mxu0 0.0
        %4304 = vmatprep.subr.mxu0 0.0
        %4305 = vmatpush1.xpose.msra.mxu0 0.0
        %4306 = vmatprep.subr.mxu0 0.0
        %4307 = vmatpush1.xpose.msra.mxu0 0.0
        %4308 = vmatprep.subr.mxu0 0.0
        %4309 = vmatpush1.xpose.msra.mxu0 0.0
        %4310 = vmatprep.subr.mxu0 0.0
        %4311 = vmatpush1.xpose.msra.mxu0 0.0
        %4312 = vmatprep.subr.mxu0 0.0
        %4313 = vmatpush1.xpose.msra.mxu0 0.0
        %4314 = vmatprep.subr.mxu0 0.0
        %4315 = vmatpush1.xpose.msra.mxu0 0.0
        %4316 = vmatprep.subr.mxu0 0.0
        %4317 = vmatpush1.xpose.msra.mxu0 0.0
        %4318 = vmatprep.subr.mxu0 0.0
        %4319 = vmatpush1.xpose.msra.mxu0 0.0
        %4320 = vmatprep.subr.mxu0 0.0
        %4321 = vmatpush1.xpose.msra.mxu0 0.0
        %4322 = vmatprep.subr.mxu0 0.0
        %4323 = vmatpush1.xpose.msra.mxu0 0.0
        %4324 = vmatprep.subr.mxu0 0.0
        %4325 = vmatpush1.xpose.msra.mxu0 0.0
        %4326 = vmatprep.subr.mxu0 0.0
        %4327 = vmatpush1.xpose.msra.mxu0 0.0
        %4328 = vmatprep.subr.mxu0 0.0
        %4329 = vmatpush1.xpose.msra.mxu0 0.0
        %4330 = vmatprep.subr.mxu0 0.0
        %4331 = vmatpush1.xpose.msra.mxu0 0.0
        %4332 = vmatprep.subr.mxu0 0.0
        %4333 = vmatpush1.xpose.msra.mxu0 0.0
        %4334 = vmatprep.subr.mxu0 0.0
        %4335 = vmatpush1.xpose.msra.mxu0 0.0
        %4336 = vmatprep.subr.mxu0 0.0
        %4337 = vmatpush1.xpose.msra.mxu0 0.0
        %4338 = vmatprep.subr.mxu0 0.0
        %4339 = vmatpush1.xpose.msra.mxu0 0.0
        %v4340 = vand.u32 %v411, 4294901760
        %4341 = vmatprep.mubr.f32.mxu0 %v4340
        %v4342 = vand.u32 %v401, 4294901760
        %4343 = vmatmul.mubr.f32.gmra.mrb[0].mxu0 %v4342
        %v4344 = vpop.f32.mrb[0].mxu0
        %v4345 = vadd.f32 %v4263, %v4344
        %v4346 = vpop.f32.mrb[0].mxu0
        %4347 = vdwg.mxu0
        %v4348 = vand.u32 %v411, 4294901760
        %v4349 = vsub.f32 %v411, %v4348
        %4350 = vmatprep.subr.mxu0 %v4349
        %v4351 = vand.u32 %v401, 4294901760
        %v4352 = vsub.f32 %v401, %v4351
        %4353 = vmatpush1.xpose.msra.mxu0 %v4352
        %4354 = vmatprep.subr.mxu0 0.0
        %4355 = vmatpush1.xpose.msra.mxu0 0.0
        %4356 = vmatprep.subr.mxu0 0.0
        %4357 = vmatpush1.xpose.msra.mxu0 0.0
        %4358 = vmatprep.subr.mxu0 0.0
        %4359 = vmatpush1.xpose.msra.mxu0 0.0
        %4360 = vmatprep.subr.mxu0 0.0
        %4361 = vmatpush1.xpose.msra.mxu0 0.0
        %4362 = vmatprep.subr.mxu0 0.0
        %4363 = vmatpush1.xpose.msra.mxu0 0.0
        %4364 = vmatprep.subr.mxu0 0.0
        %4365 = vmatpush1.xpose.msra.mxu0 0.0
        %4366 = vmatprep.subr.mxu0 0.0
        %4367 = vmatpush1.xpose.msra.mxu0 0.0
        %4368 = vmatprep.subr.mxu0 0.0
        %4369 = vmatpush1.xpose.msra.mxu0 0.0
        %4370 = vmatprep.subr.mxu0 0.0
        %4371 = vmatpush1.xpose.msra.mxu0 0.0
        %4372 = vmatprep.subr.mxu0 0.0
        %4373 = vmatpush1.xpose.msra.mxu0 0.0
        %4374 = vmatprep.subr.mxu0 0.0
        %4375 = vmatpush1.xpose.msra.mxu0 0.0
        %4376 = vmatprep.subr.mxu0 0.0
        %4377 = vmatpush1.xpose.msra.mxu0 0.0
        %4378 = vmatprep.subr.mxu0 0.0
        %4379 = vmatpush1.xpose.msra.mxu0 0.0
        %4380 = vmatprep.subr.mxu0 0.0
        %4381 = vmatpush1.xpose.msra.mxu0 0.0
        %4382 = vmatprep.subr.mxu0 0.0
        %4383 = vmatpush1.xpose.msra.mxu0 0.0
        %4384 = vmatprep.subr.mxu0 0.0
        %4385 = vmatpush1.xpose.msra.mxu0 0.0
        %4386 = vmatprep.subr.mxu0 0.0
        %4387 = vmatpush1.xpose.msra.mxu0 0.0
        %4388 = vmatprep.subr.mxu0 0.0
        %4389 = vmatpush1.xpose.msra.mxu0 0.0
        %4390 = vmatprep.subr.mxu0 0.0
        %4391 = vmatpush1.xpose.msra.mxu0 0.0
        %4392 = vmatprep.subr.mxu0 0.0
        %4393 = vmatpush1.xpose.msra.mxu0 0.0
        %4394 = vmatprep.subr.mxu0 0.0
        %4395 = vmatpush1.xpose.msra.mxu0 0.0
        %4396 = vmatprep.subr.mxu0 0.0
        %4397 = vmatpush1.xpose.msra.mxu0 0.0
        %4398 = vmatprep.subr.mxu0 0.0
        %4399 = vmatpush1.xpose.msra.mxu0 0.0
        %4400 = vmatprep.subr.mxu0 0.0
        %4401 = vmatpush1.xpose.msra.mxu0 0.0
        %4402 = vmatprep.subr.mxu0 0.0
        %4403 = vmatpush1.xpose.msra.mxu0 0.0
        %4404 = vmatprep.subr.mxu0 0.0
        %4405 = vmatpush1.xpose.msra.mxu0 0.0
        %4406 = vmatprep.subr.mxu0 0.0
        %4407 = vmatpush1.xpose.msra.mxu0 0.0
        %4408 = vmatprep.subr.mxu0 0.0
        %4409 = vmatpush1.xpose.msra.mxu0 0.0
        %4410 = vmatprep.subr.mxu0 0.0
        %4411 = vmatpush1.xpose.msra.mxu0 0.0
        %4412 = vmatprep.subr.mxu0 0.0
        %4413 = vmatpush1.xpose.msra.mxu0 0.0
        %4414 = vmatprep.subr.mxu0 0.0
        %4415 = vmatpush1.xpose.msra.mxu0 0.0
        %v4416 = vand.u32 %v411, 4294901760
        %v4417 = vsub.f32 %v411, %v4416
        %4418 = vmatprep.mubr.f32.mxu0 %v4417
        %v4419 = vand.u32 %v401, 4294901760
        %v4420 = vsub.f32 %v401, %v4419
        %4421 = vmatmul.mubr.f32.gmra.mrb[0].mxu0 %v4420
        %v4422 = vpop.f32.mrb[0].mxu0
        %v4423 = vadd.f32 %v4345, %v4422
        %v4424 = vpop.f32.mrb[0].mxu0
        %4425 = vdwg.mxu0
        %v4426 = vand.u32 %v411, 4294901760
        %4427 = vmatprep.subr.mxu0 %v4426
        %v4428 = vand.u32 %v401, 4294901760
        %4429 = vmatpush1.xpose.msra.mxu0 %v4428
        %4430 = vmatprep.subr.mxu0 0.0
        %4431 = vmatpush1.xpose.msra.mxu0 0.0
        %4432 = vmatprep.subr.mxu0 0.0
        %4433 = vmatpush1.xpose.msra.mxu0 0.0
        %4434 = vmatprep.subr.mxu0 0.0
        %4435 = vmatpush1.xpose.msra.mxu0 0.0
        %4436 = vmatprep.subr.mxu0 0.0
        %4437 = vmatpush1.xpose.msra.mxu0 0.0
        %4438 = vmatprep.subr.mxu0 0.0
        %4439 = vmatpush1.xpose.msra.mxu0 0.0
        %4440 = vmatprep.subr.mxu0 0.0
        %4441 = vmatpush1.xpose.msra.mxu0 0.0
        %4442 = vmatprep.subr.mxu0 0.0
        %4443 = vmatpush1.xpose.msra.mxu0 0.0
        %4444 = vmatprep.subr.mxu0 0.0
        %4445 = vmatpush1.xpose.msra.mxu0 0.0
        %4446 = vmatprep.subr.mxu0 0.0
        %4447 = vmatpush1.xpose.msra.mxu0 0.0
        %4448 = vmatprep.subr.mxu0 0.0
        %4449 = vmatpush1.xpose.msra.mxu0 0.0
        %4450 = vmatprep.subr.mxu0 0.0
        %4451 = vmatpush1.xpose.msra.mxu0 0.0
        %4452 = vmatprep.subr.mxu0 0.0
        %4453 = vmatpush1.xpose.msra.mxu0 0.0
        %4454 = vmatprep.subr.mxu0 0.0
        %4455 = vmatpush1.xpose.msra.mxu0 0.0
        %4456 = vmatprep.subr.mxu0 0.0
        %4457 = vmatpush1.xpose.msra.mxu0 0.0
        %4458 = vmatprep.subr.mxu0 0.0
        %4459 = vmatpush1.xpose.msra.mxu0 0.0
        %4460 = vmatprep.subr.mxu0 0.0
        %4461 = vmatpush1.xpose.msra.mxu0 0.0
        %4462 = vmatprep.subr.mxu0 0.0
        %4463 = vmatpush1.xpose.msra.mxu0 0.0
        %4464 = vmatprep.subr.mxu0 0.0
        %4465 = vmatpush1.xpose.msra.mxu0 0.0
        %4466 = vmatprep.subr.mxu0 0.0
        %4467 = vmatpush1.xpose.msra.mxu0 0.0
        %4468 = vmatprep.subr.mxu0 0.0
        %4469 = vmatpush1.xpose.msra.mxu0 0.0
        %4470 = vmatprep.subr.mxu0 0.0
        %4471 = vmatpush1.xpose.msra.mxu0 0.0
        %4472 = vmatprep.subr.mxu0 0.0
        %4473 = vmatpush1.xpose.msra.mxu0 0.0
        %4474 = vmatprep.subr.mxu0 0.0
        %4475 = vmatpush1.xpose.msra.mxu0 0.0
        %4476 = vmatprep.subr.mxu0 0.0
        %4477 = vmatpush1.xpose.msra.mxu0 0.0
        %4478 = vmatprep.subr.mxu0 0.0
        %4479 = vmatpush1.xpose.msra.mxu0 0.0
        %4480 = vmatprep.subr.mxu0 0.0
        %4481 = vmatpush1.xpose.msra.mxu0 0.0
        %4482 = vmatprep.subr.mxu0 0.0
        %4483 = vmatpush1.xpose.msra.mxu0 0.0
        %4484 = vmatprep.subr.mxu0 0.0
        %4485 = vmatpush1.xpose.msra.mxu0 0.0
        %4486 = vmatprep.subr.mxu0 0.0
        %4487 = vmatpush1.xpose.msra.mxu0 0.0
        %4488 = vmatprep.subr.mxu0 0.0
        %4489 = vmatpush1.xpose.msra.mxu0 0.0
        %4490 = vmatprep.subr.mxu0 0.0
        %4491 = vmatpush1.xpose.msra.mxu0 0.0
        %v4492 = vand.u32 %v411, 4294901760
        %v4493 = vsub.f32 %v411, %v4492
        %v4494 = vand.u32 %v4493, 4294901760
        %4495 = vmatprep.mubr.f32.mxu0 %v4494
        %v4496 = vand.u32 %v401, 4294901760
        %v4497 = vsub.f32 %v401, %v4496
        %v4498 = vand.u32 %v4497, 4294901760
        %4499 = vmatmul.mubr.f32.gmra.mrb[0].mxu0 %v4498
        %v4500 = vpop.f32.mrb[0].mxu0
        %v4501 = vadd.f32 %v4423, %v4500
        %v4502 = vpop.f32.mrb[0].mxu0
        %4503 = vdwg.mxu0
        %v4504 = vand.u32 %v411, 4294901760
        %v4505 = vsub.f32 %v411, %v4504
        %v4506 = vand.u32 %v4505, 4294901760
        %4507 = vmatprep.subr.mxu0 %v4506
        %v4508 = vand.u32 %v401, 4294901760
        %v4509 = vsub.f32 %v401, %v4508
        %v4510 = vand.u32 %v4509, 4294901760
        %4511 = vmatpush1.xpose.msra.mxu0 %v4510
        %4512 = vmatprep.subr.mxu0 0.0
        %4513 = vmatpush1.xpose.msra.mxu0 0.0
        %4514 = vmatprep.subr.mxu0 0.0
        %4515 = vmatpush1.xpose.msra.mxu0 0.0
        %4516 = vmatprep.subr.mxu0 0.0
        %4517 = vmatpush1.xpose.msra.mxu0 0.0
        %4518 = vmatprep.subr.mxu0 0.0
        %4519 = vmatpush1.xpose.msra.mxu0 0.0
        %4520 = vmatprep.subr.mxu0 0.0
        %4521 = vmatpush1.xpose.msra.mxu0 0.0
        %4522 = vmatprep.subr.mxu0 0.0
        %4523 = vmatpush1.xpose.msra.mxu0 0.0
        %4524 = vmatprep.subr.mxu0 0.0
        %4525 = vmatpush1.xpose.msra.mxu0 0.0
        %4526 = vmatprep.subr.mxu0 0.0
        %4527 = vmatpush1.xpose.msra.mxu0 0.0
        %4528 = vmatprep.subr.mxu0 0.0
        %4529 = vmatpush1.xpose.msra.mxu0 0.0
        %4530 = vmatprep.subr.mxu0 0.0
        %4531 = vmatpush1.xpose.msra.mxu0 0.0
        %4532 = vmatprep.subr.mxu0 0.0
        %4533 = vmatpush1.xpose.msra.mxu0 0.0
        %4534 = vmatprep.subr.mxu0 0.0
        %4535 = vmatpush1.xpose.msra.mxu0 0.0
        %4536 = vmatprep.subr.mxu0 0.0
        %4537 = vmatpush1.xpose.msra.mxu0 0.0
        %4538 = vmatprep.subr.mxu0 0.0
        %4539 = vmatpush1.xpose.msra.mxu0 0.0
        %4540 = vmatprep.subr.mxu0 0.0
        %4541 = vmatpush1.xpose.msra.mxu0 0.0
        %4542 = vmatprep.subr.mxu0 0.0
        %4543 = vmatpush1.xpose.msra.mxu0 0.0
        %4544 = vmatprep.subr.mxu0 0.0
        %4545 = vmatpush1.xpose.msra.mxu0 0.0
        %4546 = vmatprep.subr.mxu0 0.0
        %4547 = vmatpush1.xpose.msra.mxu0 0.0
        %4548 = vmatprep.subr.mxu0 0.0
        %4549 = vmatpush1.xpose.msra.mxu0 0.0
        %4550 = vmatprep.subr.mxu0 0.0
        %4551 = vmatpush1.xpose.msra.mxu0 0.0
        %4552 = vmatprep.subr.mxu0 0.0
        %4553 = vmatpush1.xpose.msra.mxu0 0.0
        %4554 = vmatprep.subr.mxu0 0.0
        %4555 = vmatpush1.xpose.msra.mxu0 0.0
        %4556 = vmatprep.subr.mxu0 0.0
        %4557 = vmatpush1.xpose.msra.mxu0 0.0
        %4558 = vmatprep.subr.mxu0 0.0
        %4559 = vmatpush1.xpose.msra.mxu0 0.0
        %4560 = vmatprep.subr.mxu0 0.0
        %4561 = vmatpush1.xpose.msra.mxu0 0.0
        %4562 = vmatprep.subr.mxu0 0.0
        %4563 = vmatpush1.xpose.msra.mxu0 0.0
        %4564 = vmatprep.subr.mxu0 0.0
        %4565 = vmatpush1.xpose.msra.mxu0 0.0
        %4566 = vmatprep.subr.mxu0 0.0
        %4567 = vmatpush1.xpose.msra.mxu0 0.0
        %4568 = vmatprep.subr.mxu0 0.0
        %4569 = vmatpush1.xpose.msra.mxu0 0.0
        %4570 = vmatprep.subr.mxu0 0.0
        %4571 = vmatpush1.xpose.msra.mxu0 0.0
        %4572 = vmatprep.subr.mxu0 0.0
        %4573 = vmatpush1.xpose.msra.mxu0 0.0
        %v4574 = vand.u32 %v411, 4294901760
        %4575 = vmatprep.mubr.f32.mxu0 %v4574
        %v4576 = vand.u32 %v401, 4294901760
        %4577 = vmatmul.mubr.f32.gmra.mrb[0].mxu0 %v4576
        %v4578 = vpop.f32.mrb[0].mxu0
        %v4579 = vadd.f32 %v4501, %v4578
        %v4580 = vpop.f32.mrb[0].mxu0
        %4581 = vdwg.mxu0
        %v4582 = vand.u32 %v411, 4294901760
        %4583 = vmatprep.subr.mxu0 %v4582
        %v4584 = vand.u32 %v401, 4294901760
        %4585 = vmatpush1.xpose.msra.mxu0 %v4584
        %4586 = vmatprep.subr.mxu0 0.0
        %4587 = vmatpush1.xpose.msra.mxu0 0.0
        %4588 = vmatprep.subr.mxu0 0.0
        %4589 = vmatpush1.xpose.msra.mxu0 0.0
        %4590 = vmatprep.subr.mxu0 0.0
        %4591 = vmatpush1.xpose.msra.mxu0 0.0
        %4592 = vmatprep.subr.mxu0 0.0
        %4593 = vmatpush1.xpose.msra.mxu0 0.0
        %4594 = vmatprep.subr.mxu0 0.0
        %4595 = vmatpush1.xpose.msra.mxu0 0.0
        %4596 = vmatprep.subr.mxu0 0.0
        %4597 = vmatpush1.xpose.msra.mxu0 0.0
        %4598 = vmatprep.subr.mxu0 0.0
        %4599 = vmatpush1.xpose.msra.mxu0 0.0
        %4600 = vmatprep.subr.mxu0 0.0
        %4601 = vmatpush1.xpose.msra.mxu0 0.0
        %4602 = vmatprep.subr.mxu0 0.0
        %4603 = vmatpush1.xpose.msra.mxu0 0.0
        %4604 = vmatprep.subr.mxu0 0.0
        %4605 = vmatpush1.xpose.msra.mxu0 0.0
        %4606 = vmatprep.subr.mxu0 0.0
        %4607 = vmatpush1.xpose.msra.mxu0 0.0
        %4608 = vmatprep.subr.mxu0 0.0
        %4609 = vmatpush1.xpose.msra.mxu0 0.0
        %4610 = vmatprep.subr.mxu0 0.0
        %4611 = vmatpush1.xpose.msra.mxu0 0.0
        %4612 = vmatprep.subr.mxu0 0.0
        %4613 = vmatpush1.xpose.msra.mxu0 0.0
        %4614 = vmatprep.subr.mxu0 0.0
        %4615 = vmatpush1.xpose.msra.mxu0 0.0
        %4616 = vmatprep.subr.mxu0 0.0
        %4617 = vmatpush1.xpose.msra.mxu0 0.0
        %4618 = vmatprep.subr.mxu0 0.0
        %4619 = vmatpush1.xpose.msra.mxu0 0.0
        %4620 = vmatprep.subr.mxu0 0.0
        %4621 = vmatpush1.xpose.msra.mxu0 0.0
        %4622 = vmatprep.subr.mxu0 0.0
        %4623 = vmatpush1.xpose.msra.mxu0 0.0
        %4624 = vmatprep.subr.mxu0 0.0
        %4625 = vmatpush1.xpose.msra.mxu0 0.0
        %4626 = vmatprep.subr.mxu0 0.0
        %4627 = vmatpush1.xpose.msra.mxu0 0.0
        %4628 = vmatprep.subr.mxu0 0.0
        %4629 = vmatpush1.xpose.msra.mxu0 0.0
        %4630 = vmatprep.subr.mxu0 0.0
        %4631 = vmatpush1.xpose.msra.mxu0 0.0
        %4632 = vmatprep.subr.mxu0 0.0
        %4633 = vmatpush1.xpose.msra.mxu0 0.0
        %4634 = vmatprep.subr.mxu0 0.0
        %4635 = vmatpush1.xpose.msra.mxu0 0.0
        %4636 = vmatprep.subr.mxu0 0.0
        %4637 = vmatpush1.xpose.msra.mxu0 0.0
        %4638 = vmatprep.subr.mxu0 0.0
        %4639 = vmatpush1.xpose.msra.mxu0 0.0
        %4640 = vmatprep.subr.mxu0 0.0
        %4641 = vmatpush1.xpose.msra.mxu0 0.0
        %4642 = vmatprep.subr.mxu0 0.0
        %4643 = vmatpush1.xpose.msra.mxu0 0.0
        %4644 = vmatprep.subr.mxu0 0.0
        %4645 = vmatpush1.xpose.msra.mxu0 0.0
        %4646 = vmatprep.subr.mxu0 0.0
        %4647 = vmatpush1.xpose.msra.mxu0 0.0
        %v4648 = vand.u32 %v411, 4294901760
        %4649 = vmatprep.mubr.f32.mxu0 %v4648
        %v4650 = vand.u32 %v401, 4294901760
        %4651 = vmatmul.mubr.f32.gmra.mrb[0].mxu0 %v4650
        %v4652 = vpop.f32.mrb[0].mxu0
        %v4653 = vadd.f32 %v4579, %v4652
        %v4654 = vpop.f32.mrb[0].mxu0
        %4655 = vdwg.mxu0
        %vm4656 = vcmask 27648
        %v4657 = vsel %vm4656, %v4653, inf
        %4658 = vmin.xlane.f32.xlu0 %v4657
        %v4659 = vpop.xlane.xlu0 %4658
        %v4660 = vsub.f32 %v4659, %v4653
        %v4661 = vmul.f32 %v4660, 1.442695
        %v4662 = vpow.pop %v4661
        %v4663 = vsel %vm4656, %v4662, 0.0
        %4664 = vadd.xlane.f32.xlu0 %v4663
        %v4665 = vpop.xlane.xlu0 %4664
        %v4666 = vrcp.pop %v4665
        %v4667 = vmul.f32 %v4662, %v4666
        %v4669 = vsel %vm458, %v4667, 0
        %4671 = vmatprep.subr.mxu0 %v835
        %4672 = vmatpush1.msra.mxu0 %v833
        %4673 = vmatprep.subr.mxu0 0.0
        %4674 = vmatpush1.msra.mxu0 0.0
        %4675 = vmatprep.subr.mxu0 0.0
        %4676 = vmatpush1.msra.mxu0 0.0
        %4677 = vmatprep.subr.mxu0 0.0
        %4678 = vmatpush1.msra.mxu0 0.0
        %4679 = vmatprep.subr.mxu0 0.0
        %4680 = vmatpush1.msra.mxu0 0.0
        %4681 = vmatprep.subr.mxu0 0.0
        %4682 = vmatpush1.msra.mxu0 0.0
        %4683 = vmatprep.subr.mxu0 0.0
        %4684 = vmatpush1.msra.mxu0 0.0
        %4685 = vmatprep.subr.mxu0 0.0
        %4686 = vmatpush1.msra.mxu0 0.0
        %4687 = vmatprep.subr.mxu0 0.0
        %4688 = vmatpush1.msra.mxu0 0.0
        %4689 = vmatprep.subr.mxu0 0.0
        %4690 = vmatpush1.msra.mxu0 0.0
        %4691 = vmatprep.subr.mxu0 0.0
        %4692 = vmatpush1.msra.mxu0 0.0
        %4693 = vmatprep.subr.mxu0 0.0
        %4694 = vmatpush1.msra.mxu0 0.0
        %4695 = vmatprep.subr.mxu0 0.0
        %4696 = vmatpush1.msra.mxu0 0.0
        %4697 = vmatprep.subr.mxu0 0.0
        %4698 = vmatpush1.msra.mxu0 0.0
        %4699 = vmatprep.subr.mxu0 0.0
        %4700 = vmatpush1.msra.mxu0 0.0
        %4701 = vmatprep.subr.mxu0 0.0
        %4702 = vmatpush1.msra.mxu0 0.0
        %4703 = vmatprep.subr.mxu0 0.0
        %4704 = vmatpush1.msra.mxu0 0.0
        %4705 = vmatprep.subr.mxu0 0.0
        %4706 = vmatpush1.msra.mxu0 0.0
        %4707 = vmatprep.subr.mxu0 0.0
        %4708 = vmatpush1.msra.mxu0 0.0
        %4709 = vmatprep.subr.mxu0 0.0
        %4710 = vmatpush1.msra.mxu0 0.0
        %4711 = vmatprep.subr.mxu0 0.0
        %4712 = vmatpush1.msra.mxu0 0.0
        %4713 = vmatprep.subr.mxu0 0.0
        %4714 = vmatpush1.msra.mxu0 0.0
        %4715 = vmatprep.subr.mxu0 0.0
        %4716 = vmatpush1.msra.mxu0 0.0
        %4717 = vmatprep.subr.mxu0 0.0
        %4718 = vmatpush1.msra.mxu0 0.0
        %4719 = vmatprep.subr.mxu0 0.0
        %4720 = vmatpush1.msra.mxu0 0.0
        %4721 = vmatprep.subr.mxu0 0.0
        %4722 = vmatpush1.msra.mxu0 0.0
        %4723 = vmatprep.subr.mxu0 0.0
        %4724 = vmatpush1.msra.mxu0 0.0
        %4725 = vmatprep.subr.mxu0 0.0
        %4726 = vmatpush1.msra.mxu0 0.0
        %4727 = vmatprep.subr.mxu0 0.0
        %4728 = vmatpush1.msra.mxu0 0.0
        %4729 = vmatprep.subr.mxu0 0.0
        %4730 = vmatpush1.msra.mxu0 0.0
        %4731 = vmatprep.subr.mxu0 0.0
        %4732 = vmatpush1.msra.mxu0 0.0
        %4733 = vmatprep.subr.mxu0 0.0
        %4734 = vmatpush1.msra.mxu0 0.0
        %4735 = vmatprep.mubr.f32.mxu0 0.0
        %4736 = vmatmul.mubr.f32.gmra.mrb[0].mxu0 %v4669
        %v4737 = vpop.f32.mrb[0].mxu0
        %v4738 = vadd.f32 0.0, %v4737
        %v4739 = vpop.f32.mrb[0].mxu0
        %v4740 = vadd.f32 0.0, %v4739
        %4741 = vdwg.mxu0
        %s4742 = sld [smem:[#allocation2]]
        %v4743 = vstv %s4742
        %v4744 = vmul.f32 %v4743, %v4738
        %v4745 = vmul.f32 %v4743, %v4740
        %v4746 = vadd.f32 %v4744, %v401
        %v4747 = vadd.f32 %v4745, %v411
        %v4748 = vand.u32 %v4747, 4294901760
        %4749 = vmatprep.subr.mxu0 %v4748
        %v4750 = vand.u32 %v4746, 4294901760
        %4751 = vmatpush1.xpose.msra.mxu0 %v4750
        %4752 = vmatprep.subr.mxu0 0.0
        %4753 = vmatpush1.xpose.msra.mxu0 0.0
        %4754 = vmatprep.subr.mxu0 0.0
        %4755 = vmatpush1.xpose.msra.mxu0 0.0
        %4756 = vmatprep.subr.mxu0 0.0
        %4757 = vmatpush1.xpose.msra.mxu0 0.0
        %4758 = vmatprep.subr.mxu0 0.0
        %4759 = vmatpush1.xpose.msra.mxu0 0.0
        %4760 = vmatprep.subr.mxu0 0.0
        %4761 = vmatpush1.xpose.msra.mxu0 0.0
        %4762 = vmatprep.subr.mxu0 0.0
        %4763 = vmatpush1.xpose.msra.mxu0 0.0
        %4764 = vmatprep.subr.mxu0 0.0
        %4765 = vmatpush1.xpose.msra.mxu0 0.0
        %4766 = vmatprep.subr.mxu0 0.0
        %4767 = vmatpush1.xpose.msra.mxu0 0.0
        %4768 = vmatprep.subr.mxu0 0.0
        %4769 = vmatpush1.xpose.msra.mxu0 0.0
        %4770 = vmatprep.subr.mxu0 0.0
        %4771 = vmatpush1.xpose.msra.mxu0 0.0
        %4772 = vmatprep.subr.mxu0 0.0
        %4773 = vmatpush1.xpose.msra.mxu0 0.0
        %4774 = vmatprep.subr.mxu0 0.0
        %4775 = vmatpush1.xpose.msra.mxu0 0.0
        %4776 = vmatprep.subr.mxu0 0.0
        %4777 = vmatpush1.xpose.msra.mxu0 0.0
        %4778 = vmatprep.subr.mxu0 0.0
        %4779 = vmatpush1.xpose.msra.mxu0 0.0
        %4780 = vmatprep.subr.mxu0 0.0
        %4781 = vmatpush1.xpose.msra.mxu0 0.0
        %4782 = vmatprep.subr.mxu0 0.0
        %4783 = vmatpush1.xpose.msra.mxu0 0.0
        %4784 = vmatprep.subr.mxu0 0.0
        %4785 = vmatpush1.xpose.msra.mxu0 0.0
        %4786 = vmatprep.subr.mxu0 0.0
        %4787 = vmatpush1.xpose.msra.mxu0 0.0
        %4788 = vmatprep.subr.mxu0 0.0
        %4789 = vmatpush1.xpose.msra.mxu0 0.0
        %4790 = vmatprep.subr.mxu0 0.0
        %4791 = vmatpush1.xpose.msra.mxu0 0.0
        %4792 = vmatprep.subr.mxu0 0.0
        %4793 = vmatpush1.xpose.msra.mxu0 0.0
        %4794 = vmatprep.subr.mxu0 0.0
        %4795 = vmatpush1.xpose.msra.mxu0 0.0
        %4796 = vmatprep.subr.mxu0 0.0
        %4797 = vmatpush1.xpose.msra.mxu0 0.0
        %4798 = vmatprep.subr.mxu0 0.0
        %4799 = vmatpush1.xpose.msra.mxu0 0.0
        %4800 = vmatprep.subr.mxu0 0.0
        %4801 = vmatpush1.xpose.msra.mxu0 0.0
        %4802 = vmatprep.subr.mxu0 0.0
        %4803 = vmatpush1.xpose.msra.mxu0 0.0
        %4804 = vmatprep.subr.mxu0 0.0
        %4805 = vmatpush1.xpose.msra.mxu0 0.0
        %4806 = vmatprep.subr.mxu0 0.0
        %4807 = vmatpush1.xpose.msra.mxu0 0.0
        %4808 = vmatprep.subr.mxu0 0.0
        %4809 = vmatpush1.xpose.msra.mxu0 0.0
        %4810 = vmatprep.subr.mxu0 0.0
        %4811 = vmatpush1.xpose.msra.mxu0 0.0
        %4812 = vmatprep.subr.mxu0 0.0
        %4813 = vmatpush1.xpose.msra.mxu0 0.0
        %v4814 = vand.u32 %v4747, 4294901760
        %v4815 = vsub.f32 %v4747, %v4814
        %v4816 = vand.u32 %v4815, 4294901760
        %v4817 = vsub.f32 %v4815, %v4816
        %v4818 = vand.u32 %v4817, 4294901760
        %4819 = vmatprep.mubr.f32.mxu0 %v4818
        %v4820 = vand.u32 %v4746, 4294901760
        %v4821 = vsub.f32 %v4746, %v4820
        %v4822 = vand.u32 %v4821, 4294901760
        %v4823 = vsub.f32 %v4821, %v4822
        %v4824 = vand.u32 %v4823, 4294901760
        %4825 = vmatmul.mubr.f32.gmra.mrb[0].mxu0 %v4824
        %v4826 = vpop.f32.mrb[0].mxu0
        %v4827 = vadd.f32 0.0, %v4826
        %v4828 = vpop.f32.mrb[0].mxu0
        %4829 = vdwg.mxu0
        %v4830 = vand.u32 %v4747, 4294901760
        %v4831 = vsub.f32 %v4747, %v4830
        %v4832 = vand.u32 %v4831, 4294901760
        %v4833 = vsub.f32 %v4831, %v4832
        %v4834 = vand.u32 %v4833, 4294901760
        %4835 = vmatprep.subr.mxu0 %v4834
        %v4836 = vand.u32 %v4746, 4294901760
        %v4837 = vsub.f32 %v4746, %v4836
        %v4838 = vand.u32 %v4837, 4294901760
        %v4839 = vsub.f32 %v4837, %v4838
        %v4840 = vand.u32 %v4839, 4294901760
        %4841 = vmatpush1.xpose.msra.mxu0 %v4840
        %4842 = vmatprep.subr.mxu0 0.0
        %4843 = vmatpush1.xpose.msra.mxu0 0.0
        %4844 = vmatprep.subr.mxu0 0.0
        %4845 = vmatpush1.xpose.msra.mxu0 0.0
        %4846 = vmatprep.subr.mxu0 0.0
        %4847 = vmatpush1.xpose.msra.mxu0 0.0
        %4848 = vmatprep.subr.mxu0 0.0
        %4849 = vmatpush1.xpose.msra.mxu0 0.0
        %4850 = vmatprep.subr.mxu0 0.0
        %4851 = vmatpush1.xpose.msra.mxu0 0.0
        %4852 = vmatprep.subr.mxu0 0.0
        %4853 = vmatpush1.xpose.msra.mxu0 0.0
        %4854 = vmatprep.subr.mxu0 0.0
        %4855 = vmatpush1.xpose.msra.mxu0 0.0
        %4856 = vmatprep.subr.mxu0 0.0
        %4857 = vmatpush1.xpose.msra.mxu0 0.0
        %4858 = vmatprep.subr.mxu0 0.0
        %4859 = vmatpush1.xpose.msra.mxu0 0.0
        %4860 = vmatprep.subr.mxu0 0.0
        %4861 = vmatpush1.xpose.msra.mxu0 0.0
        %4862 = vmatprep.subr.mxu0 0.0
        %4863 = vmatpush1.xpose.msra.mxu0 0.0
        %4864 = vmatprep.subr.mxu0 0.0
        %4865 = vmatpush1.xpose.msra.mxu0 0.0
        %4866 = vmatprep.subr.mxu0 0.0
        %4867 = vmatpush1.xpose.msra.mxu0 0.0
        %4868 = vmatprep.subr.mxu0 0.0
        %4869 = vmatpush1.xpose.msra.mxu0 0.0
        %4870 = vmatprep.subr.mxu0 0.0
        %4871 = vmatpush1.xpose.msra.mxu0 0.0
        %4872 = vmatprep.subr.mxu0 0.0
        %4873 = vmatpush1.xpose.msra.mxu0 0.0
        %4874 = vmatprep.subr.mxu0 0.0
        %4875 = vmatpush1.xpose.msra.mxu0 0.0
        %4876 = vmatprep.subr.mxu0 0.0
        %4877 = vmatpush1.xpose.msra.mxu0 0.0
        %4878 = vmatprep.subr.mxu0 0.0
        %4879 = vmatpush1.xpose.msra.mxu0 0.0
        %4880 = vmatprep.subr.mxu0 0.0
        %4881 = vmatpush1.xpose.msra.mxu0 0.0
        %4882 = vmatprep.subr.mxu0 0.0
        %4883 = vmatpush1.xpose.msra.mxu0 0.0
        %4884 = vmatprep.subr.mxu0 0.0
        %4885 = vmatpush1.xpose.msra.mxu0 0.0
        %4886 = vmatprep.subr.mxu0 0.0
        %4887 = vmatpush1.xpose.msra.mxu0 0.0
        %4888 = vmatprep.subr.mxu0 0.0
        %4889 = vmatpush1.xpose.msra.mxu0 0.0
        %4890 = vmatprep.subr.mxu0 0.0
        %4891 = vmatpush1.xpose.msra.mxu0 0.0
        %4892 = vmatprep.subr.mxu0 0.0
        %4893 = vmatpush1.xpose.msra.mxu0 0.0
        %4894 = vmatprep.subr.mxu0 0.0
        %4895 = vmatpush1.xpose.msra.mxu0 0.0
        %4896 = vmatprep.subr.mxu0 0.0
        %4897 = vmatpush1.xpose.msra.mxu0 0.0
        %4898 = vmatprep.subr.mxu0 0.0
        %4899 = vmatpush1.xpose.msra.mxu0 0.0
        %4900 = vmatprep.subr.mxu0 0.0
        %4901 = vmatpush1.xpose.msra.mxu0 0.0
        %4902 = vmatprep.subr.mxu0 0.0
        %4903 = vmatpush1.xpose.msra.mxu0 0.0
        %v4904 = vand.u32 %v4747, 4294901760
        %4905 = vmatprep.mubr.f32.mxu0 %v4904
        %v4906 = vand.u32 %v4746, 4294901760
        %4907 = vmatmul.mubr.f32.gmra.mrb[0].mxu0 %v4906
        %v4908 = vpop.f32.mrb[0].mxu0
        %v4909 = vadd.f32 %v4827, %v4908
        %v4910 = vpop.f32.mrb[0].mxu0
        %4911 = vdwg.mxu0
        %v4912 = vand.u32 %v4747, 4294901760
        %v4913 = vsub.f32 %v4747, %v4912
        %4914 = vmatprep.subr.mxu0 %v4913
        %v4915 = vand.u32 %v4746, 4294901760
        %v4916 = vsub.f32 %v4746, %v4915
        %4917 = vmatpush1.xpose.msra.mxu0 %v4916
        %4918 = vmatprep.subr.mxu0 0.0
        %4919 = vmatpush1.xpose.msra.mxu0 0.0
        %4920 = vmatprep.subr.mxu0 0.0
        %4921 = vmatpush1.xpose.msra.mxu0 0.0
        %4922 = vmatprep.subr.mxu0 0.0
        %4923 = vmatpush1.xpose.msra.mxu0 0.0
        %4924 = vmatprep.subr.mxu0 0.0
        %4925 = vmatpush1.xpose.msra.mxu0 0.0
        %4926 = vmatprep.subr.mxu0 0.0
        %4927 = vmatpush1.xpose.msra.mxu0 0.0
        %4928 = vmatprep.subr.mxu0 0.0
        %4929 = vmatpush1.xpose.msra.mxu0 0.0
        %4930 = vmatprep.subr.mxu0 0.0
        %4931 = vmatpush1.xpose.msra.mxu0 0.0
        %4932 = vmatprep.subr.mxu0 0.0
        %4933 = vmatpush1.xpose.msra.mxu0 0.0
        %4934 = vmatprep.subr.mxu0 0.0
        %4935 = vmatpush1.xpose.msra.mxu0 0.0
        %4936 = vmatprep.subr.mxu0 0.0
        %4937 = vmatpush1.xpose.msra.mxu0 0.0
        %4938 = vmatprep.subr.mxu0 0.0
        %4939 = vmatpush1.xpose.msra.mxu0 0.0
        %4940 = vmatprep.subr.mxu0 0.0
        %4941 = vmatpush1.xpose.msra.mxu0 0.0
        %4942 = vmatprep.subr.mxu0 0.0
        %4943 = vmatpush1.xpose.msra.mxu0 0.0
        %4944 = vmatprep.subr.mxu0 0.0
        %4945 = vmatpush1.xpose.msra.mxu0 0.0
        %4946 = vmatprep.subr.mxu0 0.0
        %4947 = vmatpush1.xpose.msra.mxu0 0.0
        %4948 = vmatprep.subr.mxu0 0.0
        %4949 = vmatpush1.xpose.msra.mxu0 0.0
        %4950 = vmatprep.subr.mxu0 0.0
        %4951 = vmatpush1.xpose.msra.mxu0 0.0
        %4952 = vmatprep.subr.mxu0 0.0
        %4953 = vmatpush1.xpose.msra.mxu0 0.0
        %4954 = vmatprep.subr.mxu0 0.0
        %4955 = vmatpush1.xpose.msra.mxu0 0.0
        %4956 = vmatprep.subr.mxu0 0.0
        %4957 = vmatpush1.xpose.msra.mxu0 0.0
        %4958 = vmatprep.subr.mxu0 0.0
        %4959 = vmatpush1.xpose.msra.mxu0 0.0
        %4960 = vmatprep.subr.mxu0 0.0
        %4961 = vmatpush1.xpose.msra.mxu0 0.0
        %4962 = vmatprep.subr.mxu0 0.0
        %4963 = vmatpush1.xpose.msra.mxu0 0.0
        %4964 = vmatprep.subr.mxu0 0.0
        %4965 = vmatpush1.xpose.msra.mxu0 0.0
        %4966 = vmatprep.subr.mxu0 0.0
        %4967 = vmatpush1.xpose.msra.mxu0 0.0
        %4968 = vmatprep.subr.mxu0 0.0
        %4969 = vmatpush1.xpose.msra.mxu0 0.0
        %4970 = vmatprep.subr.mxu0 0.0
        %4971 = vmatpush1.xpose.msra.mxu0 0.0
        %4972 = vmatprep.subr.mxu0 0.0
        %4973 = vmatpush1.xpose.msra.mxu0 0.0
        %4974 = vmatprep.subr.mxu0 0.0
        %4975 = vmatpush1.xpose.msra.mxu0 0.0
        %4976 = vmatprep.subr.mxu0 0.0
        %4977 = vmatpush1.xpose.msra.mxu0 0.0
        %4978 = vmatprep.subr.mxu0 0.0
        %4979 = vmatpush1.xpose.msra.mxu0 0.0
        %v4980 = vand.u32 %v4747, 4294901760
        %v4981 = vsub.f32 %v4747, %v4980
        %4982 = vmatprep.mubr.f32.mxu0 %v4981
        %v4983 = vand.u32 %v4746, 4294901760
        %v4984 = vsub.f32 %v4746, %v4983
        %4985 = vmatmul.mubr.f32.gmra.mrb[0].mxu0 %v4984
        %v4986 = vpop.f32.mrb[0].mxu0
        %v4987 = vadd.f32 %v4909, %v4986
        %v4988 = vpop.f32.mrb[0].mxu0
        %4989 = vdwg.mxu0
        %v4990 = vand.u32 %v4747, 4294901760
        %4991 = vmatprep.subr.mxu0 %v4990
        %v4992 = vand.u32 %v4746, 4294901760
        %4993 = vmatpush1.xpose.msra.mxu0 %v4992
        %4994 = vmatprep.subr.mxu0 0.0
        %4995 = vmatpush1.xpose.msra.mxu0 0.0
        %4996 = vmatprep.subr.mxu0 0.0
        %4997 = vmatpush1.xpose.msra.mxu0 0.0
        %4998 = vmatprep.subr.mxu0 0.0
        %4999 = vmatpush1.xpose.msra.mxu0 0.0
        %5000 = vmatprep.subr.mxu0 0.0
        %5001 = vmatpush1.xpose.msra.mxu0 0.0
        %5002 = vmatprep.subr.mxu0 0.0
        %5003 = vmatpush1.xpose.msra.mxu0 0.0
        %5004 = vmatprep.subr.mxu0 0.0
        %5005 = vmatpush1.xpose.msra.mxu0 0.0
        %5006 = vmatprep.subr.mxu0 0.0
        %5007 = vmatpush1.xpose.msra.mxu0 0.0
        %5008 = vmatprep.subr.mxu0 0.0
        %5009 = vmatpush1.xpose.msra.mxu0 0.0
        %5010 = vmatprep.subr.mxu0 0.0
        %5011 = vmatpush1.xpose.msra.mxu0 0.0
        %5012 = vmatprep.subr.mxu0 0.0
        %5013 = vmatpush1.xpose.msra.mxu0 0.0
        %5014 = vmatprep.subr.mxu0 0.0
        %5015 = vmatpush1.xpose.msra.mxu0 0.0
        %5016 = vmatprep.subr.mxu0 0.0
        %5017 = vmatpush1.xpose.msra.mxu0 0.0
        %5018 = vmatprep.subr.mxu0 0.0
        %5019 = vmatpush1.xpose.msra.mxu0 0.0
        %5020 = vmatprep.subr.mxu0 0.0
        %5021 = vmatpush1.xpose.msra.mxu0 0.0
        %5022 = vmatprep.subr.mxu0 0.0
        %5023 = vmatpush1.xpose.msra.mxu0 0.0
        %5024 = vmatprep.subr.mxu0 0.0
        %5025 = vmatpush1.xpose.msra.mxu0 0.0
        %5026 = vmatprep.subr.mxu0 0.0
        %5027 = vmatpush1.xpose.msra.mxu0 0.0
        %5028 = vmatprep.subr.mxu0 0.0
        %5029 = vmatpush1.xpose.msra.mxu0 0.0
        %5030 = vmatprep.subr.mxu0 0.0
        %5031 = vmatpush1.xpose.msra.mxu0 0.0
        %5032 = vmatprep.subr.mxu0 0.0
        %5033 = vmatpush1.xpose.msra.mxu0 0.0
        %5034 = vmatprep.subr.mxu0 0.0
        %5035 = vmatpush1.xpose.msra.mxu0 0.0
        %5036 = vmatprep.subr.mxu0 0.0
        %5037 = vmatpush1.xpose.msra.mxu0 0.0
        %5038 = vmatprep.subr.mxu0 0.0
        %5039 = vmatpush1.xpose.msra.mxu0 0.0
        %5040 = vmatprep.subr.mxu0 0.0
        %5041 = vmatpush1.xpose.msra.mxu0 0.0
        %5042 = vmatprep.subr.mxu0 0.0
        %5043 = vmatpush1.xpose.msra.mxu0 0.0
        %5044 = vmatprep.subr.mxu0 0.0
        %5045 = vmatpush1.xpose.msra.mxu0 0.0
        %5046 = vmatprep.subr.mxu0 0.0
        %5047 = vmatpush1.xpose.msra.mxu0 0.0
        %5048 = vmatprep.subr.mxu0 0.0
        %5049 = vmatpush1.xpose.msra.mxu0 0.0
        %5050 = vmatprep.subr.mxu0 0.0
        %5051 = vmatpush1.xpose.msra.mxu0 0.0
        %5052 = vmatprep.subr.mxu0 0.0
        %5053 = vmatpush1.xpose.msra.mxu0 0.0
        %5054 = vmatprep.subr.mxu0 0.0
        %5055 = vmatpush1.xpose.msra.mxu0 0.0
        %v5056 = vand.u32 %v4747, 4294901760
        %v5057 = vsub.f32 %v4747, %v5056
        %v5058 = vand.u32 %v5057, 4294901760
        %5059 = vmatprep.mubr.f32.mxu0 %v5058
        %v5060 = vand.u32 %v4746, 4294901760
        %v5061 = vsub.f32 %v4746, %v5060
        %v5062 = vand.u32 %v5061, 4294901760
        %5063 = vmatmul.mubr.f32.gmra.mrb[0].mxu0 %v5062
        %v5064 = vpop.f32.mrb[0].mxu0
        %v5065 = vadd.f32 %v4987, %v5064
        %v5066 = vpop.f32.mrb[0].mxu0
        %5067 = vdwg.mxu0
        %v5068 = vand.u32 %v4747, 4294901760
        %v5069 = vsub.f32 %v4747, %v5068
        %v5070 = vand.u32 %v5069, 4294901760
        %5071 = vmatprep.subr.mxu0 %v5070
        %v5072 = vand.u32 %v4746, 4294901760
        %v5073 = vsub.f32 %v4746, %v5072
        %v5074 = vand.u32 %v5073, 4294901760
        %5075 = vmatpush1.xpose.msra.mxu0 %v5074
        %5076 = vmatprep.subr.mxu0 0.0
        %5077 = vmatpush1.xpose.msra.mxu0 0.0
        %5078 = vmatprep.subr.mxu0 0.0
        %5079 = vmatpush1.xpose.msra.mxu0 0.0
        %5080 = vmatprep.subr.mxu0 0.0
        %5081 = vmatpush1.xpose.msra.mxu0 0.0
        %5082 = vmatprep.subr.mxu0 0.0
        %5083 = vmatpush1.xpose.msra.mxu0 0.0
        %5084 = vmatprep.subr.mxu0 0.0
        %5085 = vmatpush1.xpose.msra.mxu0 0.0
        %5086 = vmatprep.subr.mxu0 0.0
        %5087 = vmatpush1.xpose.msra.mxu0 0.0
        %5088 = vmatprep.subr.mxu0 0.0
        %5089 = vmatpush1.xpose.msra.mxu0 0.0
        %5090 = vmatprep.subr.mxu0 0.0
        %5091 = vmatpush1.xpose.msra.mxu0 0.0
        %5092 = vmatprep.subr.mxu0 0.0
        %5093 = vmatpush1.xpose.msra.mxu0 0.0
        %5094 = vmatprep.subr.mxu0 0.0
        %5095 = vmatpush1.xpose.msra.mxu0 0.0
        %5096 = vmatprep.subr.mxu0 0.0
        %5097 = vmatpush1.xpose.msra.mxu0 0.0
        %5098 = vmatprep.subr.mxu0 0.0
        %5099 = vmatpush1.xpose.msra.mxu0 0.0
        %5100 = vmatprep.subr.mxu0 0.0
        %5101 = vmatpush1.xpose.msra.mxu0 0.0
        %5102 = vmatprep.subr.mxu0 0.0
        %5103 = vmatpush1.xpose.msra.mxu0 0.0
        %5104 = vmatprep.subr.mxu0 0.0
        %5105 = vmatpush1.xpose.msra.mxu0 0.0
        %5106 = vmatprep.subr.mxu0 0.0
        %5107 = vmatpush1.xpose.msra.mxu0 0.0
        %5108 = vmatprep.subr.mxu0 0.0
        %5109 = vmatpush1.xpose.msra.mxu0 0.0
        %5110 = vmatprep.subr.mxu0 0.0
        %5111 = vmatpush1.xpose.msra.mxu0 0.0
        %5112 = vmatprep.subr.mxu0 0.0
        %5113 = vmatpush1.xpose.msra.mxu0 0.0
        %5114 = vmatprep.subr.mxu0 0.0
        %5115 = vmatpush1.xpose.msra.mxu0 0.0
        %5116 = vmatprep.subr.mxu0 0.0
        %5117 = vmatpush1.xpose.msra.mxu0 0.0
        %5118 = vmatprep.subr.mxu0 0.0
        %5119 = vmatpush1.xpose.msra.mxu0 0.0
        %5120 = vmatprep.subr.mxu0 0.0
        %5121 = vmatpush1.xpose.msra.mxu0 0.0
        %5122 = vmatprep.subr.mxu0 0.0
        %5123 = vmatpush1.xpose.msra.mxu0 0.0
        %5124 = vmatprep.subr.mxu0 0.0
        %5125 = vmatpush1.xpose.msra.mxu0 0.0
        %5126 = vmatprep.subr.mxu0 0.0
        %5127 = vmatpush1.xpose.msra.mxu0 0.0
        %5128 = vmatprep.subr.mxu0 0.0
        %5129 = vmatpush1.xpose.msra.mxu0 0.0
        %5130 = vmatprep.subr.mxu0 0.0
        %5131 = vmatpush1.xpose.msra.mxu0 0.0
        %5132 = vmatprep.subr.mxu0 0.0
        %5133 = vmatpush1.xpose.msra.mxu0 0.0
        %5134 = vmatprep.subr.mxu0 0.0
        %5135 = vmatpush1.xpose.msra.mxu0 0.0
        %5136 = vmatprep.subr.mxu0 0.0
        %5137 = vmatpush1.xpose.msra.mxu0 0.0
        %v5138 = vand.u32 %v4747, 4294901760
        %5139 = vmatprep.mubr.f32.mxu0 %v5138
        %v5140 = vand.u32 %v4746, 4294901760
        %5141 = vmatmul.mubr.f32.gmra.mrb[0].mxu0 %v5140
        %v5142 = vpop.f32.mrb[0].mxu0
        %v5143 = vadd.f32 %v5065, %v5142
        %v5144 = vpop.f32.mrb[0].mxu0
        %5145 = vdwg.mxu0
        %v5146 = vand.u32 %v4747, 4294901760
        %5147 = vmatprep.subr.mxu0 %v5146
        %v5148 = vand.u32 %v4746, 4294901760
        %5149 = vmatpush1.xpose.msra.mxu0 %v5148
        %5150 = vmatprep.subr.mxu0 0.0
        %5151 = vmatpush1.xpose.msra.mxu0 0.0
        %5152 = vmatprep.subr.mxu0 0.0
        %5153 = vmatpush1.xpose.msra.mxu0 0.0
        %5154 = vmatprep.subr.mxu0 0.0
        %5155 = vmatpush1.xpose.msra.mxu0 0.0
        %5156 = vmatprep.subr.mxu0 0.0
        %5157 = vmatpush1.xpose.msra.mxu0 0.0
        %5158 = vmatprep.subr.mxu0 0.0
        %5159 = vmatpush1.xpose.msra.mxu0 0.0
        %5160 = vmatprep.subr.mxu0 0.0
        %5161 = vmatpush1.xpose.msra.mxu0 0.0
        %5162 = vmatprep.subr.mxu0 0.0
        %5163 = vmatpush1.xpose.msra.mxu0 0.0
        %5164 = vmatprep.subr.mxu0 0.0
        %5165 = vmatpush1.xpose.msra.mxu0 0.0
        %5166 = vmatprep.subr.mxu0 0.0
        %5167 = vmatpush1.xpose.msra.mxu0 0.0
        %5168 = vmatprep.subr.mxu0 0.0
        %5169 = vmatpush1.xpose.msra.mxu0 0.0
        %5170 = vmatprep.subr.mxu0 0.0
        %5171 = vmatpush1.xpose.msra.mxu0 0.0
        %5172 = vmatprep.subr.mxu0 0.0
        %5173 = vmatpush1.xpose.msra.mxu0 0.0
        %5174 = vmatprep.subr.mxu0 0.0
        %5175 = vmatpush1.xpose.msra.mxu0 0.0
        %5176 = vmatprep.subr.mxu0 0.0
        %5177 = vmatpush1.xpose.msra.mxu0 0.0
        %5178 = vmatprep.subr.mxu0 0.0
        %5179 = vmatpush1.xpose.msra.mxu0 0.0
        %5180 = vmatprep.subr.mxu0 0.0
        %5181 = vmatpush1.xpose.msra.mxu0 0.0
        %5182 = vmatprep.subr.mxu0 0.0
        %5183 = vmatpush1.xpose.msra.mxu0 0.0
        %5184 = vmatprep.subr.mxu0 0.0
        %5185 = vmatpush1.xpose.msra.mxu0 0.0
        %5186 = vmatprep.subr.mxu0 0.0
        %5187 = vmatpush1.xpose.msra.mxu0 0.0
        %5188 = vmatprep.subr.mxu0 0.0
        %5189 = vmatpush1.xpose.msra.mxu0 0.0
        %5190 = vmatprep.subr.mxu0 0.0
        %5191 = vmatpush1.xpose.msra.mxu0 0.0
        %5192 = vmatprep.subr.mxu0 0.0
        %5193 = vmatpush1.xpose.msra.mxu0 0.0
        %5194 = vmatprep.subr.mxu0 0.0
        %5195 = vmatpush1.xpose.msra.mxu0 0.0
        %5196 = vmatprep.subr.mxu0 0.0
        %5197 = vmatpush1.xpose.msra.mxu0 0.0
        %5198 = vmatprep.subr.mxu0 0.0
        %5199 = vmatpush1.xpose.msra.mxu0 0.0
        %5200 = vmatprep.subr.mxu0 0.0
        %5201 = vmatpush1.xpose.msra.mxu0 0.0
        %5202 = vmatprep.subr.mxu0 0.0
        %5203 = vmatpush1.xpose.msra.mxu0 0.0
        %5204 = vmatprep.subr.mxu0 0.0
        %5205 = vmatpush1.xpose.msra.mxu0 0.0
        %5206 = vmatprep.subr.mxu0 0.0
        %5207 = vmatpush1.xpose.msra.mxu0 0.0
        %5208 = vmatprep.subr.mxu0 0.0
        %5209 = vmatpush1.xpose.msra.mxu0 0.0
        %5210 = vmatprep.subr.mxu0 0.0
        %5211 = vmatpush1.xpose.msra.mxu0 0.0
        %v5212 = vand.u32 %v4747, 4294901760
        %5213 = vmatprep.mubr.f32.mxu0 %v5212
        %v5214 = vand.u32 %v4746, 4294901760
        %5215 = vmatmul.mubr.f32.gmra.mrb[0].mxu0 %v5214
        %v5216 = vpop.f32.mrb[0].mxu0
        %v5217 = vadd.f32 %v5143, %v5216
        %v5218 = vpop.f32.mrb[0].mxu0
        %5219 = vdwg.mxu0
        %v5220 = vsel %vm4656, %v5217, inf
        %5221 = vmin.xlane.f32.xlu0 %v5220
        %v5222 = vpop.xlane.xlu0 %5221
        %v5223 = vsub.f32 %v5222, %v5217
        %v5224 = vmul.f32 %v5223, 1.442695
        %v5225 = vpow.pop %v5224
        %v5226 = vsel %vm4656, %v5225, 0.0
        %5227 = vadd.xlane.f32.xlu0 %v5226
        %v5228 = vpop.xlane.xlu0 %5227
        %v5229 = vrcp.pop %v5228
        %v5230 = vmul.f32 %v5225, %v5229
        %v5232 = vsel %vm458, %v5230, 0
        %v5235 = vsel %vm462, %v4746, 0
        %v5238 = vsel %vm462, %v4747, 0
        %5240 = vmatprep.subr.mxu0 %v5238
        %5241 = vmatpush1.msra.mxu0 %v5235
        %5242 = vmatprep.subr.mxu0 0.0
        %5243 = vmatpush1.msra.mxu0 0.0
        %5244 = vmatprep.subr.mxu0 0.0
        %5245 = vmatpush1.msra.mxu0 0.0
        %5246 = vmatprep.subr.mxu0 0.0
        %5247 = vmatpush1.msra.mxu0 0.0
        %5248 = vmatprep.subr.mxu0 0.0
        %5249 = vmatpush1.msra.mxu0 0.0
        %5250 = vmatprep.subr.mxu0 0.0
        %5251 = vmatpush1.msra.mxu0 0.0
        %5252 = vmatprep.subr.mxu0 0.0
        %5253 = vmatpush1.msra.mxu0 0.0
        %5254 = vmatprep.subr.mxu0 0.0
        %5255 = vmatpush1.msra.mxu0 0.0
        %5256 = vmatprep.subr.mxu0 0.0
        %5257 = vmatpush1.msra.mxu0 0.0
        %5258 = vmatprep.subr.mxu0 0.0
        %5259 = vmatpush1.msra.mxu0 0.0
        %5260 = vmatprep.subr.mxu0 0.0
        %5261 = vmatpush1.msra.mxu0 0.0
        %5262 = vmatprep.subr.mxu0 0.0
        %5263 = vmatpush1.msra.mxu0 0.0
        %5264 = vmatprep.subr.mxu0 0.0
        %5265 = vmatpush1.msra.mxu0 0.0
        %5266 = vmatprep.subr.mxu0 0.0
        %5267 = vmatpush1.msra.mxu0 0.0
        %5268 = vmatprep.subr.mxu0 0.0
        %5269 = vmatpush1.msra.mxu0 0.0
        %5270 = vmatprep.subr.mxu0 0.0
        %5271 = vmatpush1.msra.mxu0 0.0
        %5272 = vmatprep.subr.mxu0 0.0
        %5273 = vmatpush1.msra.mxu0 0.0
        %5274 = vmatprep.subr.mxu0 0.0
        %5275 = vmatpush1.msra.mxu0 0.0
        %5276 = vmatprep.subr.mxu0 0.0
        %5277 = vmatpush1.msra.mxu0 0.0
        %5278 = vmatprep.subr.mxu0 0.0
        %5279 = vmatpush1.msra.mxu0 0.0
        %5280 = vmatprep.subr.mxu0 0.0
        %5281 = vmatpush1.msra.mxu0 0.0
        %5282 = vmatprep.subr.mxu0 0.0
        %5283 = vmatpush1.msra.mxu0 0.0
        %5284 = vmatprep.subr.mxu0 0.0
        %5285 = vmatpush1.msra.mxu0 0.0
        %5286 = vmatprep.subr.mxu0 0.0
        %5287 = vmatpush1.msra.mxu0 0.0
        %5288 = vmatprep.subr.mxu0 0.0
        %5289 = vmatpush1.msra.mxu0 0.0
        %5290 = vmatprep.subr.mxu0 0.0
        %5291 = vmatpush1.msra.mxu0 0.0
        %5292 = vmatprep.subr.mxu0 0.0
        %5293 = vmatpush1.msra.mxu0 0.0
        %5294 = vmatprep.subr.mxu0 0.0
        %5295 = vmatpush1.msra.mxu0 0.0
        %5296 = vmatprep.subr.mxu0 0.0
        %5297 = vmatpush1.msra.mxu0 0.0
        %5298 = vmatprep.subr.mxu0 0.0
        %5299 = vmatpush1.msra.mxu0 0.0
        %5300 = vmatprep.subr.mxu0 0.0
        %5301 = vmatpush1.msra.mxu0 0.0
        %5302 = vmatprep.subr.mxu0 0.0
        %5303 = vmatpush1.msra.mxu0 0.0
        %5304 = vmatprep.mubr.f32.mxu0 0.0
        %5305 = vmatmul.mubr.f32.gmra.mrb[0].mxu0 %v5232
        %v5306 = vpop.f32.mrb[0].mxu0
        %v5307 = vadd.f32 0.0, %v5306
        %v5308 = vpop.f32.mrb[0].mxu0
        %v5309 = vadd.f32 0.0, %v5308
        %5310 = vdwg.mxu0
        %s5311 = sld [smem:[#allocation2 + $0x80]]
        %v5312 = vstv %s5311
        %v5313 = vmul.f32 %v5312, %v5307
        %v5314 = vmul.f32 %v5312, %v5309
        %v5315 = vadd.f32 %v5313, %v4746
        %v5316 = vadd.f32 %v5314, %v4747
        %v5319 = vcombine.low %v5315, %v5316
        %s5321 = scalar_lea.vmem %s400, 8
        %5322 = vst [vmem:[%s5321] sm:$0xff] %v5319
        %p5323 = scmp.lt.s32.totalorder %s23, 1
        %s5324 = scalar_select %p5323, %s23, 1
        %s5325 = smul.addr %s5324, 4
        %s5326 = smul.addr %s5325, 4
        %s5327 = scalar_lea.vmem %s11, %s5326
        // Predicated region
        $region69: #{group_forward.1} parent=63 // pred_check
          %p5328 = pneg %p277
        $region70: #{group_forward.1} parent=63 // pred_check_branch
          %5330 = sbr.rel (%p5328) target = $region72
        $region71: #{group_forward.1} parent=63 // pred_region
          _
        $region72: #{group_forward.1} parent=63 // pred_fallthru
          _
      $region64: #{group_forward.1} parent=5 // pred_fallthru
        _
      %p5331 = scmp.le.s32.totalorder 2, %s18
      // Predicated region
      $region73: #{group_forward.1} parent=5 // pred_check
        %p5332 = pneg %p5331
      $region74: #{group_forward.1} parent=5 // pred_check_branch
        %5334 = sbr.rel (%p5332) target = $region76
      $region75: #{group_forward.1} parent=5 // pred_region
        %s5335 = ssub.s32 %s18, 2
        // Predicated region
        $region77: #{group_forward.1} parent=75 // pred_check
          %p5336 = pneg %p283
        $region78: #{group_forward.1} parent=75 // pred_check_branch
          %5338 = sbr.rel (%p5336) target = $region80
        $region79: #{group_forward.1} parent=75 // pred_region
          %p5339 = scmp.lt.s32.totalorder %s24, 1
          %s5340 = scalar_select %p5339, %s24, 1
          %s5341 = smul.addr %s5340, 4
          %s5342 = smul.addr %s5341, 4
          %s5343 = scalar_lea.vmem %s11, %s5342
        $region80: #{group_forward.1} parent=75 // pred_fallthru
          _
      $region76: #{group_forward.1} parent=5 // pred_fallthru
        _
    $region6: #{group_forward.1} parent=1 // loop_footer
      %s22 = sadd.s32 1, %s18
    $region7: #{group_forward.1} parent=1 // loop_footer_branch
      %17 = sbr.rel target = $region3
    $region8: #{group_forward.1} parent=1 // loop_exit
      _
    %5344 = vsyncpa [#allocation3], 1
    %s5345 = scalar_lea.sflag [#allocation3], 1
    %5346 = vsyncpa %s5345, 1

</llo_original>
